<compile_context>
chip_gen: v7x
topology: tpu7x:2x2x1
jax: 0.10.0
libtpu: 0.0.40
codegen_flags: <defaults>
</compile_context>

<pallas_src>
import functools

import jax
import jax.numpy as jnp
from jax import lax
from jax.experimental import pallas as pl
from jax.experimental.pallas import tpu as pltpu


# ----------------------------------------------------------------------------
# In-kernel helpers (traced inside the fused kernel)
# ----------------------------------------------------------------------------
def _mha(q_src, k_src, v_src, mask, wqkv_ref, wo_ref, bias_row, *, nb, heads, head_dim):
    """Multi-head attention for one batch chunk.

    q_src: (nb*Lq, E) bf16    k_src, v_src: (nb*Lk, E) bf16
    mask:  (nb, Lq, Lk) f32 (0 == masked out)
    wqkv_ref: (3, E, E) bf16 block-diagonal per-head projections (q pre-scaled by 1/sqrt(E))
    wo_ref:   (heads, D, E) bf16 = fc_out.weight.T split into per-head row slabs
    bias_row: (1, E) f32 fc_out bias.
    Head outputs are accumulated straight into the fc_out projection (no lane concat).
    """
    bf16, f32 = jnp.bfloat16, jnp.float32
    Mq, E = q_src.shape
    Lq = Mq // nb
    Lk = k_src.shape[0] // nb
    D = head_dim

    # Lane-dense fused projections: one (M,E)@(E,E) per tensor instead of H tiny (.,D)@(D,D).
    q = jnp.dot(q_src, wqkv_ref[0], preferred_element_type=f32).reshape(nb, Lq, E)
    k = jnp.dot(k_src, wqkv_ref[1], preferred_element_type=f32).reshape(nb, Lk, E)
    v = jnp.dot(v_src, wqkv_ref[2], preferred_element_type=f32).reshape(nb, Lk, E)

    acc = jnp.zeros((Mq, E), f32)
    for h in range(heads):                               # static unroll; heads is small
        sl = slice(h * D, (h + 1) * D)
        qh = q[:, :, sl].astype(bf16)                    # (nb, Lq, D)
        kh = k[:, :, sl].astype(bf16)                    # (nb, Lk, D)
        vh = v[:, :, sl].astype(bf16)                    # (nb, Lk, D)
        # energy[n,q,k] = qh[n,q,:] . kh[n,k,:]  (batched NT contraction, no transpose)
        energy = lax.dot_general(qh, kh, (((2,), (2,)), ((0,), (0,))),
                                 preferred_element_type=f32)           # (nb, Lq, Lk)
        energy = jnp.where(mask == 0.0, jnp.float32(-1e20), energy)    # masked_fill
        # Numerically-stable f32 softmax; EUP reciprocal for the denominator.
        emax = jnp.max(energy, axis=-1, keepdims=True)
        p = jnp.exp(energy - emax)
        p = p * pl.reciprocal(jnp.sum(p, axis=-1, keepdims=True), approx=True)
        ctx = lax.dot_general(p.astype(bf16), vh, (((2,), (1,)), ((0,), (0,))),
                              preferred_element_type=f32)              # (nb, Lq, D)
        # Accumulate this head directly through its slab of Wo.T (no concat).
        acc = acc + jnp.dot(ctx.reshape(Mq, D).astype(bf16), wo_ref[h],
                            preferred_element_type=f32)                # (Mq, E)
    return acc + bias_row


def _add_layer_norm(a, b, gamma, beta, eps):
    """LayerNorm(a + b) over the last (embed) dim, all in f32."""
    x = a + b
    mu = jnp.mean(x, axis=-1, keepdims=True)
    var = jnp.mean(jnp.square(x - mu), axis=-1, keepdims=True)
    return (x - mu) * lax.rsqrt(var + eps) * gamma + beta


# ----------------------------------------------------------------------------
# Fused decoder-block kernel (one batch chunk per grid step)
# ----------------------------------------------------------------------------
def _decoder_block_kernel(
        x_ref, val_ref, key_ref, smask_ref, tmask_ref,
        a1_wqkv_ref, a1_wo_ref,
        a2_wqkv_ref, a2_wo_ref,
        ff_w1_ref, ff_b1_ref, ff_w2_ref,
        vec_ref,
        o_ref,
        *, heads, head_dim, eps):
    bf16 = jnp.bfloat16
    NB, Lq, E = x_ref.shape
    Lk = key_ref.shape[1]

    # Flatten the batch chunk into the matmul M-dim (leading-dim merge only: cheap).
    x2 = x_ref[...].reshape(NB * Lq, E)            # (Mq, E) f32  decoder input
    val2 = val_ref[...].reshape(NB * Lk, E)        # encoder output (values)
    key2 = key_ref[...].reshape(NB * Lk, E)        # encoder output (keys)
    smask = smask_ref[...].astype(jnp.float32)     # (NB, Lq, Lk)  int8 -> f32 once
    tmask = tmask_ref[...].astype(jnp.float32)     # (NB, Lq, Lq)
    vecs = vec_ref[...]                            # (9, E) packed biases / gammas / betas

    x2_bf = x2.astype(bf16)

    # --- DecoderBlock.attention: masked self-attention on x ---
    a1 = _mha(x2_bf, x2_bf, x2_bf, tmask, a1_wqkv_ref, a1_wo_ref, vecs[0:1, :],
              nb=NB, heads=heads, head_dim=head_dim)
    # dropout == identity (eval); query = LayerNorm(attention + x)
    query = _add_layer_norm(a1, x2, vecs[1:2, :], vecs[2:3, :], eps)

    # --- TransformerBlock.attention: cross-attention (values/keys from encoder) ---
    a2 = _mha(query.astype(bf16), key2.astype(bf16), val2.astype(bf16), smask,
              a2_wqkv_ref, a2_wo_ref, vecs[3:4, :],
              nb=NB, heads=heads, head_dim=head_dim)
    h = _add_layer_norm(a2, query, vecs[4:5, :], vecs[5:6, :], eps)

    # --- feed-forward: ReLU(h @ W1 + b1) @ W2 + b2 ---
    hid = jnp.dot(h.astype(bf16), ff_w1_ref[...],
                  preferred_element_type=jnp.float32) + ff_b1_ref[...]
    hid = jnp.maximum(hid, 0.0)
    ff = jnp.dot(hid.astype(bf16), ff_w2_ref[...],
                 preferred_element_type=jnp.float32) + vecs[6:7, :]

    out = _add_layer_norm(ff, h, vecs[7:8, :], vecs[8:9, :], eps)
    o_ref[...] = out.reshape(NB, Lq, E).astype(o_ref.dtype)


# ----------------------------------------------------------------------------
# Host-side wrappers
# ----------------------------------------------------------------------------
def prepare_decoder_params(p, *, heads):
    """One-time weight prep (outside jit): block-diagonal per-head Q/K/V expansion with the
    1/sqrt(E) scale folded into Wq, per-head Wo.T slabs, bf16 casts, packed bias/LN vectors."""
    E = p["a1_wo"].shape[0]
    D = E // heads
    bf16, f32 = jnp.bfloat16, jnp.float32
    scale = 1.0 / (E ** 0.5)
    eye = jnp.eye(heads, dtype=f32)

    def bdiag(w, s=1.0):   # torch (out,in) (D,D) -> block-diag (E,E) of W.T, optionally scaled
        return (jnp.kron(eye, w.T.astype(f32)) * s).astype(bf16)

    def wo_split(wo):      # torch (out,in) (E,E) -> Wo.T split as (H, D, E)
        return wo.T.reshape(heads, D, E).astype(bf16)

    vecs = jnp.stack([
        p["a1_bo"], p["n_g"], p["n_b"],
        p["a2_bo"], p["n1_g"], p["n1_b"],
        p["ff_b2"], p["n2_g"], p["n2_b"],
    ]).astype(f32)                                          # (9, E)

    return {
        "a1_wqkv": jnp.stack([bdiag(p["a1_wq"], scale), bdiag(p["a1_wk"]), bdiag(p["a1_wv"])]),
        "a1_wo": wo_split(p["a1_wo"]),
        "a2_wqkv": jnp.stack([bdiag(p["a2_wq"], scale), bdiag(p["a2_wk"]), bdiag(p["a2_wv"])]),
        "a2_wo": wo_split(p["a2_wo"]),
        "ff_w1": p["ff_w1"].T.astype(bf16),
        "ff_b1": p["ff_b1"].astype(f32)[None, :],
        "ff_w2": p["ff_w2"].T.astype(bf16),
        "vecs": vecs,
    }


def _as_mask_i8(m):
    """Accept f32 (module signature) or pre-converted int8 masks; only (mask == 0) matters."""
    if m.dtype == jnp.int8:
        return m
    return (m != 0).astype(jnp.int8)


def decoder_block_pallas(x, value, key, src_mask, trg_mask, w, *, heads, eps=1e-5, block_n=None):
    N, Lq, E = x.shape
    Lk = key.shape[1]
    D = E // heads
    F = w["ff_w1"].shape[1]

    if block_n is None:  # largest divisor of N that is <= 8
        block_n = next(c for c in range(min(N, 8), 0, -1) if N % c == 0)
    assert N % block_n == 0, "block_n must divide the batch size"
    grid = (N // block_n,)

    smask_i8 = _as_mask_i8(src_mask)
    tmask_i8 = _as_mask_i8(trg_mask)

    kernel = functools.partial(_decoder_block_kernel, heads=heads, head_dim=D, eps=eps)

    def batch_spec(L, C):
        return pl.BlockSpec((block_n, L, C), lambda b: (b, 0, 0))

    def full_spec(shape):
        zeros = (0,) * len(shape)
        return pl.BlockSpec(shape, lambda b, _z=zeros: _z)

    in_specs = [
        batch_spec(Lq, E),            # x
        batch_spec(Lk, E),            # value
        batch_spec(Lk, E),            # key
        batch_spec(Lq, Lk),           # src_mask (int8)
        batch_spec(Lq, Lq),           # trg_mask (int8)
        full_spec((3, E, E)),         # self-attn block-diag Wq|Wk|Wv (q pre-scaled)
        full_spec((heads, D, E)),     # self-attn Wo.T slabs
        full_spec((3, E, E)),         # cross-attn block-diag Wq|Wk|Wv
        full_spec((heads, D, E)),     # cross-attn Wo.T slabs
        full_spec((E, F)),            # ffn W1.T
        full_spec((1, F)),            # ffn b1
        full_spec((F, E)),            # ffn W2.T
        full_spec((9, E)),            # packed biases + LayerNorm gammas/betas
    ]

    return pl.pallas_call(
        kernel,
        out_shape=jax.ShapeDtypeStruct((N, Lq, E), x.dtype),
        grid=grid,
        in_specs=in_specs,
        out_specs=pl.BlockSpec((block_n, Lq, E), lambda b: (b, 0, 0)),
        compiler_params=pltpu.CompilerParams(dimension_semantics=("parallel",)),
    )(x, value, key, smask_i8, tmask_i8,
      w["a1_wqkv"], w["a1_wo"], w["a2_wqkv"], w["a2_wo"],
      w["ff_w1"], w["ff_b1"], w["ff_w2"], w["vecs"])


# ----------------------------------------------------------------------------
# Pure-JAX f32 reference (canonical semantics of the module)
# ----------------------------------------------------------------------------
def _ref_attention(values, keys, query, mask, wv, wk, wq, wo, bo, heads):
    N, Lq, E = query.shape
    D = E // heads

    def proj(x, w):
        xh = x.reshape(N, -1, heads, D)
        return jnp.einsum("nlhd,ed->nlhe", xh, w)          # y = x @ W.T per head
    qh, kh, vh = proj(query, wq), proj(keys, wk), proj(values, wv)
    energy = jnp.einsum("nqhd,nkhd->nhqk", qh, kh)
    energy = jnp.where(mask[:, None, :, :] == 0, -1e20, energy)
    attn = jax.nn.softmax(energy / (E ** 0.5), axis=3)
    out = jnp.einsum("nhqk,nkhd->nqhd", attn, vh).reshape(N, Lq, E)
    return out @ wo.T + bo


def _ref_layernorm(x, g, b, eps=1e-5):
    mu = jnp.mean(x, axis=-1, keepdims=True)
    var = jnp.mean(jnp.square(x - mu), axis=-1, keepdims=True)
    return (x - mu) / jnp.sqrt(var + eps) * g + b


def decoder_block_ref(x, value, key, src_mask, trg_mask, p, *, heads):
    a1 = _ref_attention(x, x, x, trg_mask, p["a1_wv"], p["a1_wk"], p["a1_wq"],
                        p["a1_wo"], p["a1_bo"], heads)
    query = _ref_layernorm(a1 + x, p["n_g"], p["n_b"])
    a2 = _ref_attention(value, key, query, src_mask, p["a2_wv"], p["a2_wk"], p["a2_wq"],
                        p["a2_wo"], p["a2_bo"], heads)
    h = _ref_layernorm(a2 + query, p["n1_g"], p["n1_b"])
    ff = jnp.maximum(h @ p["ff_w1"].T + p["ff_b1"], 0.0) @ p["ff_w2"].T + p["ff_b2"]
    return _ref_layernorm(ff + h, p["n2_g"], p["n2_b"])


# ----------------------------------------------------------------------------
if __name__ == "__main__":
    # Small config: embed_size=32, heads=4, head_dim=8, forward_expansion=4, batch=4, seq=8
    N, Lq, Lk = 4, 8, 8
    E, H, FE = 32, 4, 4
    D = E // H
    F = E * FE

    root = jax.random.PRNGKey(0)
    ks = jax.random.split(root, 16)
    nrm = lambda k, s: 0.1 * jax.random.normal(k, s, jnp.float32)

    params = {
        # DecoderBlock.attention (masked self-attention)
        "a1_wv": nrm(ks[0], (D, D)), "a1_wk": nrm(ks[1], (D, D)), "a1_wq": nrm(ks[2], (D, D)),
        "a1_wo": nrm(ks[3], (E, E)), "a1_bo": nrm(ks[4], (E,)),
        # DecoderBlock.norm
        "n_g": jnp.ones((E,), jnp.float32), "n_b": jnp.zeros((E,), jnp.float32),
        # TransformerBlock.attention (cross-attention)
        "a2_wv": nrm(ks[5], (D, D)), "a2_wk": nrm(ks[6], (D, D)), "a2_wq": nrm(ks[7], (D, D)),
        "a2_wo": nrm(ks[8], (E, E)), "a2_bo": nrm(ks[9], (E,)),
        # TransformerBlock norms
        "n1_g": jnp.ones((E,), jnp.float32), "n1_b": jnp.zeros((E,), jnp.float32),
        "n2_g": jnp.ones((E,), jnp.float32), "n2_b": jnp.zeros((E,), jnp.float32),
        # TransformerBlock feed-forward (torch layout: (out, in))
        "ff_w1": nrm(ks[10], (F, E)), "ff_b1": nrm(ks[11], (F,)),
        "ff_w2": nrm(ks[12], (E, F)), "ff_b2": nrm(ks[13], (E,)),
    }

    x = jax.random.normal(ks[14], (N, Lq, E), jnp.float32)       # decoder input
    enc = jax.random.normal(ks[15], (N, Lk, E), jnp.float32)     # encoder output
    value, key = enc, enc
    trg_mask = jnp.tril(jnp.ones((Lq, Lq), jnp.float32))[None].repeat(N, 0)  # causal
    src_mask = jnp.ones((N, Lq, Lk), jnp.float32)

    # One-time weight prep + one-time int8 mask conversion (both outside the jitted forward).
    prepared = prepare_decoder_params(params, heads=H)
    src_mask_i8 = (src_mask != 0).astype(jnp.int8)
    trg_mask_i8 = (trg_mask != 0).astype(jnp.int8)

    # block_n=2 -> grid=(2,): exercises multi-step pipelining while amortizing per-step overhead.
    fwd = jax.jit(functools.partial(decoder_block_pallas, heads=H, block_n=2))
    out = jax.block_until_ready(fwd(x, value, key, src_mask_i8, trg_mask_i8, prepared))

    ref = decoder_block_ref(x, value, key, src_mask, trg_mask, params, heads=H)
    assert out.shape == (N, Lq, E)
    max_err = float(jnp.max(jnp.abs(out - ref)))
    # bf16 MXU matmuls + approx reciprocal => loosened tolerance vs the f32 reference.
    assert jnp.allclose(out, ref, rtol=5e-2, atol=5e-2), max_err

    print("KERNEL_OK")
</pallas_src>

<mosaic_0001>
module attributes {stable_mosaic.version = 11 : i64} {
  func.func @_decoder_block_kernel(%arg0: i32, %arg1: memref<2x8x32xf32, #tpu.memory_space<vmem>>, %arg2: memref<2x8x32xf32, #tpu.memory_space<vmem>>, %arg3: memref<2x8x32xf32, #tpu.memory_space<vmem>>, %arg4: memref<2x8x8xi8, #tpu.memory_space<vmem>>, %arg5: memref<2x8x8xi8, #tpu.memory_space<vmem>>, %arg6: memref<3x32x32xbf16, #tpu.memory_space<vmem>>, %arg7: memref<4x8x32xbf16, #tpu.memory_space<vmem>>, %arg8: memref<3x32x32xbf16, #tpu.memory_space<vmem>>, %arg9: memref<4x8x32xbf16, #tpu.memory_space<vmem>>, %arg10: memref<32x128xbf16, #tpu.memory_space<vmem>>, %arg11: memref<1x128xf32, #tpu.memory_space<vmem>>, %arg12: memref<128x32xbf16, #tpu.memory_space<vmem>>, %arg13: memref<9x32xf32, #tpu.memory_space<vmem>>, %arg14: memref<2x8x32xf32, #tpu.memory_space<vmem>>) attributes {dimension_semantics = [#tpu.dimension_semantics<parallel>], iteration_bounds = array<i64: 2>, scalar_prefetch = 0 : i64, scratch_operands = 0 : i64, tpu.core_type = #tpu.core_type<tc>, window_params = [{transform_indices = @transform_0, window_bounds = array<i64: 2, 8, 32>}, {transform_indices = @transform_1, window_bounds = array<i64: 2, 8, 32>}, {transform_indices = @transform_2, window_bounds = array<i64: 2, 8, 32>}, {transform_indices = @transform_3, window_bounds = array<i64: 2, 8, 8>}, {transform_indices = @transform_4, window_bounds = array<i64: 2, 8, 8>}, {pipeline_mode = #tpu.pipeline_mode<synchronous>, transform_indices = @transform_5, window_bounds = array<i64: 3, 32, 32>}, {pipeline_mode = #tpu.pipeline_mode<synchronous>, transform_indices = @transform_6, window_bounds = array<i64: 4, 8, 32>}, {pipeline_mode = #tpu.pipeline_mode<synchronous>, transform_indices = @transform_7, window_bounds = array<i64: 3, 32, 32>}, {pipeline_mode = #tpu.pipeline_mode<synchronous>, transform_indices = @transform_8, window_bounds = array<i64: 4, 8, 32>}, {pipeline_mode = #tpu.pipeline_mode<synchronous>, transform_indices = @transform_9, window_bounds = array<i64: 32, 128>}, {pipeline_mode = #tpu.pipeline_mode<synchronous>, transform_indices = @transform_10, window_bounds = array<i64: 1, 128>}, {pipeline_mode = #tpu.pipeline_mode<synchronous>, transform_indices = @transform_11, window_bounds = array<i64: 128, 32>}, {pipeline_mode = #tpu.pipeline_mode<synchronous>, transform_indices = @transform_12, window_bounds = array<i64: 9, 32>}, {transform_indices = @transform_13, window_bounds = array<i64: 2, 8, 32>}]} {
    %c0 = arith.constant 0 : index
    %c0_0 = arith.constant 0 : index
    %c0_1 = arith.constant 0 : index
    %0 = vector.load %arg1[%c0, %c0_0, %c0_1] : memref<2x8x32xf32, #tpu.memory_space<vmem>>, vector<2x8x32xf32>
    %1 = vector.shape_cast %0 : vector<2x8x32xf32> to vector<16x32xf32>
    %c0_2 = arith.constant 0 : index
    %c0_3 = arith.constant 0 : index
    %c0_4 = arith.constant 0 : index
    %2 = vector.load %arg2[%c0_2, %c0_3, %c0_4] : memref<2x8x32xf32, #tpu.memory_space<vmem>>, vector<2x8x32xf32>
    %3 = vector.shape_cast %2 : vector<2x8x32xf32> to vector<16x32xf32>
    %c0_5 = arith.constant 0 : index
    %c0_6 = arith.constant 0 : index
    %c0_7 = arith.constant 0 : index
    %4 = vector.load %arg3[%c0_5, %c0_6, %c0_7] : memref<2x8x32xf32, #tpu.memory_space<vmem>>, vector<2x8x32xf32>
    %5 = vector.shape_cast %4 : vector<2x8x32xf32> to vector<16x32xf32>
    %c0_8 = arith.constant 0 : index
    %c0_9 = arith.constant 0 : index
    %c0_10 = arith.constant 0 : index
    %6 = vector.load %arg4[%c0_8, %c0_9, %c0_10] : memref<2x8x8xi8, #tpu.memory_space<vmem>>, vector<2x8x8xi8>
    %7 = arith.sitofp %6 : vector<2x8x8xi8> to vector<2x8x8xf32>
    %c0_11 = arith.constant 0 : index
    %c0_12 = arith.constant 0 : index
    %c0_13 = arith.constant 0 : index
    %8 = vector.load %arg5[%c0_11, %c0_12, %c0_13] : memref<2x8x8xi8, #tpu.memory_space<vmem>>, vector<2x8x8xi8>
    %9 = arith.sitofp %8 : vector<2x8x8xi8> to vector<2x8x8xf32>
    %c0_14 = arith.constant 0 : index
    %c0_15 = arith.constant 0 : index
    %10 = vector.load %arg13[%c0_14, %c0_15] : memref<9x32xf32, #tpu.memory_space<vmem>>, vector<9x32xf32>
    %11 = arith.truncf %1 : vector<16x32xf32> to vector<16x32xbf16>
    %12 = vector.extract_strided_slice %10 {offsets = [0, 0], sizes = [1, 32], strides = [1, 1]} : vector<9x32xf32> to vector<1x32xf32>
    %c0_16 = arith.constant 0 : index
    %c0_17 = arith.constant 0 : index
    %c0_18 = arith.constant 0 : index
    %13 = vector.load %arg6[%c0_16, %c0_17, %c0_18] : memref<3x32x32xbf16, #tpu.memory_space<vmem>>, vector<1x32x32xbf16>
    %14 = vector.shape_cast %13 : vector<1x32x32xbf16> to vector<32x32xbf16>
    %cst = arith.constant dense<0.000000e+00> : vector<16x32xf32>
    %15 = tpu.matmul %11, %14, %cst {dimension_numbers = #tpu.dot_dimension_numbers<[1], [0], [0], [1], [0, 0, 1, 1], [], []>} : vector<16x32xbf16>, vector<32x32xbf16>, vector<16x32xf32> -> vector<16x32xf32>
    %16 = vector.shape_cast %15 : vector<16x32xf32> to vector<2x8x32xf32>
    %c1 = arith.constant 1 : index
    %c0_19 = arith.constant 0 : index
    %c0_20 = arith.constant 0 : index
    %17 = vector.load %arg6[%c1, %c0_19, %c0_20] : memref<3x32x32xbf16, #tpu.memory_space<vmem>>, vector<1x32x32xbf16>
    %18 = vector.shape_cast %17 : vector<1x32x32xbf16> to vector<32x32xbf16>
    %cst_21 = arith.constant dense<0.000000e+00> : vector<16x32xf32>
    %19 = tpu.matmul %11, %18, %cst_21 {dimension_numbers = #tpu.dot_dimension_numbers<[1], [0], [0], [1], [0, 0, 1, 1], [], []>} : vector<16x32xbf16>, vector<32x32xbf16>, vector<16x32xf32> -> vector<16x32xf32>
    %20 = vector.shape_cast %19 : vector<16x32xf32> to vector<2x8x32xf32>
    %c2 = arith.constant 2 : index
    %c0_22 = arith.constant 0 : index
    %c0_23 = arith.constant 0 : index
    %21 = vector.load %arg6[%c2, %c0_22, %c0_23] : memref<3x32x32xbf16, #tpu.memory_space<vmem>>, vector<1x32x32xbf16>
    %22 = vector.shape_cast %21 : vector<1x32x32xbf16> to vector<32x32xbf16>
    %cst_24 = arith.constant dense<0.000000e+00> : vector<16x32xf32>
    %23 = tpu.matmul %11, %22, %cst_24 {dimension_numbers = #tpu.dot_dimension_numbers<[1], [0], [0], [1], [0, 0, 1, 1], [], []>} : vector<16x32xbf16>, vector<32x32xbf16>, vector<16x32xf32> -> vector<16x32xf32>
    %24 = vector.shape_cast %23 : vector<16x32xf32> to vector<2x8x32xf32>
    %cst_25 = arith.constant 0.000000e+00 : f32
    %25 = vector.broadcast %cst_25 : f32 to vector<16x32xf32>
    %26 = vector.extract_strided_slice %16 {offsets = [0, 0, 0], sizes = [2, 8, 8], strides = [1, 1, 1]} : vector<2x8x32xf32> to vector<2x8x8xf32>
    %27 = arith.truncf %26 : vector<2x8x8xf32> to vector<2x8x8xbf16>
    %28 = vector.extract_strided_slice %20 {offsets = [0, 0, 0], sizes = [2, 8, 8], strides = [1, 1, 1]} : vector<2x8x32xf32> to vector<2x8x8xf32>
    %29 = arith.truncf %28 : vector<2x8x8xf32> to vector<2x8x8xbf16>
    %30 = vector.extract_strided_slice %24 {offsets = [0, 0, 0], sizes = [2, 8, 8], strides = [1, 1, 1]} : vector<2x8x32xf32> to vector<2x8x8xf32>
    %31 = arith.truncf %30 : vector<2x8x8xf32> to vector<2x8x8xbf16>
    %cst_26 = arith.constant dense<0.000000e+00> : vector<2x8x8xf32>
    %32 = tpu.matmul %27, %29, %cst_26 {dimension_numbers = #tpu.dot_dimension_numbers<[2], [2], [1], [1], [0, 0, 0, 1, 1, 1], [0], [0]>} : vector<2x8x8xbf16>, vector<2x8x8xbf16>, vector<2x8x8xf32> -> vector<2x8x8xf32>
    %cst_27 = arith.constant 0.000000e+00 : f32
    %33 = vector.broadcast %cst_27 : f32 to vector<2x8x8xf32>
    %34 = arith.cmpf oeq, %9, %33 : vector<2x8x8xf32>
    %cst_28 = arith.constant -1.000000e+20 : f32
    %35 = vector.broadcast %cst_28 : f32 to vector<2x8x8xf32>
    %36 = arith.select %34, %35, %32 : vector<2x8x8xi1>, vector<2x8x8xf32>
    %cst_29 = arith.constant dense<0xFF800000> : vector<2x8xf32>
    %37 = vector.multi_reduction <maximumf>, %36, %cst_29 [2] : vector<2x8x8xf32> to vector<2x8xf32>
    %38 = vector.shape_cast %37 : vector<2x8xf32> to vector<2x8x1xf32>
    %39 = vector.broadcast %38 : vector<2x8x1xf32> to vector<2x8x8xf32>
    %40 = arith.subf %36, %39 : vector<2x8x8xf32>
    %41 = math.exp %40 : vector<2x8x8xf32>
    %cst_30 = arith.constant dense<0.000000e+00> : vector<2x8xf32>
    %42 = vector.multi_reduction <add>, %41, %cst_30 [2] : vector<2x8x8xf32> to vector<2x8xf32>
    %43 = vector.shape_cast %42 : vector<2x8xf32> to vector<2x8x1xf32>
    %44 = tpu.reciprocal %43 {approx = true} : vector<2x8x1xf32> -> vector<2x8x1xf32>
    %45 = vector.broadcast %44 : vector<2x8x1xf32> to vector<2x8x8xf32>
    %46 = arith.mulf %41, %45 : vector<2x8x8xf32>
    %47 = arith.truncf %46 : vector<2x8x8xf32> to vector<2x8x8xbf16>
    %cst_31 = arith.constant dense<0.000000e+00> : vector<2x8x8xf32>
    %48 = tpu.matmul %47, %31, %cst_31 {dimension_numbers = #tpu.dot_dimension_numbers<[2], [1], [1], [2], [0, 0, 0, 1, 1, 2], [0], [0]>} : vector<2x8x8xbf16>, vector<2x8x8xbf16>, vector<2x8x8xf32> -> vector<2x8x8xf32>
    %49 = vector.shape_cast %48 : vector<2x8x8xf32> to vector<16x8xf32>
    %50 = arith.truncf %49 : vector<16x8xf32> to vector<16x8xbf16>
    %c0_32 = arith.constant 0 : index
    %c0_33 = arith.constant 0 : index
    %c0_34 = arith.constant 0 : index
    %51 = vector.load %arg7[%c0_32, %c0_33, %c0_34] : memref<4x8x32xbf16, #tpu.memory_space<vmem>>, vector<1x8x32xbf16>
    %52 = vector.shape_cast %51 : vector<1x8x32xbf16> to vector<8x32xbf16>
    %cst_35 = arith.constant dense<0.000000e+00> : vector<16x32xf32>
    %53 = tpu.matmul %50, %52, %cst_35 {dimension_numbers = #tpu.dot_dimension_numbers<[1], [0], [0], [1], [0, 0, 1, 1], [], []>} : vector<16x8xbf16>, vector<8x32xbf16>, vector<16x32xf32> -> vector<16x32xf32>
    %54 = arith.addf %25, %53 : vector<16x32xf32>
    %55 = vector.extract_strided_slice %16 {offsets = [0, 0, 8], sizes = [2, 8, 8], strides = [1, 1, 1]} : vector<2x8x32xf32> to vector<2x8x8xf32>
    %56 = arith.truncf %55 : vector<2x8x8xf32> to vector<2x8x8xbf16>
    %57 = vector.extract_strided_slice %20 {offsets = [0, 0, 8], sizes = [2, 8, 8], strides = [1, 1, 1]} : vector<2x8x32xf32> to vector<2x8x8xf32>
    %58 = arith.truncf %57 : vector<2x8x8xf32> to vector<2x8x8xbf16>
    %59 = vector.extract_strided_slice %24 {offsets = [0, 0, 8], sizes = [2, 8, 8], strides = [1, 1, 1]} : vector<2x8x32xf32> to vector<2x8x8xf32>
    %60 = arith.truncf %59 : vector<2x8x8xf32> to vector<2x8x8xbf16>
    %cst_36 = arith.constant dense<0.000000e+00> : vector<2x8x8xf32>
    %61 = tpu.matmul %56, %58, %cst_36 {dimension_numbers = #tpu.dot_dimension_numbers<[2], [2], [1], [1], [0, 0, 0, 1, 1, 1], [0], [0]>} : vector<2x8x8xbf16>, vector<2x8x8xbf16>, vector<2x8x8xf32> -> vector<2x8x8xf32>
    %cst_37 = arith.constant 0.000000e+00 : f32
    %62 = vector.broadcast %cst_37 : f32 to vector<2x8x8xf32>
    %63 = arith.cmpf oeq, %9, %62 : vector<2x8x8xf32>
    %cst_38 = arith.constant -1.000000e+20 : f32
    %64 = vector.broadcast %cst_38 : f32 to vector<2x8x8xf32>
    %65 = arith.select %63, %64, %61 : vector<2x8x8xi1>, vector<2x8x8xf32>
    %cst_39 = arith.constant dense<0xFF800000> : vector<2x8xf32>
    %66 = vector.multi_reduction <maximumf>, %65, %cst_39 [2] : vector<2x8x8xf32> to vector<2x8xf32>
    %67 = vector.shape_cast %66 : vector<2x8xf32> to vector<2x8x1xf32>
    %68 = vector.broadcast %67 : vector<2x8x1xf32> to vector<2x8x8xf32>
    %69 = arith.subf %65, %68 : vector<2x8x8xf32>
    %70 = math.exp %69 : vector<2x8x8xf32>
    %cst_40 = arith.constant dense<0.000000e+00> : vector<2x8xf32>
    %71 = vector.multi_reduction <add>, %70, %cst_40 [2] : vector<2x8x8xf32> to vector<2x8xf32>
    %72 = vector.shape_cast %71 : vector<2x8xf32> to vector<2x8x1xf32>
    %73 = tpu.reciprocal %72 {approx = true} : vector<2x8x1xf32> -> vector<2x8x1xf32>
    %74 = vector.broadcast %73 : vector<2x8x1xf32> to vector<2x8x8xf32>
    %75 = arith.mulf %70, %74 : vector<2x8x8xf32>
    %76 = arith.truncf %75 : vector<2x8x8xf32> to vector<2x8x8xbf16>
    %cst_41 = arith.constant dense<0.000000e+00> : vector<2x8x8xf32>
    %77 = tpu.matmul %76, %60, %cst_41 {dimension_numbers = #tpu.dot_dimension_numbers<[2], [1], [1], [2], [0, 0, 0, 1, 1, 2], [0], [0]>} : vector<2x8x8xbf16>, vector<2x8x8xbf16>, vector<2x8x8xf32> -> vector<2x8x8xf32>
    %78 = vector.shape_cast %77 : vector<2x8x8xf32> to vector<16x8xf32>
    %79 = arith.truncf %78 : vector<16x8xf32> to vector<16x8xbf16>
    %c1_42 = arith.constant 1 : index
    %c0_43 = arith.constant 0 : index
    %c0_44 = arith.constant 0 : index
    %80 = vector.load %arg7[%c1_42, %c0_43, %c0_44] : memref<4x8x32xbf16, #tpu.memory_space<vmem>>, vector<1x8x32xbf16>
    %81 = vector.shape_cast %80 : vector<1x8x32xbf16> to vector<8x32xbf16>
    %cst_45 = arith.constant dense<0.000000e+00> : vector<16x32xf32>
    %82 = tpu.matmul %79, %81, %cst_45 {dimension_numbers = #tpu.dot_dimension_numbers<[1], [0], [0], [1], [0, 0, 1, 1], [], []>} : vector<16x8xbf16>, vector<8x32xbf16>, vector<16x32xf32> -> vector<16x32xf32>
    %83 = arith.addf %54, %82 : vector<16x32xf32>
    %84 = vector.extract_strided_slice %16 {offsets = [0, 0, 16], sizes = [2, 8, 8], strides = [1, 1, 1]} : vector<2x8x32xf32> to vector<2x8x8xf32>
    %85 = arith.truncf %84 : vector<2x8x8xf32> to vector<2x8x8xbf16>
    %86 = vector.extract_strided_slice %20 {offsets = [0, 0, 16], sizes = [2, 8, 8], strides = [1, 1, 1]} : vector<2x8x32xf32> to vector<2x8x8xf32>
    %87 = arith.truncf %86 : vector<2x8x8xf32> to vector<2x8x8xbf16>
    %88 = vector.extract_strided_slice %24 {offsets = [0, 0, 16], sizes = [2, 8, 8], strides = [1, 1, 1]} : vector<2x8x32xf32> to vector<2x8x8xf32>
    %89 = arith.truncf %88 : vector<2x8x8xf32> to vector<2x8x8xbf16>
    %cst_46 = arith.constant dense<0.000000e+00> : vector<2x8x8xf32>
    %90 = tpu.matmul %85, %87, %cst_46 {dimension_numbers = #tpu.dot_dimension_numbers<[2], [2], [1], [1], [0, 0, 0, 1, 1, 1], [0], [0]>} : vector<2x8x8xbf16>, vector<2x8x8xbf16>, vector<2x8x8xf32> -> vector<2x8x8xf32>
    %cst_47 = arith.constant 0.000000e+00 : f32
    %91 = vector.broadcast %cst_47 : f32 to vector<2x8x8xf32>
    %92 = arith.cmpf oeq, %9, %91 : vector<2x8x8xf32>
    %cst_48 = arith.constant -1.000000e+20 : f32
    %93 = vector.broadcast %cst_48 : f32 to vector<2x8x8xf32>
    %94 = arith.select %92, %93, %90 : vector<2x8x8xi1>, vector<2x8x8xf32>
    %cst_49 = arith.constant dense<0xFF800000> : vector<2x8xf32>
    %95 = vector.multi_reduction <maximumf>, %94, %cst_49 [2] : vector<2x8x8xf32> to vector<2x8xf32>
    %96 = vector.shape_cast %95 : vector<2x8xf32> to vector<2x8x1xf32>
    %97 = vector.broadcast %96 : vector<2x8x1xf32> to vector<2x8x8xf32>
    %98 = arith.subf %94, %97 : vector<2x8x8xf32>
    %99 = math.exp %98 : vector<2x8x8xf32>
    %cst_50 = arith.constant dense<0.000000e+00> : vector<2x8xf32>
    %100 = vector.multi_reduction <add>, %99, %cst_50 [2] : vector<2x8x8xf32> to vector<2x8xf32>
    %101 = vector.shape_cast %100 : vector<2x8xf32> to vector<2x8x1xf32>
    %102 = tpu.reciprocal %101 {approx = true} : vector<2x8x1xf32> -> vector<2x8x1xf32>
    %103 = vector.broadcast %102 : vector<2x8x1xf32> to vector<2x8x8xf32>
    %104 = arith.mulf %99, %103 : vector<2x8x8xf32>
    %105 = arith.truncf %104 : vector<2x8x8xf32> to vector<2x8x8xbf16>
    %cst_51 = arith.constant dense<0.000000e+00> : vector<2x8x8xf32>
    %106 = tpu.matmul %105, %89, %cst_51 {dimension_numbers = #tpu.dot_dimension_numbers<[2], [1], [1], [2], [0, 0, 0, 1, 1, 2], [0], [0]>} : vector<2x8x8xbf16>, vector<2x8x8xbf16>, vector<2x8x8xf32> -> vector<2x8x8xf32>
    %107 = vector.shape_cast %106 : vector<2x8x8xf32> to vector<16x8xf32>
    %108 = arith.truncf %107 : vector<16x8xf32> to vector<16x8xbf16>
    %c2_52 = arith.constant 2 : index
    %c0_53 = arith.constant 0 : index
    %c0_54 = arith.constant 0 : index
    %109 = vector.load %arg7[%c2_52, %c0_53, %c0_54] : memref<4x8x32xbf16, #tpu.memory_space<vmem>>, vector<1x8x32xbf16>
    %110 = vector.shape_cast %109 : vector<1x8x32xbf16> to vector<8x32xbf16>
    %cst_55 = arith.constant dense<0.000000e+00> : vector<16x32xf32>
    %111 = tpu.matmul %108, %110, %cst_55 {dimension_numbers = #tpu.dot_dimension_numbers<[1], [0], [0], [1], [0, 0, 1, 1], [], []>} : vector<16x8xbf16>, vector<8x32xbf16>, vector<16x32xf32> -> vector<16x32xf32>
    %112 = arith.addf %83, %111 : vector<16x32xf32>
    %113 = vector.extract_strided_slice %16 {offsets = [0, 0, 24], sizes = [2, 8, 8], strides = [1, 1, 1]} : vector<2x8x32xf32> to vector<2x8x8xf32>
    %114 = arith.truncf %113 : vector<2x8x8xf32> to vector<2x8x8xbf16>
    %115 = vector.extract_strided_slice %20 {offsets = [0, 0, 24], sizes = [2, 8, 8], strides = [1, 1, 1]} : vector<2x8x32xf32> to vector<2x8x8xf32>
    %116 = arith.truncf %115 : vector<2x8x8xf32> to vector<2x8x8xbf16>
    %117 = vector.extract_strided_slice %24 {offsets = [0, 0, 24], sizes = [2, 8, 8], strides = [1, 1, 1]} : vector<2x8x32xf32> to vector<2x8x8xf32>
    %118 = arith.truncf %117 : vector<2x8x8xf32> to vector<2x8x8xbf16>
    %cst_56 = arith.constant dense<0.000000e+00> : vector<2x8x8xf32>
    %119 = tpu.matmul %114, %116, %cst_56 {dimension_numbers = #tpu.dot_dimension_numbers<[2], [2], [1], [1], [0, 0, 0, 1, 1, 1], [0], [0]>} : vector<2x8x8xbf16>, vector<2x8x8xbf16>, vector<2x8x8xf32> -> vector<2x8x8xf32>
    %cst_57 = arith.constant 0.000000e+00 : f32
    %120 = vector.broadcast %cst_57 : f32 to vector<2x8x8xf32>
    %121 = arith.cmpf oeq, %9, %120 : vector<2x8x8xf32>
    %cst_58 = arith.constant -1.000000e+20 : f32
    %122 = vector.broadcast %cst_58 : f32 to vector<2x8x8xf32>
    %123 = arith.select %121, %122, %119 : vector<2x8x8xi1>, vector<2x8x8xf32>
    %cst_59 = arith.constant dense<0xFF800000> : vector<2x8xf32>
    %124 = vector.multi_reduction <maximumf>, %123, %cst_59 [2] : vector<2x8x8xf32> to vector<2x8xf32>
    %125 = vector.shape_cast %124 : vector<2x8xf32> to vector<2x8x1xf32>
    %126 = vector.broadcast %125 : vector<2x8x1xf32> to vector<2x8x8xf32>
    %127 = arith.subf %123, %126 : vector<2x8x8xf32>
    %128 = math.exp %127 : vector<2x8x8xf32>
    %cst_60 = arith.constant dense<0.000000e+00> : vector<2x8xf32>
    %129 = vector.multi_reduction <add>, %128, %cst_60 [2] : vector<2x8x8xf32> to vector<2x8xf32>
    %130 = vector.shape_cast %129 : vector<2x8xf32> to vector<2x8x1xf32>
    %131 = tpu.reciprocal %130 {approx = true} : vector<2x8x1xf32> -> vector<2x8x1xf32>
    %132 = vector.broadcast %131 : vector<2x8x1xf32> to vector<2x8x8xf32>
    %133 = arith.mulf %128, %132 : vector<2x8x8xf32>
    %134 = arith.truncf %133 : vector<2x8x8xf32> to vector<2x8x8xbf16>
    %cst_61 = arith.constant dense<0.000000e+00> : vector<2x8x8xf32>
    %135 = tpu.matmul %134, %118, %cst_61 {dimension_numbers = #tpu.dot_dimension_numbers<[2], [1], [1], [2], [0, 0, 0, 1, 1, 2], [0], [0]>} : vector<2x8x8xbf16>, vector<2x8x8xbf16>, vector<2x8x8xf32> -> vector<2x8x8xf32>
    %136 = vector.shape_cast %135 : vector<2x8x8xf32> to vector<16x8xf32>
    %137 = arith.truncf %136 : vector<16x8xf32> to vector<16x8xbf16>
    %c3 = arith.constant 3 : index
    %c0_62 = arith.constant 0 : index
    %c0_63 = arith.constant 0 : index
    %138 = vector.load %arg7[%c3, %c0_62, %c0_63] : memref<4x8x32xbf16, #tpu.memory_space<vmem>>, vector<1x8x32xbf16>
    %139 = vector.shape_cast %138 : vector<1x8x32xbf16> to vector<8x32xbf16>
    %cst_64 = arith.constant dense<0.000000e+00> : vector<16x32xf32>
    %140 = tpu.matmul %137, %139, %cst_64 {dimension_numbers = #tpu.dot_dimension_numbers<[1], [0], [0], [1], [0, 0, 1, 1], [], []>} : vector<16x8xbf16>, vector<8x32xbf16>, vector<16x32xf32> -> vector<16x32xf32>
    %141 = arith.addf %112, %140 : vector<16x32xf32>
    %142 = vector.broadcast %12 : vector<1x32xf32> to vector<16x32xf32>
    %143 = arith.addf %141, %142 : vector<16x32xf32>
    %144 = vector.extract_strided_slice %10 {offsets = [1, 0], sizes = [1, 32], strides = [1, 1]} : vector<9x32xf32> to vector<1x32xf32>
    %145 = vector.extract_strided_slice %10 {offsets = [2, 0], sizes = [1, 32], strides = [1, 1]} : vector<9x32xf32> to vector<1x32xf32>
    %146 = arith.addf %143, %1 : vector<16x32xf32>
    %cst_65 = arith.constant dense<0.000000e+00> : vector<16xf32>
    %147 = vector.multi_reduction <add>, %146, %cst_65 [1] : vector<16x32xf32> to vector<16xf32>
    %148 = vector.shape_cast %147 : vector<16xf32> to vector<16x1xf32>
    %cst_66 = arith.constant 3.200000e+01 : f32
    %149 = vector.broadcast %cst_66 : f32 to vector<16x1xf32>
    %150 = arith.divf %148, %149 : vector<16x1xf32>
    %151 = vector.broadcast %150 : vector<16x1xf32> to vector<16x32xf32>
    %152 = arith.subf %146, %151 : vector<16x32xf32>
    %153 = arith.mulf %152, %152 : vector<16x32xf32>
    %cst_67 = arith.constant dense<0.000000e+00> : vector<16xf32>
    %154 = vector.multi_reduction <add>, %153, %cst_67 [1] : vector<16x32xf32> to vector<16xf32>
    %155 = vector.shape_cast %154 : vector<16xf32> to vector<16x1xf32>
    %cst_68 = arith.constant 3.200000e+01 : f32
    %156 = vector.broadcast %cst_68 : f32 to vector<16x1xf32>
    %157 = arith.divf %155, %156 : vector<16x1xf32>
    %158 = vector.broadcast %150 : vector<16x1xf32> to vector<16x32xf32>
    %159 = arith.subf %146, %158 : vector<16x32xf32>
    %cst_69 = arith.constant 9.99999974E-6 : f32
    %160 = vector.broadcast %cst_69 : f32 to vector<16x1xf32>
    %161 = arith.addf %157, %160 : vector<16x1xf32>
    %162 = math.rsqrt %161 : vector<16x1xf32>
    %163 = vector.broadcast %162 : vector<16x1xf32> to vector<16x32xf32>
    %164 = arith.mulf %159, %163 : vector<16x32xf32>
    %165 = vector.broadcast %144 : vector<1x32xf32> to vector<16x32xf32>
    %166 = arith.mulf %164, %165 : vector<16x32xf32>
    %167 = vector.broadcast %145 : vector<1x32xf32> to vector<16x32xf32>
    %168 = arith.addf %166, %167 : vector<16x32xf32>
    %169 = arith.truncf %168 : vector<16x32xf32> to vector<16x32xbf16>
    %170 = arith.truncf %5 : vector<16x32xf32> to vector<16x32xbf16>
    %171 = arith.truncf %3 : vector<16x32xf32> to vector<16x32xbf16>
    %172 = vector.extract_strided_slice %10 {offsets = [3, 0], sizes = [1, 32], strides = [1, 1]} : vector<9x32xf32> to vector<1x32xf32>
    %c0_70 = arith.constant 0 : index
    %c0_71 = arith.constant 0 : index
    %c0_72 = arith.constant 0 : index
    %173 = vector.load %arg8[%c0_70, %c0_71, %c0_72] : memref<3x32x32xbf16, #tpu.memory_space<vmem>>, vector<1x32x32xbf16>
    %174 = vector.shape_cast %173 : vector<1x32x32xbf16> to vector<32x32xbf16>
    %cst_73 = arith.constant dense<0.000000e+00> : vector<16x32xf32>
    %175 = tpu.matmul %169, %174, %cst_73 {dimension_numbers = #tpu.dot_dimension_numbers<[1], [0], [0], [1], [0, 0, 1, 1], [], []>} : vector<16x32xbf16>, vector<32x32xbf16>, vector<16x32xf32> -> vector<16x32xf32>
    %176 = vector.shape_cast %175 : vector<16x32xf32> to vector<2x8x32xf32>
    %c1_74 = arith.constant 1 : index
    %c0_75 = arith.constant 0 : index
    %c0_76 = arith.constant 0 : index
    %177 = vector.load %arg8[%c1_74, %c0_75, %c0_76] : memref<3x32x32xbf16, #tpu.memory_space<vmem>>, vector<1x32x32xbf16>
    %178 = vector.shape_cast %177 : vector<1x32x32xbf16> to vector<32x32xbf16>
    %cst_77 = arith.constant dense<0.000000e+00> : vector<16x32xf32>
    %179 = tpu.matmul %170, %178, %cst_77 {dimension_numbers = #tpu.dot_dimension_numbers<[1], [0], [0], [1], [0, 0, 1, 1], [], []>} : vector<16x32xbf16>, vector<32x32xbf16>, vector<16x32xf32> -> vector<16x32xf32>
    %180 = vector.shape_cast %179 : vector<16x32xf32> to vector<2x8x32xf32>
    %c2_78 = arith.constant 2 : index
    %c0_79 = arith.constant 0 : index
    %c0_80 = arith.constant 0 : index
    %181 = vector.load %arg8[%c2_78, %c0_79, %c0_80] : memref<3x32x32xbf16, #tpu.memory_space<vmem>>, vector<1x32x32xbf16>
    %182 = vector.shape_cast %181 : vector<1x32x32xbf16> to vector<32x32xbf16>
    %cst_81 = arith.constant dense<0.000000e+00> : vector<16x32xf32>
    %183 = tpu.matmul %171, %182, %cst_81 {dimension_numbers = #tpu.dot_dimension_numbers<[1], [0], [0], [1], [0, 0, 1, 1], [], []>} : vector<16x32xbf16>, vector<32x32xbf16>, vector<16x32xf32> -> vector<16x32xf32>
    %184 = vector.shape_cast %183 : vector<16x32xf32> to vector<2x8x32xf32>
    %cst_82 = arith.constant 0.000000e+00 : f32
    %185 = vector.broadcast %cst_82 : f32 to vector<16x32xf32>
    %186 = vector.extract_strided_slice %176 {offsets = [0, 0, 0], sizes = [2, 8, 8], strides = [1, 1, 1]} : vector<2x8x32xf32> to vector<2x8x8xf32>
    %187 = arith.truncf %186 : vector<2x8x8xf32> to vector<2x8x8xbf16>
    %188 = vector.extract_strided_slice %180 {offsets = [0, 0, 0], sizes = [2, 8, 8], strides = [1, 1, 1]} : vector<2x8x32xf32> to vector<2x8x8xf32>
    %189 = arith.truncf %188 : vector<2x8x8xf32> to vector<2x8x8xbf16>
    %190 = vector.extract_strided_slice %184 {offsets = [0, 0, 0], sizes = [2, 8, 8], strides = [1, 1, 1]} : vector<2x8x32xf32> to vector<2x8x8xf32>
    %191 = arith.truncf %190 : vector<2x8x8xf32> to vector<2x8x8xbf16>
    %cst_83 = arith.constant dense<0.000000e+00> : vector<2x8x8xf32>
    %192 = tpu.matmul %187, %189, %cst_83 {dimension_numbers = #tpu.dot_dimension_numbers<[2], [2], [1], [1], [0, 0, 0, 1, 1, 1], [0], [0]>} : vector<2x8x8xbf16>, vector<2x8x8xbf16>, vector<2x8x8xf32> -> vector<2x8x8xf32>
    %cst_84 = arith.constant 0.000000e+00 : f32
    %193 = vector.broadcast %cst_84 : f32 to vector<2x8x8xf32>
    %194 = arith.cmpf oeq, %7, %193 : vector<2x8x8xf32>
    %cst_85 = arith.constant -1.000000e+20 : f32
    %195 = vector.broadcast %cst_85 : f32 to vector<2x8x8xf32>
    %196 = arith.select %194, %195, %192 : vector<2x8x8xi1>, vector<2x8x8xf32>
    %cst_86 = arith.constant dense<0xFF800000> : vector<2x8xf32>
    %197 = vector.multi_reduction <maximumf>, %196, %cst_86 [2] : vector<2x8x8xf32> to vector<2x8xf32>
    %198 = vector.shape_cast %197 : vector<2x8xf32> to vector<2x8x1xf32>
    %199 = vector.broadcast %198 : vector<2x8x1xf32> to vector<2x8x8xf32>
    %200 = arith.subf %196, %199 : vector<2x8x8xf32>
    %201 = math.exp %200 : vector<2x8x8xf32>
    %cst_87 = arith.constant dense<0.000000e+00> : vector<2x8xf32>
    %202 = vector.multi_reduction <add>, %201, %cst_87 [2] : vector<2x8x8xf32> to vector<2x8xf32>
    %203 = vector.shape_cast %202 : vector<2x8xf32> to vector<2x8x1xf32>
    %204 = tpu.reciprocal %203 {approx = true} : vector<2x8x1xf32> -> vector<2x8x1xf32>
    %205 = vector.broadcast %204 : vector<2x8x1xf32> to vector<2x8x8xf32>
    %206 = arith.mulf %201, %205 : vector<2x8x8xf32>
    %207 = arith.truncf %206 : vector<2x8x8xf32> to vector<2x8x8xbf16>
    %cst_88 = arith.constant dense<0.000000e+00> : vector<2x8x8xf32>
    %208 = tpu.matmul %207, %191, %cst_88 {dimension_numbers = #tpu.dot_dimension_numbers<[2], [1], [1], [2], [0, 0, 0, 1, 1, 2], [0], [0]>} : vector<2x8x8xbf16>, vector<2x8x8xbf16>, vector<2x8x8xf32> -> vector<2x8x8xf32>
    %209 = vector.shape_cast %208 : vector<2x8x8xf32> to vector<16x8xf32>
    %210 = arith.truncf %209 : vector<16x8xf32> to vector<16x8xbf16>
    %c0_89 = arith.constant 0 : index
    %c0_90 = arith.constant 0 : index
    %c0_91 = arith.constant 0 : index
    %211 = vector.load %arg9[%c0_89, %c0_90, %c0_91] : memref<4x8x32xbf16, #tpu.memory_space<vmem>>, vector<1x8x32xbf16>
    %212 = vector.shape_cast %211 : vector<1x8x32xbf16> to vector<8x32xbf16>
    %cst_92 = arith.constant dense<0.000000e+00> : vector<16x32xf32>
    %213 = tpu.matmul %210, %212, %cst_92 {dimension_numbers = #tpu.dot_dimension_numbers<[1], [0], [0], [1], [0, 0, 1, 1], [], []>} : vector<16x8xbf16>, vector<8x32xbf16>, vector<16x32xf32> -> vector<16x32xf32>
    %214 = arith.addf %185, %213 : vector<16x32xf32>
    %215 = vector.extract_strided_slice %176 {offsets = [0, 0, 8], sizes = [2, 8, 8], strides = [1, 1, 1]} : vector<2x8x32xf32> to vector<2x8x8xf32>
    %216 = arith.truncf %215 : vector<2x8x8xf32> to vector<2x8x8xbf16>
    %217 = vector.extract_strided_slice %180 {offsets = [0, 0, 8], sizes = [2, 8, 8], strides = [1, 1, 1]} : vector<2x8x32xf32> to vector<2x8x8xf32>
    %218 = arith.truncf %217 : vector<2x8x8xf32> to vector<2x8x8xbf16>
    %219 = vector.extract_strided_slice %184 {offsets = [0, 0, 8], sizes = [2, 8, 8], strides = [1, 1, 1]} : vector<2x8x32xf32> to vector<2x8x8xf32>
    %220 = arith.truncf %219 : vector<2x8x8xf32> to vector<2x8x8xbf16>
    %cst_93 = arith.constant dense<0.000000e+00> : vector<2x8x8xf32>
    %221 = tpu.matmul %216, %218, %cst_93 {dimension_numbers = #tpu.dot_dimension_numbers<[2], [2], [1], [1], [0, 0, 0, 1, 1, 1], [0], [0]>} : vector<2x8x8xbf16>, vector<2x8x8xbf16>, vector<2x8x8xf32> -> vector<2x8x8xf32>
    %cst_94 = arith.constant 0.000000e+00 : f32
    %222 = vector.broadcast %cst_94 : f32 to vector<2x8x8xf32>
    %223 = arith.cmpf oeq, %7, %222 : vector<2x8x8xf32>
    %cst_95 = arith.constant -1.000000e+20 : f32
    %224 = vector.broadcast %cst_95 : f32 to vector<2x8x8xf32>
    %225 = arith.select %223, %224, %221 : vector<2x8x8xi1>, vector<2x8x8xf32>
    %cst_96 = arith.constant dense<0xFF800000> : vector<2x8xf32>
    %226 = vector.multi_reduction <maximumf>, %225, %cst_96 [2] : vector<2x8x8xf32> to vector<2x8xf32>
    %227 = vector.shape_cast %226 : vector<2x8xf32> to vector<2x8x1xf32>
    %228 = vector.broadcast %227 : vector<2x8x1xf32> to vector<2x8x8xf32>
    %229 = arith.subf %225, %228 : vector<2x8x8xf32>
    %230 = math.exp %229 : vector<2x8x8xf32>
    %cst_97 = arith.constant dense<0.000000e+00> : vector<2x8xf32>
    %231 = vector.multi_reduction <add>, %230, %cst_97 [2] : vector<2x8x8xf32> to vector<2x8xf32>
    %232 = vector.shape_cast %231 : vector<2x8xf32> to vector<2x8x1xf32>
    %233 = tpu.reciprocal %232 {approx = true} : vector<2x8x1xf32> -> vector<2x8x1xf32>
    %234 = vector.broadcast %233 : vector<2x8x1xf32> to vector<2x8x8xf32>
    %235 = arith.mulf %230, %234 : vector<2x8x8xf32>
    %236 = arith.truncf %235 : vector<2x8x8xf32> to vector<2x8x8xbf16>
    %cst_98 = arith.constant dense<0.000000e+00> : vector<2x8x8xf32>
    %237 = tpu.matmul %236, %220, %cst_98 {dimension_numbers = #tpu.dot_dimension_numbers<[2], [1], [1], [2], [0, 0, 0, 1, 1, 2], [0], [0]>} : vector<2x8x8xbf16>, vector<2x8x8xbf16>, vector<2x8x8xf32> -> vector<2x8x8xf32>
    %238 = vector.shape_cast %237 : vector<2x8x8xf32> to vector<16x8xf32>
    %239 = arith.truncf %238 : vector<16x8xf32> to vector<16x8xbf16>
    %c1_99 = arith.constant 1 : index
    %c0_100 = arith.constant 0 : index
    %c0_101 = arith.constant 0 : index
    %240 = vector.load %arg9[%c1_99, %c0_100, %c0_101] : memref<4x8x32xbf16, #tpu.memory_space<vmem>>, vector<1x8x32xbf16>
    %241 = vector.shape_cast %240 : vector<1x8x32xbf16> to vector<8x32xbf16>
    %cst_102 = arith.constant dense<0.000000e+00> : vector<16x32xf32>
    %242 = tpu.matmul %239, %241, %cst_102 {dimension_numbers = #tpu.dot_dimension_numbers<[1], [0], [0], [1], [0, 0, 1, 1], [], []>} : vector<16x8xbf16>, vector<8x32xbf16>, vector<16x32xf32> -> vector<16x32xf32>
    %243 = arith.addf %214, %242 : vector<16x32xf32>
    %244 = vector.extract_strided_slice %176 {offsets = [0, 0, 16], sizes = [2, 8, 8], strides = [1, 1, 1]} : vector<2x8x32xf32> to vector<2x8x8xf32>
    %245 = arith.truncf %244 : vector<2x8x8xf32> to vector<2x8x8xbf16>
    %246 = vector.extract_strided_slice %180 {offsets = [0, 0, 16], sizes = [2, 8, 8], strides = [1, 1, 1]} : vector<2x8x32xf32> to vector<2x8x8xf32>
    %247 = arith.truncf %246 : vector<2x8x8xf32> to vector<2x8x8xbf16>
    %248 = vector.extract_strided_slice %184 {offsets = [0, 0, 16], sizes = [2, 8, 8], strides = [1, 1, 1]} : vector<2x8x32xf32> to vector<2x8x8xf32>
    %249 = arith.truncf %248 : vector<2x8x8xf32> to vector<2x8x8xbf16>
    %cst_103 = arith.constant dense<0.000000e+00> : vector<2x8x8xf32>
    %250 = tpu.matmul %245, %247, %cst_103 {dimension_numbers = #tpu.dot_dimension_numbers<[2], [2], [1], [1], [0, 0, 0, 1, 1, 1], [0], [0]>} : vector<2x8x8xbf16>, vector<2x8x8xbf16>, vector<2x8x8xf32> -> vector<2x8x8xf32>
    %cst_104 = arith.constant 0.000000e+00 : f32
    %251 = vector.broadcast %cst_104 : f32 to vector<2x8x8xf32>
    %252 = arith.cmpf oeq, %7, %251 : vector<2x8x8xf32>
    %cst_105 = arith.constant -1.000000e+20 : f32
    %253 = vector.broadcast %cst_105 : f32 to vector<2x8x8xf32>
    %254 = arith.select %252, %253, %250 : vector<2x8x8xi1>, vector<2x8x8xf32>
    %cst_106 = arith.constant dense<0xFF800000> : vector<2x8xf32>
    %255 = vector.multi_reduction <maximumf>, %254, %cst_106 [2] : vector<2x8x8xf32> to vector<2x8xf32>
    %256 = vector.shape_cast %255 : vector<2x8xf32> to vector<2x8x1xf32>
    %257 = vector.broadcast %256 : vector<2x8x1xf32> to vector<2x8x8xf32>
    %258 = arith.subf %254, %257 : vector<2x8x8xf32>
    %259 = math.exp %258 : vector<2x8x8xf32>
    %cst_107 = arith.constant dense<0.000000e+00> : vector<2x8xf32>
    %260 = vector.multi_reduction <add>, %259, %cst_107 [2] : vector<2x8x8xf32> to vector<2x8xf32>
    %261 = vector.shape_cast %260 : vector<2x8xf32> to vector<2x8x1xf32>
    %262 = tpu.reciprocal %261 {approx = true} : vector<2x8x1xf32> -> vector<2x8x1xf32>
    %263 = vector.broadcast %262 : vector<2x8x1xf32> to vector<2x8x8xf32>
    %264 = arith.mulf %259, %263 : vector<2x8x8xf32>
    %265 = arith.truncf %264 : vector<2x8x8xf32> to vector<2x8x8xbf16>
    %cst_108 = arith.constant dense<0.000000e+00> : vector<2x8x8xf32>
    %266 = tpu.matmul %265, %249, %cst_108 {dimension_numbers = #tpu.dot_dimension_numbers<[2], [1], [1], [2], [0, 0, 0, 1, 1, 2], [0], [0]>} : vector<2x8x8xbf16>, vector<2x8x8xbf16>, vector<2x8x8xf32> -> vector<2x8x8xf32>
    %267 = vector.shape_cast %266 : vector<2x8x8xf32> to vector<16x8xf32>
    %268 = arith.truncf %267 : vector<16x8xf32> to vector<16x8xbf16>
    %c2_109 = arith.constant 2 : index
    %c0_110 = arith.constant 0 : index
    %c0_111 = arith.constant 0 : index
    %269 = vector.load %arg9[%c2_109, %c0_110, %c0_111] : memref<4x8x32xbf16, #tpu.memory_space<vmem>>, vector<1x8x32xbf16>
    %270 = vector.shape_cast %269 : vector<1x8x32xbf16> to vector<8x32xbf16>
    %cst_112 = arith.constant dense<0.000000e+00> : vector<16x32xf32>
    %271 = tpu.matmul %268, %270, %cst_112 {dimension_numbers = #tpu.dot_dimension_numbers<[1], [0], [0], [1], [0, 0, 1, 1], [], []>} : vector<16x8xbf16>, vector<8x32xbf16>, vector<16x32xf32> -> vector<16x32xf32>
    %272 = arith.addf %243, %271 : vector<16x32xf32>
    %273 = vector.extract_strided_slice %176 {offsets = [0, 0, 24], sizes = [2, 8, 8], strides = [1, 1, 1]} : vector<2x8x32xf32> to vector<2x8x8xf32>
    %274 = arith.truncf %273 : vector<2x8x8xf32> to vector<2x8x8xbf16>
    %275 = vector.extract_strided_slice %180 {offsets = [0, 0, 24], sizes = [2, 8, 8], strides = [1, 1, 1]} : vector<2x8x32xf32> to vector<2x8x8xf32>
    %276 = arith.truncf %275 : vector<2x8x8xf32> to vector<2x8x8xbf16>
    %277 = vector.extract_strided_slice %184 {offsets = [0, 0, 24], sizes = [2, 8, 8], strides = [1, 1, 1]} : vector<2x8x32xf32> to vector<2x8x8xf32>
    %278 = arith.truncf %277 : vector<2x8x8xf32> to vector<2x8x8xbf16>
    %cst_113 = arith.constant dense<0.000000e+00> : vector<2x8x8xf32>
    %279 = tpu.matmul %274, %276, %cst_113 {dimension_numbers = #tpu.dot_dimension_numbers<[2], [2], [1], [1], [0, 0, 0, 1, 1, 1], [0], [0]>} : vector<2x8x8xbf16>, vector<2x8x8xbf16>, vector<2x8x8xf32> -> vector<2x8x8xf32>
    %cst_114 = arith.constant 0.000000e+00 : f32
    %280 = vector.broadcast %cst_114 : f32 to vector<2x8x8xf32>
    %281 = arith.cmpf oeq, %7, %280 : vector<2x8x8xf32>
    %cst_115 = arith.constant -1.000000e+20 : f32
    %282 = vector.broadcast %cst_115 : f32 to vector<2x8x8xf32>
    %283 = arith.select %281, %282, %279 : vector<2x8x8xi1>, vector<2x8x8xf32>
    %cst_116 = arith.constant dense<0xFF800000> : vector<2x8xf32>
    %284 = vector.multi_reduction <maximumf>, %283, %cst_116 [2] : vector<2x8x8xf32> to vector<2x8xf32>
    %285 = vector.shape_cast %284 : vector<2x8xf32> to vector<2x8x1xf32>
    %286 = vector.broadcast %285 : vector<2x8x1xf32> to vector<2x8x8xf32>
    %287 = arith.subf %283, %286 : vector<2x8x8xf32>
    %288 = math.exp %287 : vector<2x8x8xf32>
    %cst_117 = arith.constant dense<0.000000e+00> : vector<2x8xf32>
    %289 = vector.multi_reduction <add>, %288, %cst_117 [2] : vector<2x8x8xf32> to vector<2x8xf32>
    %290 = vector.shape_cast %289 : vector<2x8xf32> to vector<2x8x1xf32>
    %291 = tpu.reciprocal %290 {approx = true} : vector<2x8x1xf32> -> vector<2x8x1xf32>
    %292 = vector.broadcast %291 : vector<2x8x1xf32> to vector<2x8x8xf32>
    %293 = arith.mulf %288, %292 : vector<2x8x8xf32>
    %294 = arith.truncf %293 : vector<2x8x8xf32> to vector<2x8x8xbf16>
    %cst_118 = arith.constant dense<0.000000e+00> : vector<2x8x8xf32>
    %295 = tpu.matmul %294, %278, %cst_118 {dimension_numbers = #tpu.dot_dimension_numbers<[2], [1], [1], [2], [0, 0, 0, 1, 1, 2], [0], [0]>} : vector<2x8x8xbf16>, vector<2x8x8xbf16>, vector<2x8x8xf32> -> vector<2x8x8xf32>
    %296 = vector.shape_cast %295 : vector<2x8x8xf32> to vector<16x8xf32>
    %297 = arith.truncf %296 : vector<16x8xf32> to vector<16x8xbf16>
    %c3_119 = arith.constant 3 : index
    %c0_120 = arith.constant 0 : index
    %c0_121 = arith.constant 0 : index
    %298 = vector.load %arg9[%c3_119, %c0_120, %c0_121] : memref<4x8x32xbf16, #tpu.memory_space<vmem>>, vector<1x8x32xbf16>
    %299 = vector.shape_cast %298 : vector<1x8x32xbf16> to vector<8x32xbf16>
    %cst_122 = arith.constant dense<0.000000e+00> : vector<16x32xf32>
    %300 = tpu.matmul %297, %299, %cst_122 {dimension_numbers = #tpu.dot_dimension_numbers<[1], [0], [0], [1], [0, 0, 1, 1], [], []>} : vector<16x8xbf16>, vector<8x32xbf16>, vector<16x32xf32> -> vector<16x32xf32>
    %301 = arith.addf %272, %300 : vector<16x32xf32>
    %302 = vector.broadcast %172 : vector<1x32xf32> to vector<16x32xf32>
    %303 = arith.addf %301, %302 : vector<16x32xf32>
    %304 = vector.extract_strided_slice %10 {offsets = [4, 0], sizes = [1, 32], strides = [1, 1]} : vector<9x32xf32> to vector<1x32xf32>
    %305 = vector.extract_strided_slice %10 {offsets = [5, 0], sizes = [1, 32], strides = [1, 1]} : vector<9x32xf32> to vector<1x32xf32>
    %306 = arith.addf %303, %168 : vector<16x32xf32>
    %cst_123 = arith.constant dense<0.000000e+00> : vector<16xf32>
    %307 = vector.multi_reduction <add>, %306, %cst_123 [1] : vector<16x32xf32> to vector<16xf32>
    %308 = vector.shape_cast %307 : vector<16xf32> to vector<16x1xf32>
    %cst_124 = arith.constant 3.200000e+01 : f32
    %309 = vector.broadcast %cst_124 : f32 to vector<16x1xf32>
    %310 = arith.divf %308, %309 : vector<16x1xf32>
    %311 = vector.broadcast %310 : vector<16x1xf32> to vector<16x32xf32>
    %312 = arith.subf %306, %311 : vector<16x32xf32>
    %313 = arith.mulf %312, %312 : vector<16x32xf32>
    %cst_125 = arith.constant dense<0.000000e+00> : vector<16xf32>
    %314 = vector.multi_reduction <add>, %313, %cst_125 [1] : vector<16x32xf32> to vector<16xf32>
    %315 = vector.shape_cast %314 : vector<16xf32> to vector<16x1xf32>
    %cst_126 = arith.constant 3.200000e+01 : f32
    %316 = vector.broadcast %cst_126 : f32 to vector<16x1xf32>
    %317 = arith.divf %315, %316 : vector<16x1xf32>
    %318 = vector.broadcast %310 : vector<16x1xf32> to vector<16x32xf32>
    %319 = arith.subf %306, %318 : vector<16x32xf32>
    %cst_127 = arith.constant 9.99999974E-6 : f32
    %320 = vector.broadcast %cst_127 : f32 to vector<16x1xf32>
    %321 = arith.addf %317, %320 : vector<16x1xf32>
    %322 = math.rsqrt %321 : vector<16x1xf32>
    %323 = vector.broadcast %322 : vector<16x1xf32> to vector<16x32xf32>
    %324 = arith.mulf %319, %323 : vector<16x32xf32>
    %325 = vector.broadcast %304 : vector<1x32xf32> to vector<16x32xf32>
    %326 = arith.mulf %324, %325 : vector<16x32xf32>
    %327 = vector.broadcast %305 : vector<1x32xf32> to vector<16x32xf32>
    %328 = arith.addf %326, %327 : vector<16x32xf32>
    %329 = arith.truncf %328 : vector<16x32xf32> to vector<16x32xbf16>
    %c0_128 = arith.constant 0 : index
    %c0_129 = arith.constant 0 : index
    %330 = vector.load %arg10[%c0_128, %c0_129] : memref<32x128xbf16, #tpu.memory_space<vmem>>, vector<32x128xbf16>
    %cst_130 = arith.constant dense<0.000000e+00> : vector<16x128xf32>
    %331 = tpu.matmul %329, %330, %cst_130 {dimension_numbers = #tpu.dot_dimension_numbers<[1], [0], [0], [1], [0, 0, 1, 1], [], []>} : vector<16x32xbf16>, vector<32x128xbf16>, vector<16x128xf32> -> vector<16x128xf32>
    %c0_131 = arith.constant 0 : index
    %c0_132 = arith.constant 0 : index
    %332 = vector.load %arg11[%c0_131, %c0_132] : memref<1x128xf32, #tpu.memory_space<vmem>>, vector<1x128xf32>
    %333 = vector.broadcast %332 : vector<1x128xf32> to vector<16x128xf32>
    %334 = arith.addf %331, %333 : vector<16x128xf32>
    %cst_133 = arith.constant 0.000000e+00 : f32
    %335 = vector.broadcast %cst_133 : f32 to vector<16x128xf32>
    %336 = arith.maximumf %334, %335 : vector<16x128xf32>
    %337 = arith.truncf %336 : vector<16x128xf32> to vector<16x128xbf16>
    %c0_134 = arith.constant 0 : index
    %c0_135 = arith.constant 0 : index
    %338 = vector.load %arg12[%c0_134, %c0_135] : memref<128x32xbf16, #tpu.memory_space<vmem>>, vector<128x32xbf16>
    %cst_136 = arith.constant dense<0.000000e+00> : vector<16x32xf32>
    %339 = tpu.matmul %337, %338, %cst_136 {dimension_numbers = #tpu.dot_dimension_numbers<[1], [0], [0], [1], [0, 0, 1, 1], [], []>} : vector<16x128xbf16>, vector<128x32xbf16>, vector<16x32xf32> -> vector<16x32xf32>
    %340 = vector.extract_strided_slice %10 {offsets = [6, 0], sizes = [1, 32], strides = [1, 1]} : vector<9x32xf32> to vector<1x32xf32>
    %341 = vector.broadcast %340 : vector<1x32xf32> to vector<16x32xf32>
    %342 = arith.addf %339, %341 : vector<16x32xf32>
    %343 = vector.extract_strided_slice %10 {offsets = [7, 0], sizes = [1, 32], strides = [1, 1]} : vector<9x32xf32> to vector<1x32xf32>
    %344 = vector.extract_strided_slice %10 {offsets = [8, 0], sizes = [1, 32], strides = [1, 1]} : vector<9x32xf32> to vector<1x32xf32>
    %345 = arith.addf %342, %328 : vector<16x32xf32>
    %cst_137 = arith.constant dense<0.000000e+00> : vector<16xf32>
    %346 = vector.multi_reduction <add>, %345, %cst_137 [1] : vector<16x32xf32> to vector<16xf32>
    %347 = vector.shape_cast %346 : vector<16xf32> to vector<16x1xf32>
    %cst_138 = arith.constant 3.200000e+01 : f32
    %348 = vector.broadcast %cst_138 : f32 to vector<16x1xf32>
    %349 = arith.divf %347, %348 : vector<16x1xf32>
    %350 = vector.broadcast %349 : vector<16x1xf32> to vector<16x32xf32>
    %351 = arith.subf %345, %350 : vector<16x32xf32>
    %352 = arith.mulf %351, %351 : vector<16x32xf32>
    %cst_139 = arith.constant dense<0.000000e+00> : vector<16xf32>
    %353 = vector.multi_reduction <add>, %352, %cst_139 [1] : vector<16x32xf32> to vector<16xf32>
    %354 = vector.shape_cast %353 : vector<16xf32> to vector<16x1xf32>
    %cst_140 = arith.constant 3.200000e+01 : f32
    %355 = vector.broadcast %cst_140 : f32 to vector<16x1xf32>
    %356 = arith.divf %354, %355 : vector<16x1xf32>
    %357 = vector.broadcast %349 : vector<16x1xf32> to vector<16x32xf32>
    %358 = arith.subf %345, %357 : vector<16x32xf32>
    %cst_141 = arith.constant 9.99999974E-6 : f32
    %359 = vector.broadcast %cst_141 : f32 to vector<16x1xf32>
    %360 = arith.addf %356, %359 : vector<16x1xf32>
    %361 = math.rsqrt %360 : vector<16x1xf32>
    %362 = vector.broadcast %361 : vector<16x1xf32> to vector<16x32xf32>
    %363 = arith.mulf %358, %362 : vector<16x32xf32>
    %364 = vector.broadcast %343 : vector<1x32xf32> to vector<16x32xf32>
    %365 = arith.mulf %363, %364 : vector<16x32xf32>
    %366 = vector.broadcast %344 : vector<1x32xf32> to vector<16x32xf32>
    %367 = arith.addf %365, %366 : vector<16x32xf32>
    %368 = vector.shape_cast %367 : vector<16x32xf32> to vector<2x8x32xf32>
    %c0_142 = arith.constant 0 : index
    %c0_143 = arith.constant 0 : index
    %c0_144 = arith.constant 0 : index
    %369 = vector.load %arg14[%c0_142, %c0_143, %c0_144] : memref<2x8x32xf32, #tpu.memory_space<vmem>>, vector<2x8x32xf32>
    tpu.vector_store %arg14[%c0_142, %c0_143, %c0_144], %368 {strides = array<i32>} : memref<2x8x32xf32, #tpu.memory_space<vmem>>, vector<2x8x32xf32>,
    return
  }
  func.func @transform_0(%arg0: i32) -> (i32, i32, i32) {
    %c0_i32 = arith.constant 0 : i32
    %c0_i32_0 = arith.constant 0 : i32
    %c0_i32_1 = arith.constant 0 : i32
    return %arg0, %c0_i32, %c0_i32_0 : i32, i32, i32
  }
  func.func @transform_1(%arg0: i32) -> (i32, i32, i32) {
    %c0_i32 = arith.constant 0 : i32
    %c0_i32_0 = arith.constant 0 : i32
    %c0_i32_1 = arith.constant 0 : i32
    return %arg0, %c0_i32, %c0_i32_0 : i32, i32, i32
  }
  func.func @transform_2(%arg0: i32) -> (i32, i32, i32) {
    %c0_i32 = arith.constant 0 : i32
    %c0_i32_0 = arith.constant 0 : i32
    %c0_i32_1 = arith.constant 0 : i32
    return %arg0, %c0_i32, %c0_i32_0 : i32, i32, i32
  }
  func.func @transform_3(%arg0: i32) -> (i32, i32, i32) {
    %c0_i32 = arith.constant 0 : i32
    %c0_i32_0 = arith.constant 0 : i32
    %c0_i32_1 = arith.constant 0 : i32
    return %arg0, %c0_i32, %c0_i32_0 : i32, i32, i32
  }
  func.func @transform_4(%arg0: i32) -> (i32, i32, i32) {
    %c0_i32 = arith.constant 0 : i32
    %c0_i32_0 = arith.constant 0 : i32
    %c0_i32_1 = arith.constant 0 : i32
    return %arg0, %c0_i32, %c0_i32_0 : i32, i32, i32
  }
  func.func @transform_5(%arg0: i32) -> (i32, i32, i32) {
    %c0_i32 = arith.constant 0 : i32
    %c0_i32_0 = arith.constant 0 : i32
    %c0_i32_1 = arith.constant 0 : i32
    %c0_i32_2 = arith.constant 0 : i32
    return %c0_i32, %c0_i32_0, %c0_i32_1 : i32, i32, i32
  }
  func.func @transform_6(%arg0: i32) -> (i32, i32, i32) {
    %c0_i32 = arith.constant 0 : i32
    %c0_i32_0 = arith.constant 0 : i32
    %c0_i32_1 = arith.constant 0 : i32
    %c0_i32_2 = arith.constant 0 : i32
    return %c0_i32, %c0_i32_0, %c0_i32_1 : i32, i32, i32
  }
  func.func @transform_7(%arg0: i32) -> (i32, i32, i32) {
    %c0_i32 = arith.constant 0 : i32
    %c0_i32_0 = arith.constant 0 : i32
    %c0_i32_1 = arith.constant 0 : i32
    %c0_i32_2 = arith.constant 0 : i32
    return %c0_i32, %c0_i32_0, %c0_i32_1 : i32, i32, i32
  }
  func.func @transform_8(%arg0: i32) -> (i32, i32, i32) {
    %c0_i32 = arith.constant 0 : i32
    %c0_i32_0 = arith.constant 0 : i32
    %c0_i32_1 = arith.constant 0 : i32
    %c0_i32_2 = arith.constant 0 : i32
    return %c0_i32, %c0_i32_0, %c0_i32_1 : i32, i32, i32
  }
  func.func @transform_9(%arg0: i32) -> (i32, i32) {
    %c0_i32 = arith.constant 0 : i32
    %c0_i32_0 = arith.constant 0 : i32
    %c0_i32_1 = arith.constant 0 : i32
    return %c0_i32, %c0_i32_0 : i32, i32
  }
  func.func @transform_10(%arg0: i32) -> (i32, i32) {
    %c0_i32 = arith.constant 0 : i32
    %c0_i32_0 = arith.constant 0 : i32
    %c0_i32_1 = arith.constant 0 : i32
    return %c0_i32, %c0_i32_0 : i32, i32
  }
  func.func @transform_11(%arg0: i32) -> (i32, i32) {
    %c0_i32 = arith.constant 0 : i32
    %c0_i32_0 = arith.constant 0 : i32
    %c0_i32_1 = arith.constant 0 : i32
    return %c0_i32, %c0_i32_0 : i32, i32
  }
  func.func @transform_12(%arg0: i32) -> (i32, i32) {
    %c0_i32 = arith.constant 0 : i32
    %c0_i32_0 = arith.constant 0 : i32
    %c0_i32_1 = arith.constant 0 : i32
    return %c0_i32, %c0_i32_0 : i32, i32
  }
  func.func @transform_13(%arg0: i32) -> (i32, i32, i32) {
    %c0_i32 = arith.constant 0 : i32
    %c0_i32_0 = arith.constant 0 : i32
    %c0_i32_1 = arith.constant 0 : i32
    return %arg0, %c0_i32, %c0_i32_0 : i32, i32, i32
  }
}

</mosaic_0001>

<llo_original>
// kernel: decoder_block_pallas.1
$region0: #{decoder_block_pallas.1}
  #allocation0 [shape = 'u32[]', space=smem, size = 0x4, offset = 0x4, fixed_abs, tag = 'smem constant byte address 0x4 - core index']
  #allocation1 [shape = 'u32[144,128]{1,0:T(1,128)}', space=vmem, size = 0x12000, scoped, tag = 'internal scratch']
  %s0 = inlined_call_operand.hbm [shape: f32[4,8,32], index: 0, kind: input, shape index: {}]
  %s1 = inlined_call_operand.hbm [shape: f32[4,8,32], index: 1, kind: input, shape index: {}]
  %s2 = inlined_call_operand.hbm [shape: f32[4,8,32], index: 2, kind: input, shape index: {}]
  %s3 = inlined_call_operand.hbm [shape: s8[4,8,8], index: 3, kind: input, shape index: {}]
  %s4 = inlined_call_operand.hbm [shape: s8[4,8,8], index: 4, kind: input, shape index: {}]
  %s5 = inlined_call_operand.vmem [shape: bf16[3,32,32], index: 5, kind: input, shape index: {}]
  %s6 = inlined_call_operand.hbm [shape: bf16[4,8,32], index: 6, kind: input, shape index: {}]
  %s7 = inlined_call_operand.vmem [shape: bf16[3,32,32], index: 7, kind: input, shape index: {}]
  %s8 = inlined_call_operand.hbm [shape: bf16[4,8,32], index: 8, kind: input, shape index: {}]
  %s9 = inlined_call_operand.hbm [shape: bf16[32,128], index: 9, kind: input, shape index: {}]
  %s10 = inlined_call_operand.vmem [shape: f32[1,128], index: 10, kind: input, shape index: {}]
  %s11 = inlined_call_operand.vmem [shape: bf16[128,32], index: 11, kind: input, shape index: {}]
  %s12 = inlined_call_operand.hbm [shape: f32[9,32], index: 12, kind: input, shape index: {}]
  %s13 = inlined_call_operand.hbm [shape: f32[4,8,32], index: 13, kind: output, shape index: {}]
  %s14 = sld [smem:[#allocation0]]
  $region121: #{decoder_block_pallas.1} parent=0
    _
  %s16 = ssub.s32 1, %s14
  %s17 = scalar_select 0, %s16, %s14
  $region1: #{decoder_block_pallas.1} parent=0
    #allocation2 [shape = 'u8[16384]{0}', space=vmem, size = 0x4000, scoped, tag = 'input window, operand 0']
    #allocation3 [shape = 's32[2]{0}', space=sflag, size = 0x8, scoped, tag = 'scoped memory for decoder_block_pallas.1']
    #allocation4 [shape = 's32[2]{0}', space=sflag, size = 0x8, scoped, tag = 'scoped memory for decoder_block_pallas.1']
    #allocation5 [shape = 'u8[16384]{0}', space=vmem, size = 0x4000, scoped, tag = 'input window, operand 1']
    #allocation6 [shape = 's32[2]{0}', space=sflag, size = 0x8, scoped, tag = 'scoped memory for decoder_block_pallas.1']
    #allocation7 [shape = 'u8[16384]{0}', space=vmem, size = 0x4000, scoped, tag = 'input window, operand 2']
    #allocation8 [shape = 'u8[4096]{0}', space=vmem, size = 0x1000, scoped, tag = 'input window, operand 3']
    #allocation9 [shape = 's32[2]{0}', space=sflag, size = 0x8, scoped, tag = 'scoped memory for decoder_block_pallas.1']
    #allocation10 [shape = 'u8[4096]{0}', space=vmem, size = 0x1000, scoped, tag = 'input window, operand 4']
    #allocation11 [shape = 'u8[8192]{0}', space=vmem, size = 0x2000, scoped, tag = 'input window, operand 6, single buffered']
    #allocation12 [shape = 's32[1]{0}', space=sflag, size = 0x4, scoped, tag = 'scoped memory for decoder_block_pallas.1']
    #allocation13 [shape = 'u8[8192]{0}', space=vmem, size = 0x2000, scoped, tag = 'input window, operand 8, single buffered']
    #allocation14 [shape = 'u8[8192]{0}', space=vmem, size = 0x2000, scoped, tag = 'input window, operand 9, single buffered']
    #allocation15 [shape = 's32[1]{0}', space=sflag, size = 0x4, scoped, tag = 'scoped memory for decoder_block_pallas.1']
    #allocation16 [shape = 'u8[8192]{0}', space=vmem, size = 0x2000, scoped, tag = 'input window, operand 12, single buffered']
    #allocation17 [shape = 'u8[16384]{0}', space=vmem, size = 0x4000, scoped, tag = 'output window, operand 0']
    %18 = vsyncpa [#allocation3], 0
    %s19 = scalar_lea.sflag [#allocation3], 1
    %20 = vsyncpa %s19, 0
    %21 = vsyncpa [#allocation6], 0
    %s22 = scalar_lea.sflag [#allocation6], 1
    %23 = vsyncpa %s22, 0
    %24 = vsyncpa [#allocation9], 0
    %s25 = scalar_lea.sflag [#allocation9], 1
    %26 = vsyncpa %s25, 0
    %27 = vsyncpa [#allocation12], 0
    %28 = vsyncpa [#allocation15], 0
    %29 = vsyncpa [#allocation4], 0
    %s30 = scalar_lea.sflag [#allocation4], 1
    %31 = vsyncpa %s30, 0
    loop: start=0, step=1, limit=4
    $region2: #{decoder_block_pallas.1} parent=1 // loop_pre_header
      _
    $region3: #{decoder_block_pallas.1} parent=1 // loop_header
      %s33 = sphi 0, %s37
      %p34 = scmp.ge.s32.totalorder %s33, 4
      %s43 = sphi 0, %s45
      %s46 = sphi 0, %s43
      %s47 = sphi 0, %s46
      %s63 = sphi 0, %s47
      %s69 = sphi 0, %s71
      %s72 = sphi 0, %s69
      %s73 = sphi 0, %s72
      %s89 = sphi 0, %s73
      %s95 = sphi 0, %s97
      %s98 = sphi 0, %s95
      %s99 = sphi 0, %s98
      %s115 = sphi 0, %s99
      %s121 = sphi 0, %s123
      %s124 = sphi 0, %s121
      %s125 = sphi 0, %s124
      %s141 = sphi 0, %s125
      %s147 = sphi 0, %s149
      %s150 = sphi 0, %s147
      %s151 = sphi 0, %s150
      %s167 = sphi 0, %s151
      %s171 = sphi 0, %s171
      %s173 = sphi 0, %s171
      %s174 = sphi 0, %s173
      %s188 = sphi 0, %s174
      %s192 = sphi 0, %s192
      %s194 = sphi 0, %s192
      %s195 = sphi 0, %s194
      %s209 = sphi 0, %s195
      %s213 = sphi 0, %s213
      %s215 = sphi 0, %s213
      %s216 = sphi 0, %s215
      %s230 = sphi 0, %s216
      %s234 = sphi 0, %s234
      %s236 = sphi 0, %s234
      %s237 = sphi 0, %s236
      %s251 = sphi 0, %s237
      %s255 = sphi 0, %s255
      %s257 = sphi 0, %s255
      %s258 = sphi 0, %s257
      %s272 = sphi 0, %s258
      %s276 = sphi 0, %s276
      %s278 = sphi 0, %s276
      %s279 = sphi 0, %s278
      %s293 = sphi 0, %s279
      %s297 = sphi 0, %s297
      %s299 = sphi 0, %s297
      %s300 = sphi 0, %s299
      %s314 = sphi 0, %s300
      %s318 = sphi 0, %s318
      %s320 = sphi 0, %s318
      %s321 = sphi 0, %s320
      %s335 = sphi 0, %s321
      %s341 = sphi 0, %s343
      %s344 = sphi 0, %s341
      %s345 = sphi 0, %s344
      %s361 = sphi 0, %s345
    $region4: #{decoder_block_pallas.1} parent=1 // loop_header_branch
      %36 = sbr.rel (%p34) target = $region8
    $region5: #{decoder_block_pallas.1} parent=1 // loop_body
      %s38 = ssub.s32 %s33, 1
      %s39 = ssub.s32 %s33, 2
      %s40 = sadd.s32 %s33, 1
      %s41 = ssub.s32 %s33, %s40
      %p42 = scmp.eq.s32.totalorder %s41, 0
      %s44 = sadd.s32 %s43, 1
      %s45 = scalar_select %p42, %s43, %s44
      %p48 = pneg %p42
      %p49 = scmp.eq.s32.totalorder %s33, 1
      %p50 = por %p48, %p49
      %p51 = scmp.ne.s32.totalorder %s43, %s46
      %p52 = scmp.eq.s32.totalorder %s33, 0
      %p53 = por %p51, %p52
      %p54 = scmp.ne.s32.totalorder %s43, %s46
      %p55 = scmp.eq.s32.totalorder %s38, 1
      %p56 = por %p54, %p55
      %p57 = scmp.ne.s32.totalorder %s46, %s47
      %p58 = scmp.eq.s32.totalorder %s38, 0
      %p59 = por %p57, %p58
      %p60 = scmp.ne.s32.totalorder %s46, %s47
      %p61 = scmp.eq.s32.totalorder %s39, 1
      %p62 = por %p60, %p61
      %p64 = scmp.ne.s32.totalorder %s47, %s63
      %p65 = scmp.eq.s32.totalorder %s39, 0
      %p66 = por %p64, %p65
      %s67 = ssub.s32 %s33, %s40
      %p68 = scmp.eq.s32.totalorder %s67, 0
      %s70 = sadd.s32 %s69, 1
      %s71 = scalar_select %p68, %s69, %s70
      %p74 = pneg %p68
      %p75 = scmp.eq.s32.totalorder %s33, 1
      %p76 = por %p74, %p75
      %p77 = scmp.ne.s32.totalorder %s69, %s72
      %p78 = scmp.eq.s32.totalorder %s33, 0
      %p79 = por %p77, %p78
      %p80 = scmp.ne.s32.totalorder %s69, %s72
      %p81 = scmp.eq.s32.totalorder %s38, 1
      %p82 = por %p80, %p81
      %p83 = scmp.ne.s32.totalorder %s72, %s73
      %p84 = scmp.eq.s32.totalorder %s38, 0
      %p85 = por %p83, %p84
      %p86 = scmp.ne.s32.totalorder %s72, %s73
      %p87 = scmp.eq.s32.totalorder %s39, 1
      %p88 = por %p86, %p87
      %p90 = scmp.ne.s32.totalorder %s73, %s89
      %p91 = scmp.eq.s32.totalorder %s39, 0
      %p92 = por %p90, %p91
      %s93 = ssub.s32 %s33, %s40
      %p94 = scmp.eq.s32.totalorder %s93, 0
      %s96 = sadd.s32 %s95, 1
      %s97 = scalar_select %p94, %s95, %s96
      %p100 = pneg %p94
      %p101 = scmp.eq.s32.totalorder %s33, 1
      %p102 = por %p100, %p101
      %p103 = scmp.ne.s32.totalorder %s95, %s98
      %p104 = scmp.eq.s32.totalorder %s33, 0
      %p105 = por %p103, %p104
      %p106 = scmp.ne.s32.totalorder %s95, %s98
      %p107 = scmp.eq.s32.totalorder %s38, 1
      %p108 = por %p106, %p107
      %p109 = scmp.ne.s32.totalorder %s98, %s99
      %p110 = scmp.eq.s32.totalorder %s38, 0
      %p111 = por %p109, %p110
      %p112 = scmp.ne.s32.totalorder %s98, %s99
      %p113 = scmp.eq.s32.totalorder %s39, 1
      %p114 = por %p112, %p113
      %p116 = scmp.ne.s32.totalorder %s99, %s115
      %p117 = scmp.eq.s32.totalorder %s39, 0
      %p118 = por %p116, %p117
      %s119 = ssub.s32 %s33, %s40
      %p120 = scmp.eq.s32.totalorder %s119, 0
      %s122 = sadd.s32 %s121, 1
      %s123 = scalar_select %p120, %s121, %s122
      %p126 = pneg %p120
      %p127 = scmp.eq.s32.totalorder %s33, 1
      %p128 = por %p126, %p127
      %p129 = scmp.ne.s32.totalorder %s121, %s124
      %p130 = scmp.eq.s32.totalorder %s33, 0
      %p131 = por %p129, %p130
      %p132 = scmp.ne.s32.totalorder %s121, %s124
      %p133 = scmp.eq.s32.totalorder %s38, 1
      %p134 = por %p132, %p133
      %p135 = scmp.ne.s32.totalorder %s124, %s125
      %p136 = scmp.eq.s32.totalorder %s38, 0
      %p137 = por %p135, %p136
      %p138 = scmp.ne.s32.totalorder %s124, %s125
      %p139 = scmp.eq.s32.totalorder %s39, 1
      %p140 = por %p138, %p139
      %p142 = scmp.ne.s32.totalorder %s125, %s141
      %p143 = scmp.eq.s32.totalorder %s39, 0
      %p144 = por %p142, %p143
      %s145 = ssub.s32 %s33, %s40
      %p146 = scmp.eq.s32.totalorder %s145, 0
      %s148 = sadd.s32 %s147, 1
      %s149 = scalar_select %p146, %s147, %s148
      %p152 = pneg %p146
      %p153 = scmp.eq.s32.totalorder %s33, 1
      %p154 = por %p152, %p153
      %p155 = scmp.ne.s32.totalorder %s147, %s150
      %p156 = scmp.eq.s32.totalorder %s33, 0
      %p157 = por %p155, %p156
      %p158 = scmp.ne.s32.totalorder %s147, %s150
      %p159 = scmp.eq.s32.totalorder %s38, 1
      %p160 = por %p158, %p159
      %p161 = scmp.ne.s32.totalorder %s150, %s151
      %p162 = scmp.eq.s32.totalorder %s38, 0
      %p163 = por %p161, %p162
      %p164 = scmp.ne.s32.totalorder %s150, %s151
      %p165 = scmp.eq.s32.totalorder %s39, 1
      %p166 = por %p164, %p165
      %p168 = scmp.ne.s32.totalorder %s151, %s167
      %p169 = scmp.eq.s32.totalorder %s39, 0
      %p170 = por %p168, %p169
      %s172 = sadd.s32 %s171, 1
      %p175 = scmp.eq.s32.totalorder %s33, 1
      %p176 = scmp.ne.s32.totalorder %s171, %s173
      %p177 = scmp.eq.s32.totalorder %s33, 0
      %p178 = por %p176, %p177
      %p179 = scmp.ne.s32.totalorder %s171, %s173
      %p180 = scmp.eq.s32.totalorder %s38, 1
      %p181 = por %p179, %p180
      %p182 = scmp.ne.s32.totalorder %s173, %s174
      %p183 = scmp.eq.s32.totalorder %s38, 0
      %p184 = por %p182, %p183
      %p185 = scmp.ne.s32.totalorder %s173, %s174
      %p186 = scmp.eq.s32.totalorder %s39, 1
      %p187 = por %p185, %p186
      %p189 = scmp.ne.s32.totalorder %s174, %s188
      %p190 = scmp.eq.s32.totalorder %s39, 0
      %p191 = por %p189, %p190
      %s193 = sadd.s32 %s192, 1
      %p196 = scmp.eq.s32.totalorder %s33, 1
      %p197 = scmp.ne.s32.totalorder %s192, %s194
      %p198 = scmp.eq.s32.totalorder %s33, 0
      %p199 = por %p197, %p198
      %p200 = scmp.ne.s32.totalorder %s192, %s194
      %p201 = scmp.eq.s32.totalorder %s38, 1
      %p202 = por %p200, %p201
      %p203 = scmp.ne.s32.totalorder %s194, %s195
      %p204 = scmp.eq.s32.totalorder %s38, 0
      %p205 = por %p203, %p204
      %p206 = scmp.ne.s32.totalorder %s194, %s195
      %p207 = scmp.eq.s32.totalorder %s39, 1
      %p208 = por %p206, %p207
      %p210 = scmp.ne.s32.totalorder %s195, %s209
      %p211 = scmp.eq.s32.totalorder %s39, 0
      %p212 = por %p210, %p211
      %s214 = sadd.s32 %s213, 1
      %p217 = scmp.eq.s32.totalorder %s33, 1
      %p218 = scmp.ne.s32.totalorder %s213, %s215
      %p219 = scmp.eq.s32.totalorder %s33, 0
      %p220 = por %p218, %p219
      %p221 = scmp.ne.s32.totalorder %s213, %s215
      %p222 = scmp.eq.s32.totalorder %s38, 1
      %p223 = por %p221, %p222
      %p224 = scmp.ne.s32.totalorder %s215, %s216
      %p225 = scmp.eq.s32.totalorder %s38, 0
      %p226 = por %p224, %p225
      %p227 = scmp.ne.s32.totalorder %s215, %s216
      %p228 = scmp.eq.s32.totalorder %s39, 1
      %p229 = por %p227, %p228
      %p231 = scmp.ne.s32.totalorder %s216, %s230
      %p232 = scmp.eq.s32.totalorder %s39, 0
      %p233 = por %p231, %p232
      %s235 = sadd.s32 %s234, 1
      %p238 = scmp.eq.s32.totalorder %s33, 1
      %p239 = scmp.ne.s32.totalorder %s234, %s236
      %p240 = scmp.eq.s32.totalorder %s33, 0
      %p241 = por %p239, %p240
      %p242 = scmp.ne.s32.totalorder %s234, %s236
      %p243 = scmp.eq.s32.totalorder %s38, 1
      %p244 = por %p242, %p243
      %p245 = scmp.ne.s32.totalorder %s236, %s237
      %p246 = scmp.eq.s32.totalorder %s38, 0
      %p247 = por %p245, %p246
      %p248 = scmp.ne.s32.totalorder %s236, %s237
      %p249 = scmp.eq.s32.totalorder %s39, 1
      %p250 = por %p248, %p249
      %p252 = scmp.ne.s32.totalorder %s237, %s251
      %p253 = scmp.eq.s32.totalorder %s39, 0
      %p254 = por %p252, %p253
      %s256 = sadd.s32 %s255, 1
      %p259 = scmp.eq.s32.totalorder %s33, 1
      %p260 = scmp.ne.s32.totalorder %s255, %s257
      %p261 = scmp.eq.s32.totalorder %s33, 0
      %p262 = por %p260, %p261
      %p263 = scmp.ne.s32.totalorder %s255, %s257
      %p264 = scmp.eq.s32.totalorder %s38, 1
      %p265 = por %p263, %p264
      %p266 = scmp.ne.s32.totalorder %s257, %s258
      %p267 = scmp.eq.s32.totalorder %s38, 0
      %p268 = por %p266, %p267
      %p269 = scmp.ne.s32.totalorder %s257, %s258
      %p270 = scmp.eq.s32.totalorder %s39, 1
      %p271 = por %p269, %p270
      %p273 = scmp.ne.s32.totalorder %s258, %s272
      %p274 = scmp.eq.s32.totalorder %s39, 0
      %p275 = por %p273, %p274
      %s277 = sadd.s32 %s276, 1
      %p280 = scmp.eq.s32.totalorder %s33, 1
      %p281 = scmp.ne.s32.totalorder %s276, %s278
      %p282 = scmp.eq.s32.totalorder %s33, 0
      %p283 = por %p281, %p282
      %p284 = scmp.ne.s32.totalorder %s276, %s278
      %p285 = scmp.eq.s32.totalorder %s38, 1
      %p286 = por %p284, %p285
      %p287 = scmp.ne.s32.totalorder %s278, %s279
      %p288 = scmp.eq.s32.totalorder %s38, 0
      %p289 = por %p287, %p288
      %p290 = scmp.ne.s32.totalorder %s278, %s279
      %p291 = scmp.eq.s32.totalorder %s39, 1
      %p292 = por %p290, %p291
      %p294 = scmp.ne.s32.totalorder %s279, %s293
      %p295 = scmp.eq.s32.totalorder %s39, 0
      %p296 = por %p294, %p295
      %s298 = sadd.s32 %s297, 1
      %p301 = scmp.eq.s32.totalorder %s33, 1
      %p302 = scmp.ne.s32.totalorder %s297, %s299
      %p303 = scmp.eq.s32.totalorder %s33, 0
      %p304 = por %p302, %p303
      %p305 = scmp.ne.s32.totalorder %s297, %s299
      %p306 = scmp.eq.s32.totalorder %s38, 1
      %p307 = por %p305, %p306
      %p308 = scmp.ne.s32.totalorder %s299, %s300
      %p309 = scmp.eq.s32.totalorder %s38, 0
      %p310 = por %p308, %p309
      %p311 = scmp.ne.s32.totalorder %s299, %s300
      %p312 = scmp.eq.s32.totalorder %s39, 1
      %p313 = por %p311, %p312
      %p315 = scmp.ne.s32.totalorder %s300, %s314
      %p316 = scmp.eq.s32.totalorder %s39, 0
      %p317 = por %p315, %p316
      %s319 = sadd.s32 %s318, 1
      %p322 = scmp.eq.s32.totalorder %s33, 1
      %p323 = scmp.ne.s32.totalorder %s318, %s320
      %p324 = scmp.eq.s32.totalorder %s33, 0
      %p325 = por %p323, %p324
      %p326 = scmp.ne.s32.totalorder %s318, %s320
      %p327 = scmp.eq.s32.totalorder %s38, 1
      %p328 = por %p326, %p327
      %p329 = scmp.ne.s32.totalorder %s320, %s321
      %p330 = scmp.eq.s32.totalorder %s38, 0
      %p331 = por %p329, %p330
      %p332 = scmp.ne.s32.totalorder %s320, %s321
      %p333 = scmp.eq.s32.totalorder %s39, 1
      %p334 = por %p332, %p333
      %p336 = scmp.ne.s32.totalorder %s321, %s335
      %p337 = scmp.eq.s32.totalorder %s39, 0
      %p338 = por %p336, %p337
      %s339 = ssub.s32 %s33, %s40
      %p340 = scmp.eq.s32.totalorder %s339, 0
      %s342 = sadd.s32 %s341, 1
      %s343 = scalar_select %p340, %s341, %s342
      %p346 = pneg %p340
      %p347 = scmp.eq.s32.totalorder %s33, 1
      %p348 = por %p346, %p347
      %p349 = scmp.ne.s32.totalorder %s341, %s344
      %p350 = scmp.eq.s32.totalorder %s33, 0
      %p351 = por %p349, %p350
      %p352 = scmp.ne.s32.totalorder %s341, %s344
      %p353 = scmp.eq.s32.totalorder %s38, 1
      %p354 = por %p352, %p353
      %p355 = scmp.ne.s32.totalorder %s344, %s345
      %p356 = scmp.eq.s32.totalorder %s38, 0
      %p357 = por %p355, %p356
      %p358 = scmp.ne.s32.totalorder %s344, %s345
      %p359 = scmp.eq.s32.totalorder %s39, 1
      %p360 = por %p358, %p359
      %p362 = scmp.ne.s32.totalorder %s345, %s361
      %p363 = scmp.eq.s32.totalorder %s39, 0
      %p364 = por %p362, %p363
      %p365 = scmp.le.s32.totalorder 1, %s33
      %p366 = scmp.lt.s32.totalorder %s33, 3
      %p367 = pnand %p365, %p366
      %p368 = pneg %p367
      // Predicated region
      $region9: #{decoder_block_pallas.1} parent=5 // pred_check
        _
      $region10: #{decoder_block_pallas.1} parent=5 // pred_check_branch
        %370 = sbr.rel (%p367) target = $region12
      $region11: #{decoder_block_pallas.1} parent=5 // pred_region
        %s371 = ssub.s32 %s33, 1
        // Predicated region
        $region13: #{decoder_block_pallas.1} parent=11 // pred_check
          %p372 = pneg %p184
        $region14: #{decoder_block_pallas.1} parent=11 // pred_check_branch
          %374 = sbr.rel (%p372) target = $region16
        $region15: #{decoder_block_pallas.1} parent=11 // pred_region
          _
        $region16: #{decoder_block_pallas.1} parent=11 // pred_fallthru
          _
        // Predicated region
        $region17: #{decoder_block_pallas.1} parent=11 // pred_check
          %p375 = pneg %p205
        $region18: #{decoder_block_pallas.1} parent=11 // pred_check_branch
          %377 = sbr.rel (%p375) target = $region20
        $region19: #{decoder_block_pallas.1} parent=11 // pred_region
          %s379 = ssub.s32 256, 256
          %380 = vsyncadd [#allocation12], %s379
          %s381 = sshll.u32 [#allocation11], 4
          %s382 = int_to_ptr.vmem [resolvable:$true] %s381
          %387 = dma.hbm_to_vmem [thread:$0]  %s6, 256, %s382, [#allocation12], 64, 64, 4
        $region20: #{decoder_block_pallas.1} parent=11 // pred_fallthru
          _
        // Predicated region
        $region21: #{decoder_block_pallas.1} parent=11 // pred_check
          %p388 = pneg %p226
        $region22: #{decoder_block_pallas.1} parent=11 // pred_check_branch
          %390 = sbr.rel (%p388) target = $region24
        $region23: #{decoder_block_pallas.1} parent=11 // pred_region
          _
        $region24: #{decoder_block_pallas.1} parent=11 // pred_fallthru
          _
        // Predicated region
        $region25: #{decoder_block_pallas.1} parent=11 // pred_check
          %p391 = pneg %p247
        $region26: #{decoder_block_pallas.1} parent=11 // pred_check_branch
          %393 = sbr.rel (%p391) target = $region28
        $region27: #{decoder_block_pallas.1} parent=11 // pred_region
          %s395 = ssub.s32 256, 256
          %396 = vsyncadd [#allocation12], %s395
          %s397 = sshll.u32 [#allocation13], 4
          %s398 = int_to_ptr.vmem [resolvable:$true] %s397
          %403 = dma.hbm_to_vmem [thread:$0]  %s8, 256, %s398, [#allocation12], 64, 64, 4
        $region28: #{decoder_block_pallas.1} parent=11 // pred_fallthru
          _
        // Predicated region
        $region29: #{decoder_block_pallas.1} parent=11 // pred_check
          %p404 = pneg %p268
        $region30: #{decoder_block_pallas.1} parent=11 // pred_check_branch
          %406 = sbr.rel (%p404) target = $region32
        $region31: #{decoder_block_pallas.1} parent=11 // pred_region
          %s408 = ssub.s32 256, 256
          %409 = vsyncadd [#allocation15], %s408
          %s410 = sshll.u32 [#allocation14], 4
          %s411 = int_to_ptr.vmem [resolvable:$true] %s410
          %416 = dma.hbm_to_vmem [thread:$0]  %s9, 256, %s411, [#allocation15], 64, 64, 4
        $region32: #{decoder_block_pallas.1} parent=11 // pred_fallthru
          _
        // Predicated region
        $region33: #{decoder_block_pallas.1} parent=11 // pred_check
          %p417 = pneg %p289
        $region34: #{decoder_block_pallas.1} parent=11 // pred_check_branch
          %419 = sbr.rel (%p417) target = $region36
        $region35: #{decoder_block_pallas.1} parent=11 // pred_region
          _
        $region36: #{decoder_block_pallas.1} parent=11 // pred_fallthru
          _
        // Predicated region
        $region37: #{decoder_block_pallas.1} parent=11 // pred_check
          %p420 = pneg %p310
        $region38: #{decoder_block_pallas.1} parent=11 // pred_check_branch
          %422 = sbr.rel (%p420) target = $region40
        $region39: #{decoder_block_pallas.1} parent=11 // pred_region
          _
        $region40: #{decoder_block_pallas.1} parent=11 // pred_fallthru
          _
        // Predicated region
        $region41: #{decoder_block_pallas.1} parent=11 // pred_check
          %p423 = pneg %p331
        $region42: #{decoder_block_pallas.1} parent=11 // pred_check_branch
          %425 = sbr.rel (%p423) target = $region44
        $region43: #{decoder_block_pallas.1} parent=11 // pred_region
          %s427 = ssub.s32 256, 256
          %428 = vsyncadd [#allocation15], %s427
          %s429 = sshll.u32 [#allocation16], 4
          %s430 = int_to_ptr.vmem [resolvable:$true] %s429
          %435 = dma.hbm_to_vmem [thread:$0]  %s12, 256, %s430, [#allocation15], 128, 128, 8
        $region44: #{decoder_block_pallas.1} parent=11 // pred_fallthru
          _
      $region12: #{decoder_block_pallas.1} parent=5 // pred_fallthru
        _
      %p436 = scmp.lt.s32.totalorder %s33, 2
      // Predicated region
      $region45: #{decoder_block_pallas.1} parent=5 // pred_check
        %p437 = pneg %p436
      $region46: #{decoder_block_pallas.1} parent=5 // pred_check_branch
        %439 = sbr.rel (%p437) target = $region48
      $region47: #{decoder_block_pallas.1} parent=5 // pred_region
        // Predicated region
        $region49: #{decoder_block_pallas.1} parent=47 // pred_check
          %p440 = pneg %p53
        $region50: #{decoder_block_pallas.1} parent=47 // pred_check_branch
          %442 = sbr.rel (%p440) target = $region52
        $region51: #{decoder_block_pallas.1} parent=47 // pred_region
          %s443 = sand.u32 %s43, 1
          %s444 = scalar_lea.sflag [#allocation3], %s443
          %s445 = sand.u32 %s43, 1
          %s446 = smul.addr %s445, 16
          %s447 = scalar_lea.vmem [#allocation2], %s446
          %s448 = smul.u32 2, %s33
          %s450 = ssub.s32 256, 256
          %451 = vsyncadd %s444, %s450
          %s452 = smul.addr %s448, 128
          %s453 = scalar_lea.hbm %s0, %s452
          %s454 = sshll.u32 %s447, 4
          %s455 = int_to_ptr.vmem [resolvable:$true] %s454
          %460 = dma.hbm_to_vmem [thread:$0]  %s453, 256, %s455, %s444, 128, 128, 8
        $region52: #{decoder_block_pallas.1} parent=47 // pred_fallthru
          _
        // Predicated region
        $region53: #{decoder_block_pallas.1} parent=47 // pred_check
          %p461 = pneg %p79
        $region54: #{decoder_block_pallas.1} parent=47 // pred_check_branch
          %463 = sbr.rel (%p461) target = $region56
        $region55: #{decoder_block_pallas.1} parent=47 // pred_region
          %s464 = sand.u32 %s33, 1
          %s465 = scalar_lea.sflag [#allocation6], %s464
          %s466 = sand.u32 %s69, 1
          %s467 = smul.addr %s466, 16
          %s468 = scalar_lea.vmem [#allocation5], %s467
          %s469 = smul.u32 2, %s33
          %s471 = ssub.s32 256, 256
          %472 = vsyncadd %s465, %s471
          %s473 = smul.addr %s469, 128
          %s474 = scalar_lea.hbm %s1, %s473
          %s475 = sshll.u32 %s468, 4
          %s476 = int_to_ptr.vmem [resolvable:$true] %s475
          %481 = dma.hbm_to_vmem [thread:$0]  %s474, 256, %s476, %s465, 128, 128, 8
        $region56: #{decoder_block_pallas.1} parent=47 // pred_fallthru
          _
        // Predicated region
        $region57: #{decoder_block_pallas.1} parent=47 // pred_check
          %p482 = pneg %p105
        $region58: #{decoder_block_pallas.1} parent=47 // pred_check_branch
          %484 = sbr.rel (%p482) target = $region60
        $region59: #{decoder_block_pallas.1} parent=47 // pred_region
          %s485 = sand.u32 %s33, 1
          %s486 = scalar_lea.sflag [#allocation6], %s485
          %s487 = sand.u32 %s95, 1
          %s488 = smul.addr %s487, 16
          %s489 = scalar_lea.vmem [#allocation7], %s488
          %s490 = smul.u32 2, %s33
          %s492 = ssub.s32 256, 256
          %493 = vsyncadd %s486, %s492
          %s494 = smul.addr %s490, 128
          %s495 = scalar_lea.hbm %s2, %s494
          %s496 = sshll.u32 %s489, 4
          %s497 = int_to_ptr.vmem [resolvable:$true] %s496
          %502 = dma.hbm_to_vmem [thread:$0]  %s495, 256, %s497, %s486, 128, 128, 8
        $region60: #{decoder_block_pallas.1} parent=47 // pred_fallthru
          _
        // Predicated region
        $region61: #{decoder_block_pallas.1} parent=47 // pred_check
          %p503 = pneg %p131
        $region62: #{decoder_block_pallas.1} parent=47 // pred_check_branch
          %505 = sbr.rel (%p503) target = $region64
        $region63: #{decoder_block_pallas.1} parent=47 // pred_region
          %s506 = sand.u32 %s33, 1
          %s507 = scalar_lea.sflag [#allocation9], %s506
          %s508 = sand.u32 %s121, 1
          %s509 = smul.addr %s508, 4
          %s510 = scalar_lea.vmem [#allocation8], %s509
          %s511 = smul.u32 2, %s33
          %s513 = ssub.s32 64, 64
          %514 = vsyncadd %s507, %s513
          %s515 = smul.addr %s511, 32
          %s516 = scalar_lea.hbm %s3, %s515
          %s517 = sshll.u32 %s510, 4
          %s518 = int_to_ptr.vmem [resolvable:$true] %s517
          %523 = dma.hbm_to_vmem [thread:$0]  %s516, 64, %s518, %s507, 32, 32, 2
        $region64: #{decoder_block_pallas.1} parent=47 // pred_fallthru
          _
        // Predicated region
        $region65: #{decoder_block_pallas.1} parent=47 // pred_check
          %p524 = pneg %p157
        $region66: #{decoder_block_pallas.1} parent=47 // pred_check_branch
          %526 = sbr.rel (%p524) target = $region68
        $region67: #{decoder_block_pallas.1} parent=47 // pred_region
          %s527 = sand.u32 %s33, 1
          %s528 = scalar_lea.sflag [#allocation9], %s527
          %s529 = sand.u32 %s147, 1
          %s530 = smul.addr %s529, 4
          %s531 = scalar_lea.vmem [#allocation10], %s530
          %s532 = smul.u32 2, %s33
          %s534 = ssub.s32 64, 64
          %535 = vsyncadd %s528, %s534
          %s536 = smul.addr %s532, 32
          %s537 = scalar_lea.hbm %s4, %s536
          %s538 = sshll.u32 %s531, 4
          %s539 = int_to_ptr.vmem [resolvable:$true] %s538
          %544 = dma.hbm_to_vmem [thread:$0]  %s537, 64, %s539, %s528, 32, 32, 2
        $region68: #{decoder_block_pallas.1} parent=47 // pred_fallthru
          _
      $region48: #{decoder_block_pallas.1} parent=5 // pred_fallthru
        _
      %p545 = scmp.le.s32.totalorder 1, %s33
      %p546 = scmp.lt.s32.totalorder %s33, 3
      %p547 = pnand %p545, %p546
      %p548 = pneg %p547
      // Predicated region
      $region69: #{decoder_block_pallas.1} parent=5 // pred_check
        _
      $region70: #{decoder_block_pallas.1} parent=5 // pred_check_branch
        %550 = sbr.rel (%p547) target = $region72
      $region71: #{decoder_block_pallas.1} parent=5 // pred_region
        %s551 = ssub.s32 %s33, 1
        %s552 = sand.u32 %s46, 1
        %s553 = scalar_lea.sflag [#allocation3], %s552
        %s554 = sand.u32 %s46, 1
        %s555 = smul.addr %s554, 16
        %s556 = scalar_lea.vmem [#allocation2], %s555
        // Predicated region
        $region73: #{decoder_block_pallas.1} parent=71 // pred_check
          %p557 = pneg %p59
        $region74: #{decoder_block_pallas.1} parent=71 // pred_check_branch
          %559 = sbr.rel (%p557) target = $region76
        $region75: #{decoder_block_pallas.1} parent=71 // pred_region
          %560 = dma.done %s553, 256
        $region76: #{decoder_block_pallas.1} parent=71 // pred_fallthru
          _
        %s561 = sand.u32 %s38, 1
        %s562 = scalar_lea.sflag [#allocation6], %s561
        %s563 = sand.u32 %s72, 1
        %s564 = smul.addr %s563, 16
        %s565 = scalar_lea.vmem [#allocation5], %s564
        // Predicated region
        $region77: #{decoder_block_pallas.1} parent=71 // pred_check
          %p566 = pneg %p85
        $region78: #{decoder_block_pallas.1} parent=71 // pred_check_branch
          %568 = sbr.rel (%p566) target = $region80
        $region79: #{decoder_block_pallas.1} parent=71 // pred_region
          %569 = dma.done %s562, 256
        $region80: #{decoder_block_pallas.1} parent=71 // pred_fallthru
          _
        %s570 = sand.u32 %s38, 1
        %s571 = scalar_lea.sflag [#allocation6], %s570
        %s572 = sand.u32 %s98, 1
        %s573 = smul.addr %s572, 16
        %s574 = scalar_lea.vmem [#allocation7], %s573
        // Predicated region
        $region81: #{decoder_block_pallas.1} parent=71 // pred_check
          %p575 = pneg %p111
        $region82: #{decoder_block_pallas.1} parent=71 // pred_check_branch
          %577 = sbr.rel (%p575) target = $region84
        $region83: #{decoder_block_pallas.1} parent=71 // pred_region
          %578 = dma.done %s571, 256
        $region84: #{decoder_block_pallas.1} parent=71 // pred_fallthru
          _
        %s579 = sand.u32 %s38, 1
        %s580 = scalar_lea.sflag [#allocation9], %s579
        %s581 = sand.u32 %s124, 1
        %s582 = smul.addr %s581, 4
        %s583 = scalar_lea.vmem [#allocation8], %s582
        // Predicated region
        $region85: #{decoder_block_pallas.1} parent=71 // pred_check
          %p584 = pneg %p137
        $region86: #{decoder_block_pallas.1} parent=71 // pred_check_branch
          %586 = sbr.rel (%p584) target = $region88
        $region87: #{decoder_block_pallas.1} parent=71 // pred_region
          %587 = dma.done %s580, 64
        $region88: #{decoder_block_pallas.1} parent=71 // pred_fallthru
          _
        %s588 = sand.u32 %s38, 1
        %s589 = scalar_lea.sflag [#allocation9], %s588
        %s590 = sand.u32 %s150, 1
        %s591 = smul.addr %s590, 4
        %s592 = scalar_lea.vmem [#allocation10], %s591
        // Predicated region
        $region89: #{decoder_block_pallas.1} parent=71 // pred_check
          %p593 = pneg %p163
        $region90: #{decoder_block_pallas.1} parent=71 // pred_check_branch
          %595 = sbr.rel (%p593) target = $region92
        $region91: #{decoder_block_pallas.1} parent=71 // pred_region
          %596 = dma.done %s589, 64
        $region92: #{decoder_block_pallas.1} parent=71 // pred_fallthru
          _
        // Predicated region
        $region93: #{decoder_block_pallas.1} parent=71 // pred_check
          %p597 = pneg %p205
        $region94: #{decoder_block_pallas.1} parent=71 // pred_check_branch
          %599 = sbr.rel (%p597) target = $region96
        $region95: #{decoder_block_pallas.1} parent=71 // pred_region
          %600 = dma.done [#allocation12], 256
        $region96: #{decoder_block_pallas.1} parent=71 // pred_fallthru
          _
        // Predicated region
        $region97: #{decoder_block_pallas.1} parent=71 // pred_check
          %p601 = pneg %p247
        $region98: #{decoder_block_pallas.1} parent=71 // pred_check_branch
          %603 = sbr.rel (%p601) target = $region100
        $region99: #{decoder_block_pallas.1} parent=71 // pred_region
          %604 = dma.done [#allocation12], 256
        $region100: #{decoder_block_pallas.1} parent=71 // pred_fallthru
          _
        // Predicated region
        $region101: #{decoder_block_pallas.1} parent=71 // pred_check
          %p605 = pneg %p268
        $region102: #{decoder_block_pallas.1} parent=71 // pred_check_branch
          %607 = sbr.rel (%p605) target = $region104
        $region103: #{decoder_block_pallas.1} parent=71 // pred_region
          %608 = dma.done [#allocation15], 256
        $region104: #{decoder_block_pallas.1} parent=71 // pred_fallthru
          _
        // Predicated region
        $region105: #{decoder_block_pallas.1} parent=71 // pred_check
          %p609 = pneg %p331
        $region106: #{decoder_block_pallas.1} parent=71 // pred_check_branch
          %611 = sbr.rel (%p609) target = $region108
        $region107: #{decoder_block_pallas.1} parent=71 // pred_region
          %612 = dma.done [#allocation15], 256
        $region108: #{decoder_block_pallas.1} parent=71 // pred_fallthru
          _
        %s613 = sand.u32 %s46, 1
        %s614 = scalar_lea.sflag [#allocation3], %s613
        %s615 = sand.u32 %s46, 1
        %s616 = smul.addr %s615, 16
        %s617 = scalar_lea.vmem [#allocation2], %s616
        %p618 = pneg %p59
        %p619 = pneg %p56
        %s620 = sand.u32 %s38, 1
        %s621 = scalar_lea.sflag [#allocation6], %s620
        %s622 = sand.u32 %s72, 1
        %s623 = smul.addr %s622, 16
        %s624 = scalar_lea.vmem [#allocation5], %s623
        %p625 = pneg %p85
        %p626 = pneg %p82
        %s627 = sand.u32 %s38, 1
        %s628 = scalar_lea.sflag [#allocation6], %s627
        %s629 = sand.u32 %s98, 1
        %s630 = smul.addr %s629, 16
        %s631 = scalar_lea.vmem [#allocation7], %s630
        %p632 = pneg %p111
        %p633 = pneg %p108
        %s634 = sand.u32 %s38, 1
        %s635 = scalar_lea.sflag [#allocation9], %s634
        %s636 = sand.u32 %s124, 1
        %s637 = smul.addr %s636, 4
        %s638 = scalar_lea.vmem [#allocation8], %s637
        %p639 = pneg %p137
        %p640 = pneg %p134
        %s641 = sand.u32 %s38, 1
        %s642 = scalar_lea.sflag [#allocation9], %s641
        %s643 = sand.u32 %s150, 1
        %s644 = smul.addr %s643, 4
        %s645 = scalar_lea.vmem [#allocation10], %s644
        %p646 = pneg %p163
        %p647 = pneg %p160
        %p648 = pneg %p184
        %p649 = pneg %p181
        %p650 = pneg %p205
        %p651 = pneg %p202
        %p652 = pneg %p226
        %p653 = pneg %p223
        %p654 = pneg %p247
        %p655 = pneg %p244
        %p656 = pneg %p268
        %p657 = pneg %p265
        %p658 = pneg %p289
        %p659 = pneg %p286
        %p660 = pneg %p310
        %p661 = pneg %p307
        %p662 = pneg %p331
        %p663 = pneg %p328
        %p664 = pneg %p357
        %p665 = pneg %p354
        %s666 = sand.u32 %s344, 1
        %s667 = scalar_lea.sflag [#allocation4], %s666
        %s668 = sand.u32 %s344, 1
        %s669 = smul.addr %s668, 16
        %s670 = scalar_lea.vmem [#allocation17], %s669
        %s671 = smul.u32 2, %s38
        %s672 = smul.u32 2, %s38
        %s673 = smul.u32 2, %s38
        %s674 = smul.u32 2, %s38
        %s675 = smul.u32 2, %s38
        %s676 = smul.u32 2, %s38
        %v678 = vld [vmem:[%s556] sm:$0xff]
        %v679 = vld [vmem:[%s556 + $0x8] sm:$0xff]
        %v680 = vld [vmem:[%s565] sm:$0xff]
        %v681 = vld [vmem:[%s565 + $0x8] sm:$0xff]
        %v682 = vld [vmem:[%s574] sm:$0xff]
        %v683 = vld [vmem:[%s574 + $0x8] sm:$0xff]
        %v684 = vld [vmem:[%s583] sm:$0x3]
        %v685 = vld [vmem:[%s583 + $0x2] sm:$0x3]
        %v686 = vunpack.c.0.s8 %v684
        %v687 = vunpack.c.0.s8 %v685
        %v688 = vcvt.s32.f32 %v686
        %v689 = vcvt.s32.f32 %v687
        %v690 = vld [vmem:[%s592] sm:$0x3]
        %v691 = vld [vmem:[%s592 + $0x2] sm:$0x3]
        %v692 = vunpack.c.0.s8 %v690
        %v693 = vunpack.c.0.s8 %v691
        %v694 = vcvt.s32.f32 %v692
        %v695 = vcvt.s32.f32 %v693
        %v696 = vld [vmem:[#allocation16] sm:$0xff]
        %v697 = vld [vmem:[#allocation16 + $0x8] sm:$0x1]
        %v698 = vpack.c.bf16 %v679, %v678
        %v699 = vld [vmem:[%s5] sm:$0xf]
        %v700 = vld [vmem:[%s5 + $0x4] sm:$0xf]
        %v701 = vld [vmem:[%s5 + $0x8] sm:$0xf]
        %v702 = vld [vmem:[%s5 + $0xc] sm:$0xf]
        %v707 = vunpack.c.l.b16 %v699
        %v708 = vunpack.c.l.b16 %v700
        %v709 = vunpack.c.l.b16 %v701
        %v710 = vunpack.c.l.b16 %v702
        %v711 = vpack.c.b16 %v708, %v707
        %v712 = vpack.c.b16 %v710, %v709
        %vm715 = vcmask 261120
        %v717 = vsel %vm715, %v698, 0
        %719 = vmatprep.subr.bf16.mxu0 0
        %720 = vmatpush1.bf16.msra.mxu0 %v711
        %721 = vmatprep.subr.bf16.mxu0 0
        %722 = vmatpush1.bf16.msra.mxu0 %v712
        %723 = vmatprep.subr.bf16.mxu0 0
        %724 = vmatpush1.bf16.msra.mxu0 0
        %725 = vmatprep.subr.bf16.mxu0 0
        %726 = vmatpush1.bf16.msra.mxu0 0
        %727 = vmatprep.subr.bf16.mxu0 0
        %728 = vmatpush1.bf16.msra.mxu0 0
        %729 = vmatprep.subr.bf16.mxu0 0
        %730 = vmatpush1.bf16.msra.mxu0 0
        %731 = vmatprep.subr.bf16.mxu0 0
        %732 = vmatpush1.bf16.msra.mxu0 0
        %733 = vmatprep.subr.bf16.mxu0 0
        %734 = vmatpush1.bf16.msra.mxu0 0
        %735 = vmatprep.subr.bf16.mxu0 0
        %736 = vmatpush1.bf16.msra.mxu0 0
        %737 = vmatprep.subr.bf16.mxu0 0
        %738 = vmatpush1.bf16.msra.mxu0 0
        %739 = vmatprep.subr.bf16.mxu0 0
        %740 = vmatpush1.bf16.msra.mxu0 0
        %741 = vmatprep.subr.bf16.mxu0 0
        %742 = vmatpush1.bf16.msra.mxu0 0
        %743 = vmatprep.subr.bf16.mxu0 0
        %744 = vmatpush1.bf16.msra.mxu0 0
        %745 = vmatprep.subr.bf16.mxu0 0
        %746 = vmatpush1.bf16.msra.mxu0 0
        %747 = vmatprep.subr.bf16.mxu0 0
        %748 = vmatpush1.bf16.msra.mxu0 0
        %749 = vmatprep.subr.bf16.mxu0 0
        %750 = vmatpush1.bf16.msra.mxu0 0
        %751 = vmatprep.mubr.bf16.mxu0 0
        %752 = vmatmul.mubr.bf16.gmra.mrb[0].mxu0 %v717
        %v753 = vpop.f32.mrb[0].mxu0
        %v754 = vadd.f32 0.0, %v753
        %v755 = vpop.f32.mrb[0].mxu0
        %v756 = vpop.f32.mrb[0].mxu0
        %v757 = vadd.f32 0.0, %v756
        %v758 = vpop.f32.mrb[0].mxu0
        %759 = vdwg.mxu0
        %s760 = scalar_lea.vmem %s5, 16
        %v761 = vld [vmem:[%s760] sm:$0xf]
        %v762 = vld [vmem:[%s760 + $0x4] sm:$0xf]
        %v763 = vld [vmem:[%s760 + $0x8] sm:$0xf]
        %v764 = vld [vmem:[%s760 + $0xc] sm:$0xf]
        %v769 = vunpack.c.l.b16 %v761
        %v770 = vunpack.c.l.b16 %v762
        %v771 = vunpack.c.l.b16 %v763
        %v772 = vunpack.c.l.b16 %v764
        %v773 = vpack.c.b16 %v770, %v769
        %v774 = vpack.c.b16 %v772, %v771
        %777 = vmatprep.subr.bf16.mxu0 0
        %778 = vmatpush1.bf16.msra.mxu0 %v773
        %779 = vmatprep.subr.bf16.mxu0 0
        %780 = vmatpush1.bf16.msra.mxu0 %v774
        %781 = vmatprep.subr.bf16.mxu0 0
        %782 = vmatpush1.bf16.msra.mxu0 0
        %783 = vmatprep.subr.bf16.mxu0 0
        %784 = vmatpush1.bf16.msra.mxu0 0
        %785 = vmatprep.subr.bf16.mxu0 0
        %786 = vmatpush1.bf16.msra.mxu0 0
        %787 = vmatprep.subr.bf16.mxu0 0
        %788 = vmatpush1.bf16.msra.mxu0 0
        %789 = vmatprep.subr.bf16.mxu0 0
        %790 = vmatpush1.bf16.msra.mxu0 0
        %791 = vmatprep.subr.bf16.mxu0 0
        %792 = vmatpush1.bf16.msra.mxu0 0
        %793 = vmatprep.subr.bf16.mxu0 0
        %794 = vmatpush1.bf16.msra.mxu0 0
        %795 = vmatprep.subr.bf16.mxu0 0
        %796 = vmatpush1.bf16.msra.mxu0 0
        %797 = vmatprep.subr.bf16.mxu0 0
        %798 = vmatpush1.bf16.msra.mxu0 0
        %799 = vmatprep.subr.bf16.mxu0 0
        %800 = vmatpush1.bf16.msra.mxu0 0
        %801 = vmatprep.subr.bf16.mxu0 0
        %802 = vmatpush1.bf16.msra.mxu0 0
        %803 = vmatprep.subr.bf16.mxu0 0
        %804 = vmatpush1.bf16.msra.mxu0 0
        %805 = vmatprep.subr.bf16.mxu0 0
        %806 = vmatpush1.bf16.msra.mxu0 0
        %807 = vmatprep.subr.bf16.mxu0 0
        %808 = vmatpush1.bf16.msra.mxu0 0
        %809 = vmatprep.mubr.bf16.mxu0 0
        %810 = vmatmul.mubr.bf16.gmra.mrb[0].mxu0 %v717
        %v811 = vpop.f32.mrb[0].mxu0
        %v812 = vadd.f32 0.0, %v811
        %v813 = vpop.f32.mrb[0].mxu0
        %v814 = vpop.f32.mrb[0].mxu0
        %v815 = vadd.f32 0.0, %v814
        %v816 = vpop.f32.mrb[0].mxu0
        %817 = vdwg.mxu0
        %s818 = scalar_lea.vmem %s5, 32
        %v819 = vld [vmem:[%s818] sm:$0xf]
        %v820 = vld [vmem:[%s818 + $0x4] sm:$0xf]
        %v821 = vld [vmem:[%s818 + $0x8] sm:$0xf]
        %v822 = vld [vmem:[%s818 + $0xc] sm:$0xf]
        %v827 = vunpack.c.l.b16 %v819
        %v828 = vunpack.c.l.b16 %v820
        %v829 = vunpack.c.l.b16 %v821
        %v830 = vunpack.c.l.b16 %v822
        %v831 = vpack.c.b16 %v828, %v827
        %v832 = vpack.c.b16 %v830, %v829
        %835 = vmatprep.subr.bf16.mxu0 0
        %836 = vmatpush1.bf16.msra.mxu0 %v831
        %837 = vmatprep.subr.bf16.mxu0 0
        %838 = vmatpush1.bf16.msra.mxu0 %v832
        %839 = vmatprep.subr.bf16.mxu0 0
        %840 = vmatpush1.bf16.msra.mxu0 0
        %841 = vmatprep.subr.bf16.mxu0 0
        %842 = vmatpush1.bf16.msra.mxu0 0
        %843 = vmatprep.subr.bf16.mxu0 0
        %844 = vmatpush1.bf16.msra.mxu0 0
        %845 = vmatprep.subr.bf16.mxu0 0
        %846 = vmatpush1.bf16.msra.mxu0 0
        %847 = vmatprep.subr.bf16.mxu0 0
        %848 = vmatpush1.bf16.msra.mxu0 0
        %849 = vmatprep.subr.bf16.mxu0 0
        %850 = vmatpush1.bf16.msra.mxu0 0
        %851 = vmatprep.subr.bf16.mxu0 0
        %852 = vmatpush1.bf16.msra.mxu0 0
        %853 = vmatprep.subr.bf16.mxu0 0
        %854 = vmatpush1.bf16.msra.mxu0 0
        %855 = vmatprep.subr.bf16.mxu0 0
        %856 = vmatpush1.bf16.msra.mxu0 0
        %857 = vmatprep.subr.bf16.mxu0 0
        %858 = vmatpush1.bf16.msra.mxu0 0
        %859 = vmatprep.subr.bf16.mxu0 0
        %860 = vmatpush1.bf16.msra.mxu0 0
        %861 = vmatprep.subr.bf16.mxu0 0
        %862 = vmatpush1.bf16.msra.mxu0 0
        %863 = vmatprep.subr.bf16.mxu0 0
        %864 = vmatpush1.bf16.msra.mxu0 0
        %865 = vmatprep.subr.bf16.mxu0 0
        %866 = vmatpush1.bf16.msra.mxu0 0
        %867 = vmatprep.mubr.bf16.mxu0 0
        %868 = vmatmul.mubr.bf16.gmra.mrb[0].mxu0 %v717
        %v869 = vpop.f32.mrb[0].mxu0
        %v870 = vadd.f32 0.0, %v869
        %v871 = vpop.f32.mrb[0].mxu0
        %v872 = vpop.f32.mrb[0].mxu0
        %v873 = vadd.f32 0.0, %v872
        %v874 = vpop.f32.mrb[0].mxu0
        %875 = vdwg.mxu0
        %v876 = vpack.c.bf16 %v754, %v754
        %v877 = vpack.c.bf16 %v757, %v757
        %v878 = vpack.c.bf16 %v812, %v812
        %v879 = vpack.c.bf16 %v815, %v815
        %v880 = vpack.c.bf16 %v870, %v870
        %v881 = vpack.c.bf16 %v873, %v873
        %vm882 = vcmask 64512
        %v884 = vsel %vm882, %v876, 0
        %v887 = vsel %vm882, %v878, 0
        %889 = vmatprep.subr.bf16.mxu0 0
        %890 = vmatpush1.bf16.xpose.msra.mxu0 %v887
        %891 = vmatprep.subr.bf16.mxu0 0
        %892 = vmatpush1.bf16.xpose.msra.mxu0 0
        %893 = vmatprep.subr.bf16.mxu0 0
        %894 = vmatpush1.bf16.xpose.msra.mxu0 0
        %895 = vmatprep.subr.bf16.mxu0 0
        %896 = vmatpush1.bf16.xpose.msra.mxu0 0
        %897 = vmatprep.subr.bf16.mxu0 0
        %898 = vmatpush1.bf16.xpose.msra.mxu0 0
        %899 = vmatprep.subr.bf16.mxu0 0
        %900 = vmatpush1.bf16.xpose.msra.mxu0 0
        %901 = vmatprep.subr.bf16.mxu0 0
        %902 = vmatpush1.bf16.xpose.msra.mxu0 0
        %903 = vmatprep.subr.bf16.mxu0 0
        %904 = vmatpush1.bf16.xpose.msra.mxu0 0
        %905 = vmatprep.subr.bf16.mxu0 0
        %906 = vmatpush1.bf16.xpose.msra.mxu0 0
        %907 = vmatprep.subr.bf16.mxu0 0
        %908 = vmatpush1.bf16.xpose.msra.mxu0 0
        %909 = vmatprep.subr.bf16.mxu0 0
        %910 = vmatpush1.bf16.xpose.msra.mxu0 0
        %911 = vmatprep.subr.bf16.mxu0 0
        %912 = vmatpush1.bf16.xpose.msra.mxu0 0
        %913 = vmatprep.subr.bf16.mxu0 0
        %914 = vmatpush1.bf16.xpose.msra.mxu0 0
        %915 = vmatprep.subr.bf16.mxu0 0
        %916 = vmatpush1.bf16.xpose.msra.mxu0 0
        %917 = vmatprep.subr.bf16.mxu0 0
        %918 = vmatpush1.bf16.xpose.msra.mxu0 0
        %919 = vmatprep.subr.bf16.mxu0 0
        %920 = vmatpush1.bf16.xpose.msra.mxu0 0
        %921 = vmatprep.mubr.bf16.mxu0 0
        %922 = vmatmul.mubr.bf16.gmra.mrb[0].mxu0 %v884
        %v923 = vpop.f32.mrb[0].mxu0
        %v924 = vadd.f32 0.0, %v923
        %v925 = vpop.f32.mrb[0].mxu0
        %v926 = vpop.f32.mrb[0].mxu0
        %v927 = vpop.f32.mrb[0].mxu0
        %928 = vdwg.mxu0
        %v930 = vsel %vm882, %v877, 0
        %v933 = vsel %vm882, %v879, 0
        %935 = vmatprep.subr.bf16.mxu0 0
        %936 = vmatpush1.bf16.xpose.msra.mxu0 %v933
        %937 = vmatprep.subr.bf16.mxu0 0
        %938 = vmatpush1.bf16.xpose.msra.mxu0 0
        %939 = vmatprep.subr.bf16.mxu0 0
        %940 = vmatpush1.bf16.xpose.msra.mxu0 0
        %941 = vmatprep.subr.bf16.mxu0 0
        %942 = vmatpush1.bf16.xpose.msra.mxu0 0
        %943 = vmatprep.subr.bf16.mxu0 0
        %944 = vmatpush1.bf16.xpose.msra.mxu0 0
        %945 = vmatprep.subr.bf16.mxu0 0
        %946 = vmatpush1.bf16.xpose.msra.mxu0 0
        %947 = vmatprep.subr.bf16.mxu0 0
        %948 = vmatpush1.bf16.xpose.msra.mxu0 0
        %949 = vmatprep.subr.bf16.mxu0 0
        %950 = vmatpush1.bf16.xpose.msra.mxu0 0
        %951 = vmatprep.subr.bf16.mxu0 0
        %952 = vmatpush1.bf16.xpose.msra.mxu0 0
        %953 = vmatprep.subr.bf16.mxu0 0
        %954 = vmatpush1.bf16.xpose.msra.mxu0 0
        %955 = vmatprep.subr.bf16.mxu0 0
        %956 = vmatpush1.bf16.xpose.msra.mxu0 0
        %957 = vmatprep.subr.bf16.mxu0 0
        %958 = vmatpush1.bf16.xpose.msra.mxu0 0
        %959 = vmatprep.subr.bf16.mxu0 0
        %960 = vmatpush1.bf16.xpose.msra.mxu0 0
        %961 = vmatprep.subr.bf16.mxu0 0
        %962 = vmatpush1.bf16.xpose.msra.mxu0 0
        %963 = vmatprep.subr.bf16.mxu0 0
        %964 = vmatpush1.bf16.xpose.msra.mxu0 0
        %965 = vmatprep.subr.bf16.mxu0 0
        %966 = vmatpush1.bf16.xpose.msra.mxu0 0
        %967 = vmatprep.mubr.bf16.mxu0 0
        %968 = vmatmul.mubr.bf16.gmra.mrb[0].mxu0 %v930
        %v969 = vpop.f32.mrb[0].mxu0
        %v970 = vadd.f32 0.0, %v969
        %v971 = vpop.f32.mrb[0].mxu0
        %v972 = vpop.f32.mrb[0].mxu0
        %v973 = vpop.f32.mrb[0].mxu0
        %974 = vdwg.mxu0
        %vm975 = vcmp.eq.f32.partialorder %v694, 0.0
        %vm976 = vcmp.eq.f32.partialorder %v695, 0.0
        %v977 = vsel %vm975, -1e+20, %v924
        %v978 = vsel %vm976, -1e+20, %v970
        %v979 = vsel %vm882, %v977, -inf
        %980 = vmax.xlane.f32.xlu0 %v979
        %v981 = vpop.xlane.xlu0 %980
        %v982 = vsel %vm882, %v978, -inf
        %983 = vmax.xlane.f32.xlu0 %v982
        %v984 = vpop.xlane.xlu0 %983
        %v985 = vsub.f32 %v977, %v981
        %v986 = vsub.f32 %v978, %v984
        %v987 = vmul.f32 %v985, 1.442695
        %v988 = vpow.pop %v987
        %v989 = vmul.f32 %v986, 1.442695
        %v990 = vpow.pop %v989
        %v991 = vsel %vm882, %v988, 0.0
        %992 = vadd.xlane.f32.xlu0 %v991
        %v993 = vpop.xlane.xlu0 %992
        %v994 = vsel %vm882, %v990, 0.0
        %995 = vadd.xlane.f32.xlu0 %v994
        %v996 = vpop.xlane.xlu0 %995
        %v997 = vrcp.pop %v993
        %v998 = vrcp.pop %v996
        %v999 = vmul.f32 %v988, %v997
        %v1000 = vmul.f32 %v990, %v998
        %v1001 = vpack.c.bf16 %v999, %v999
        %v1002 = vpack.c.bf16 %v1000, %v1000
        %v1004 = vsel %vm882, %v1001, 0
        %vm1006 = vcmask 1043456
        %v1008 = vsel %vm1006, %v880, 0
        %1010 = vmatprep.subr.bf16.mxu0 0
        %1011 = vmatpush1.bf16.msra.mxu0 %v1008
        %1012 = vmatprep.subr.bf16.mxu0 0
        %1013 = vmatpush1.bf16.msra.mxu0 0
        %1014 = vmatprep.subr.bf16.mxu0 0
        %1015 = vmatpush1.bf16.msra.mxu0 0
        %1016 = vmatprep.subr.bf16.mxu0 0
        %1017 = vmatpush1.bf16.msra.mxu0 0
        %1018 = vmatprep.subr.bf16.mxu0 0
        %1019 = vmatpush1.bf16.msra.mxu0 0
        %1020 = vmatprep.subr.bf16.mxu0 0
        %1021 = vmatpush1.bf16.msra.mxu0 0
        %1022 = vmatprep.subr.bf16.mxu0 0
        %1023 = vmatpush1.bf16.msra.mxu0 0
        %1024 = vmatprep.subr.bf16.mxu0 0
        %1025 = vmatpush1.bf16.msra.mxu0 0
        %1026 = vmatprep.subr.bf16.mxu0 0
        %1027 = vmatpush1.bf16.msra.mxu0 0
        %1028 = vmatprep.subr.bf16.mxu0 0
        %1029 = vmatpush1.bf16.msra.mxu0 0
        %1030 = vmatprep.subr.bf16.mxu0 0
        %1031 = vmatpush1.bf16.msra.mxu0 0
        %1032 = vmatprep.subr.bf16.mxu0 0
        %1033 = vmatpush1.bf16.msra.mxu0 0
        %1034 = vmatprep.subr.bf16.mxu0 0
        %1035 = vmatpush1.bf16.msra.mxu0 0
        %1036 = vmatprep.subr.bf16.mxu0 0
        %1037 = vmatpush1.bf16.msra.mxu0 0
        %1038 = vmatprep.subr.bf16.mxu0 0
        %1039 = vmatpush1.bf16.msra.mxu0 0
        %1040 = vmatprep.subr.bf16.mxu0 0
        %1041 = vmatpush1.bf16.msra.mxu0 0
        %1042 = vmatprep.mubr.bf16.mxu0 0
        %1043 = vmatmul.mubr.bf16.gmra.mrb[0].mxu0 %v1004
        %v1044 = vpop.f32.mrb[0].mxu0
        %v1045 = vadd.f32 0.0, %v1044
        %v1046 = vpop.f32.mrb[0].mxu0
        %v1047 = vpop.f32.mrb[0].mxu0
        %v1048 = vpop.f32.mrb[0].mxu0
        %1049 = vdwg.mxu0
        %v1051 = vsel %vm882, %v1002, 0
        %v1054 = vsel %vm1006, %v881, 0
        %1056 = vmatprep.subr.bf16.mxu0 0
        %1057 = vmatpush1.bf16.msra.mxu0 %v1054
        %1058 = vmatprep.subr.bf16.mxu0 0
        %1059 = vmatpush1.bf16.msra.mxu0 0
        %1060 = vmatprep.subr.bf16.mxu0 0
        %1061 = vmatpush1.bf16.msra.mxu0 0
        %1062 = vmatprep.subr.bf16.mxu0 0
        %1063 = vmatpush1.bf16.msra.mxu0 0
        %1064 = vmatprep.subr.bf16.mxu0 0
        %1065 = vmatpush1.bf16.msra.mxu0 0
        %1066 = vmatprep.subr.bf16.mxu0 0
        %1067 = vmatpush1.bf16.msra.mxu0 0
        %1068 = vmatprep.subr.bf16.mxu0 0
        %1069 = vmatpush1.bf16.msra.mxu0 0
        %1070 = vmatprep.subr.bf16.mxu0 0
        %1071 = vmatpush1.bf16.msra.mxu0 0
        %1072 = vmatprep.subr.bf16.mxu0 0
        %1073 = vmatpush1.bf16.msra.mxu0 0
        %1074 = vmatprep.subr.bf16.mxu0 0
        %1075 = vmatpush1.bf16.msra.mxu0 0
        %1076 = vmatprep.subr.bf16.mxu0 0
        %1077 = vmatpush1.bf16.msra.mxu0 0
        %1078 = vmatprep.subr.bf16.mxu0 0
        %1079 = vmatpush1.bf16.msra.mxu0 0
        %1080 = vmatprep.subr.bf16.mxu0 0
        %1081 = vmatpush1.bf16.msra.mxu0 0
        %1082 = vmatprep.subr.bf16.mxu0 0
        %1083 = vmatpush1.bf16.msra.mxu0 0
        %1084 = vmatprep.subr.bf16.mxu0 0
        %1085 = vmatpush1.bf16.msra.mxu0 0
        %1086 = vmatprep.subr.bf16.mxu0 0
        %1087 = vmatpush1.bf16.msra.mxu0 0
        %1088 = vmatprep.mubr.bf16.mxu0 0
        %1089 = vmatmul.mubr.bf16.gmra.mrb[0].mxu0 %v1051
        %v1090 = vpop.f32.mrb[0].mxu0
        %v1091 = vadd.f32 0.0, %v1090
        %v1092 = vpop.f32.mrb[0].mxu0
        %v1093 = vpop.f32.mrb[0].mxu0
        %v1094 = vpop.f32.mrb[0].mxu0
        %1095 = vdwg.mxu0
        %v1096 = vpack.c.bf16 %v1091, %v1045
        %v1097 = vld [vmem:[#allocation11] sm:$0xf]
        %1099 = vrot.lane.b32.xlu0 %v876, 120
        %v1100 = vpop.permute.xlu0 %1099
        %1102 = vrot.lane.b32.xlu0 %v878, 120
        %v1103 = vpop.permute.xlu0 %1102
        %v1105 = vsel %vm882, %v1100, 0
        %v1108 = vsel %vm882, %v1103, 0
        %1110 = vmatprep.subr.bf16.mxu0 0
        %1111 = vmatpush1.bf16.xpose.msra.mxu0 %v1108
        %1112 = vmatprep.subr.bf16.mxu0 0
        %1113 = vmatpush1.bf16.xpose.msra.mxu0 0
        %1114 = vmatprep.subr.bf16.mxu0 0
        %1115 = vmatpush1.bf16.xpose.msra.mxu0 0
        %1116 = vmatprep.subr.bf16.mxu0 0
        %1117 = vmatpush1.bf16.xpose.msra.mxu0 0
        %1118 = vmatprep.subr.bf16.mxu0 0
        %1119 = vmatpush1.bf16.xpose.msra.mxu0 0
        %1120 = vmatprep.subr.bf16.mxu0 0
        %1121 = vmatpush1.bf16.xpose.msra.mxu0 0
        %1122 = vmatprep.subr.bf16.mxu0 0
        %1123 = vmatpush1.bf16.xpose.msra.mxu0 0
        %1124 = vmatprep.subr.bf16.mxu0 0
        %1125 = vmatpush1.bf16.xpose.msra.mxu0 0
        %1126 = vmatprep.subr.bf16.mxu0 0
        %1127 = vmatpush1.bf16.xpose.msra.mxu0 0
        %1128 = vmatprep.subr.bf16.mxu0 0
        %1129 = vmatpush1.bf16.xpose.msra.mxu0 0
        %1130 = vmatprep.subr.bf16.mxu0 0
        %1131 = vmatpush1.bf16.xpose.msra.mxu0 0
        %1132 = vmatprep.subr.bf16.mxu0 0
        %1133 = vmatpush1.bf16.xpose.msra.mxu0 0
        %1134 = vmatprep.subr.bf16.mxu0 0
        %1135 = vmatpush1.bf16.xpose.msra.mxu0 0
        %1136 = vmatprep.subr.bf16.mxu0 0
        %1137 = vmatpush1.bf16.xpose.msra.mxu0 0
        %1138 = vmatprep.subr.bf16.mxu0 0
        %1139 = vmatpush1.bf16.xpose.msra.mxu0 0
        %1140 = vmatprep.subr.bf16.mxu0 0
        %1141 = vmatpush1.bf16.xpose.msra.mxu0 0
        %1142 = vmatprep.mubr.bf16.mxu0 0
        %1143 = vmatmul.mubr.bf16.gmra.mrb[0].mxu0 %v1105
        %v1144 = vpop.f32.mrb[0].mxu0
        %v1145 = vadd.f32 0.0, %v1144
        %v1146 = vpop.f32.mrb[0].mxu0
        %v1147 = vpop.f32.mrb[0].mxu0
        %v1148 = vpop.f32.mrb[0].mxu0
        %1149 = vdwg.mxu0
        %1151 = vrot.lane.b32.xlu0 %v877, 120
        %v1152 = vpop.permute.xlu0 %1151
        %1154 = vrot.lane.b32.xlu0 %v879, 120
        %v1155 = vpop.permute.xlu0 %1154
        %v1157 = vsel %vm882, %v1152, 0
        %v1160 = vsel %vm882, %v1155, 0
        %1162 = vmatprep.subr.bf16.mxu0 0
        %1163 = vmatpush1.bf16.xpose.msra.mxu0 %v1160
        %1164 = vmatprep.subr.bf16.mxu0 0
        %1165 = vmatpush1.bf16.xpose.msra.mxu0 0
        %1166 = vmatprep.subr.bf16.mxu0 0
        %1167 = vmatpush1.bf16.xpose.msra.mxu0 0
        %1168 = vmatprep.subr.bf16.mxu0 0
        %1169 = vmatpush1.bf16.xpose.msra.mxu0 0
        %1170 = vmatprep.subr.bf16.mxu0 0
        %1171 = vmatpush1.bf16.xpose.msra.mxu0 0
        %1172 = vmatprep.subr.bf16.mxu0 0
        %1173 = vmatpush1.bf16.xpose.msra.mxu0 0
        %1174 = vmatprep.subr.bf16.mxu0 0
        %1175 = vmatpush1.bf16.xpose.msra.mxu0 0
        %1176 = vmatprep.subr.bf16.mxu0 0
        %1177 = vmatpush1.bf16.xpose.msra.mxu0 0
        %1178 = vmatprep.subr.bf16.mxu0 0
        %1179 = vmatpush1.bf16.xpose.msra.mxu0 0
        %1180 = vmatprep.subr.bf16.mxu0 0
        %1181 = vmatpush1.bf16.xpose.msra.mxu0 0
        %1182 = vmatprep.subr.bf16.mxu0 0
        %1183 = vmatpush1.bf16.xpose.msra.mxu0 0
        %1184 = vmatprep.subr.bf16.mxu0 0
        %1185 = vmatpush1.bf16.xpose.msra.mxu0 0
        %1186 = vmatprep.subr.bf16.mxu0 0
        %1187 = vmatpush1.bf16.xpose.msra.mxu0 0
        %1188 = vmatprep.subr.bf16.mxu0 0
        %1189 = vmatpush1.bf16.xpose.msra.mxu0 0
        %1190 = vmatprep.subr.bf16.mxu0 0
        %1191 = vmatpush1.bf16.xpose.msra.mxu0 0
        %1192 = vmatprep.subr.bf16.mxu0 0
        %1193 = vmatpush1.bf16.xpose.msra.mxu0 0
        %1194 = vmatprep.mubr.bf16.mxu0 0
        %1195 = vmatmul.mubr.bf16.gmra.mrb[0].mxu0 %v1157
        %v1196 = vpop.f32.mrb[0].mxu0
        %v1197 = vadd.f32 0.0, %v1196
        %v1198 = vpop.f32.mrb[0].mxu0
        %v1199 = vpop.f32.mrb[0].mxu0
        %v1200 = vpop.f32.mrb[0].mxu0
        %1201 = vdwg.mxu0
        %v1202 = vsel %vm975, -1e+20, %v1145
        %v1203 = vsel %vm976, -1e+20, %v1197
        %v1204 = vsel %vm882, %v1202, -inf
        %1205 = vmax.xlane.f32.xlu0 %v1204
        %v1206 = vpop.xlane.xlu0 %1205
        %v1207 = vsel %vm882, %v1203, -inf
        %1208 = vmax.xlane.f32.xlu0 %v1207
        %v1209 = vpop.xlane.xlu0 %1208
        %v1210 = vsub.f32 %v1202, %v1206
        %v1211 = vsub.f32 %v1203, %v1209
        %v1212 = vmul.f32 %v1210, 1.442695
        %v1213 = vpow.pop %v1212
        %v1214 = vmul.f32 %v1211, 1.442695
        %v1215 = vpow.pop %v1214
        %v1216 = vsel %vm882, %v1213, 0.0
        %1217 = vadd.xlane.f32.xlu0 %v1216
        %v1218 = vpop.xlane.xlu0 %1217
        %v1219 = vsel %vm882, %v1215, 0.0
        %1220 = vadd.xlane.f32.xlu0 %v1219
        %v1221 = vpop.xlane.xlu0 %1220
        %v1222 = vrcp.pop %v1218
        %v1223 = vrcp.pop %v1221
        %v1224 = vmul.f32 %v1213, %v1222
        %v1225 = vmul.f32 %v1215, %v1223
        %v1226 = vpack.c.bf16 %v1224, %v1224
        %v1227 = vpack.c.bf16 %v1225, %v1225
        %1229 = vrot.lane.b32.xlu0 %v880, 120
        %v1230 = vpop.permute.xlu0 %1229
        %v1232 = vsel %vm882, %v1226, 0
        %v1235 = vsel %vm1006, %v1230, 0
        %1237 = vmatprep.subr.bf16.mxu0 0
        %1238 = vmatpush1.bf16.msra.mxu0 %v1235
        %1239 = vmatprep.subr.bf16.mxu0 0
        %1240 = vmatpush1.bf16.msra.mxu0 0
        %1241 = vmatprep.subr.bf16.mxu0 0
        %1242 = vmatpush1.bf16.msra.mxu0 0
        %1243 = vmatprep.subr.bf16.mxu0 0
        %1244 = vmatpush1.bf16.msra.mxu0 0
        %1245 = vmatprep.subr.bf16.mxu0 0
        %1246 = vmatpush1.bf16.msra.mxu0 0
        %1247 = vmatprep.subr.bf16.mxu0 0
        %1248 = vmatpush1.bf16.msra.mxu0 0
        %1249 = vmatprep.subr.bf16.mxu0 0
        %1250 = vmatpush1.bf16.msra.mxu0 0
        %1251 = vmatprep.subr.bf16.mxu0 0
        %1252 = vmatpush1.bf16.msra.mxu0 0
        %1253 = vmatprep.subr.bf16.mxu0 0
        %1254 = vmatpush1.bf16.msra.mxu0 0
        %1255 = vmatprep.subr.bf16.mxu0 0
        %1256 = vmatpush1.bf16.msra.mxu0 0
        %1257 = vmatprep.subr.bf16.mxu0 0
        %1258 = vmatpush1.bf16.msra.mxu0 0
        %1259 = vmatprep.subr.bf16.mxu0 0
        %1260 = vmatpush1.bf16.msra.mxu0 0
        %1261 = vmatprep.subr.bf16.mxu0 0
        %1262 = vmatpush1.bf16.msra.mxu0 0
        %1263 = vmatprep.subr.bf16.mxu0 0
        %1264 = vmatpush1.bf16.msra.mxu0 0
        %1265 = vmatprep.subr.bf16.mxu0 0
        %1266 = vmatpush1.bf16.msra.mxu0 0
        %1267 = vmatprep.subr.bf16.mxu0 0
        %1268 = vmatpush1.bf16.msra.mxu0 0
        %1269 = vmatprep.mubr.bf16.mxu0 0
        %1270 = vmatmul.mubr.bf16.gmra.mrb[0].mxu0 %v1232
        %v1271 = vpop.f32.mrb[0].mxu0
        %v1272 = vadd.f32 0.0, %v1271
        %v1273 = vpop.f32.mrb[0].mxu0
        %v1274 = vpop.f32.mrb[0].mxu0
        %v1275 = vpop.f32.mrb[0].mxu0
        %1276 = vdwg.mxu0
        %1278 = vrot.lane.b32.xlu0 %v881, 120
        %v1279 = vpop.permute.xlu0 %1278
        %v1281 = vsel %vm882, %v1227, 0
        %v1284 = vsel %vm1006, %v1279, 0
        %1286 = vmatprep.subr.bf16.mxu0 0
        %1287 = vmatpush1.bf16.msra.mxu0 %v1284
        %1288 = vmatprep.subr.bf16.mxu0 0
        %1289 = vmatpush1.bf16.msra.mxu0 0
        %1290 = vmatprep.subr.bf16.mxu0 0
        %1291 = vmatpush1.bf16.msra.mxu0 0
        %1292 = vmatprep.subr.bf16.mxu0 0
        %1293 = vmatpush1.bf16.msra.mxu0 0
        %1294 = vmatprep.subr.bf16.mxu0 0
        %1295 = vmatpush1.bf16.msra.mxu0 0
        %1296 = vmatprep.subr.bf16.mxu0 0
        %1297 = vmatpush1.bf16.msra.mxu0 0
        %1298 = vmatprep.subr.bf16.mxu0 0
        %1299 = vmatpush1.bf16.msra.mxu0 0
        %1300 = vmatprep.subr.bf16.mxu0 0
        %1301 = vmatpush1.bf16.msra.mxu0 0
        %1302 = vmatprep.subr.bf16.mxu0 0
        %1303 = vmatpush1.bf16.msra.mxu0 0
        %1304 = vmatprep.subr.bf16.mxu0 0
        %1305 = vmatpush1.bf16.msra.mxu0 0
        %1306 = vmatprep.subr.bf16.mxu0 0
        %1307 = vmatpush1.bf16.msra.mxu0 0
        %1308 = vmatprep.subr.bf16.mxu0 0
        %1309 = vmatpush1.bf16.msra.mxu0 0
        %1310 = vmatprep.subr.bf16.mxu0 0
        %1311 = vmatpush1.bf16.msra.mxu0 0
        %1312 = vmatprep.subr.bf16.mxu0 0
        %1313 = vmatpush1.bf16.msra.mxu0 0
        %1314 = vmatprep.subr.bf16.mxu0 0
        %1315 = vmatpush1.bf16.msra.mxu0 0
        %1316 = vmatprep.subr.bf16.mxu0 0
        %1317 = vmatpush1.bf16.msra.mxu0 0
        %1318 = vmatprep.mubr.bf16.mxu0 0
        %1319 = vmatmul.mubr.bf16.gmra.mrb[0].mxu0 %v1281
        %v1320 = vpop.f32.mrb[0].mxu0
        %v1321 = vadd.f32 0.0, %v1320
        %v1322 = vpop.f32.mrb[0].mxu0
        %v1323 = vpop.f32.mrb[0].mxu0
        %v1324 = vpop.f32.mrb[0].mxu0
        %1325 = vdwg.mxu0
        %v1326 = vpack.c.bf16 %v1321, %v1272
        %s1327 = scalar_lea.vmem [#allocation11], 4
        %v1328 = vld [vmem:[%s1327] sm:$0xf]
        %v1330 = vsel %vm882, %v1326, 0
        %v1333 = vsel %vm1006, %v1328, 0
        %1335 = vmatprep.subr.bf16.mxu0 0
        %1336 = vmatpush1.bf16.msra.mxu0 %v1333
        %1337 = vmatprep.subr.bf16.mxu0 0
        %1338 = vmatpush1.bf16.msra.mxu0 0
        %1339 = vmatprep.subr.bf16.mxu0 0
        %1340 = vmatpush1.bf16.msra.mxu0 0
        %1341 = vmatprep.subr.bf16.mxu0 0
        %1342 = vmatpush1.bf16.msra.mxu0 0
        %1343 = vmatprep.subr.bf16.mxu0 0
        %1344 = vmatpush1.bf16.msra.mxu0 0
        %1345 = vmatprep.subr.bf16.mxu0 0
        %1346 = vmatpush1.bf16.msra.mxu0 0
        %1347 = vmatprep.subr.bf16.mxu0 0
        %1348 = vmatpush1.bf16.msra.mxu0 0
        %1349 = vmatprep.subr.bf16.mxu0 0
        %1350 = vmatpush1.bf16.msra.mxu0 0
        %1351 = vmatprep.subr.bf16.mxu0 0
        %1352 = vmatpush1.bf16.msra.mxu0 0
        %1353 = vmatprep.subr.bf16.mxu0 0
        %1354 = vmatpush1.bf16.msra.mxu0 0
        %1355 = vmatprep.subr.bf16.mxu0 0
        %1356 = vmatpush1.bf16.msra.mxu0 0
        %1357 = vmatprep.subr.bf16.mxu0 0
        %1358 = vmatpush1.bf16.msra.mxu0 0
        %1359 = vmatprep.subr.bf16.mxu0 0
        %1360 = vmatpush1.bf16.msra.mxu0 0
        %1361 = vmatprep.subr.bf16.mxu0 0
        %1362 = vmatpush1.bf16.msra.mxu0 0
        %1363 = vmatprep.subr.bf16.mxu0 0
        %1364 = vmatpush1.bf16.msra.mxu0 0
        %1365 = vmatprep.subr.bf16.mxu0 0
        %1366 = vmatpush1.bf16.msra.mxu0 0
        %1367 = vmatprep.mubr.bf16.mxu0 0
        %1368 = vmatmul.mubr.bf16.gmra.mrb[0].mxu0 %v1330
        %v1369 = vpop.f32.mrb[0].mxu0
        %v1370 = vadd.f32 0.0, %v1369
        %v1371 = vpop.f32.mrb[0].mxu0
        %v1372 = vpop.f32.mrb[0].mxu0
        %v1373 = vadd.f32 0.0, %v1372
        %v1374 = vpop.f32.mrb[0].mxu0
        %1375 = vdwg.mxu0
        %v1377 = vsel %vm882, %v1096, 0
        %v1380 = vsel %vm1006, %v1097, 0
        %1382 = vmatprep.subr.bf16.mxu0 0
        %1383 = vmatpush1.bf16.msra.mxu0 %v1380
        %1384 = vmatprep.subr.bf16.mxu0 0
        %1385 = vmatpush1.bf16.msra.mxu0 0
        %1386 = vmatprep.subr.bf16.mxu0 0
        %1387 = vmatpush1.bf16.msra.mxu0 0
        %1388 = vmatprep.subr.bf16.mxu0 0
        %1389 = vmatpush1.bf16.msra.mxu0 0
        %1390 = vmatprep.subr.bf16.mxu0 0
        %1391 = vmatpush1.bf16.msra.mxu0 0
        %1392 = vmatprep.subr.bf16.mxu0 0
        %1393 = vmatpush1.bf16.msra.mxu0 0
        %1394 = vmatprep.subr.bf16.mxu0 0
        %1395 = vmatpush1.bf16.msra.mxu0 0
        %1396 = vmatprep.subr.bf16.mxu0 0
        %1397 = vmatpush1.bf16.msra.mxu0 0
        %1398 = vmatprep.subr.bf16.mxu0 0
        %1399 = vmatpush1.bf16.msra.mxu0 0
        %1400 = vmatprep.subr.bf16.mxu0 0
        %1401 = vmatpush1.bf16.msra.mxu0 0
        %1402 = vmatprep.subr.bf16.mxu0 0
        %1403 = vmatpush1.bf16.msra.mxu0 0
        %1404 = vmatprep.subr.bf16.mxu0 0
        %1405 = vmatpush1.bf16.msra.mxu0 0
        %1406 = vmatprep.subr.bf16.mxu0 0
        %1407 = vmatpush1.bf16.msra.mxu0 0
        %1408 = vmatprep.subr.bf16.mxu0 0
        %1409 = vmatpush1.bf16.msra.mxu0 0
        %1410 = vmatprep.subr.bf16.mxu0 0
        %1411 = vmatpush1.bf16.msra.mxu0 0
        %1412 = vmatprep.subr.bf16.mxu0 0
        %1413 = vmatpush1.bf16.msra.mxu0 0
        %1414 = vmatprep.mubr.bf16.mxu0 0
        %1415 = vmatmul.mubr.bf16.gmra.mrb[0].mxu0 %v1377
        %v1416 = vpop.f32.mrb[0].mxu0
        %v1417 = vadd.f32 %v1370, %v1416
        %v1418 = vpop.f32.mrb[0].mxu0
        %v1419 = vpop.f32.mrb[0].mxu0
        %v1420 = vadd.f32 %v1373, %v1419
        %v1421 = vpop.f32.mrb[0].mxu0
        %1422 = vdwg.mxu0
        %1423 = vrot.lane.b32.xlu0 %v876, 112
        %v1424 = vpop.permute.xlu0 %1423
        %1425 = vrot.lane.b32.xlu0 %v878, 112
        %v1426 = vpop.permute.xlu0 %1425
        %v1428 = vsel %vm882, %v1424, 0
        %v1431 = vsel %vm882, %v1426, 0
        %1433 = vmatprep.subr.bf16.mxu0 0
        %1434 = vmatpush1.bf16.xpose.msra.mxu0 %v1431
        %1435 = vmatprep.subr.bf16.mxu0 0
        %1436 = vmatpush1.bf16.xpose.msra.mxu0 0
        %1437 = vmatprep.subr.bf16.mxu0 0
        %1438 = vmatpush1.bf16.xpose.msra.mxu0 0
        %1439 = vmatprep.subr.bf16.mxu0 0
        %1440 = vmatpush1.bf16.xpose.msra.mxu0 0
        %1441 = vmatprep.subr.bf16.mxu0 0
        %1442 = vmatpush1.bf16.xpose.msra.mxu0 0
        %1443 = vmatprep.subr.bf16.mxu0 0
        %1444 = vmatpush1.bf16.xpose.msra.mxu0 0
        %1445 = vmatprep.subr.bf16.mxu0 0
        %1446 = vmatpush1.bf16.xpose.msra.mxu0 0
        %1447 = vmatprep.subr.bf16.mxu0 0
        %1448 = vmatpush1.bf16.xpose.msra.mxu0 0
        %1449 = vmatprep.subr.bf16.mxu0 0
        %1450 = vmatpush1.bf16.xpose.msra.mxu0 0
        %1451 = vmatprep.subr.bf16.mxu0 0
        %1452 = vmatpush1.bf16.xpose.msra.mxu0 0
        %1453 = vmatprep.subr.bf16.mxu0 0
        %1454 = vmatpush1.bf16.xpose.msra.mxu0 0
        %1455 = vmatprep.subr.bf16.mxu0 0
        %1456 = vmatpush1.bf16.xpose.msra.mxu0 0
        %1457 = vmatprep.subr.bf16.mxu0 0
        %1458 = vmatpush1.bf16.xpose.msra.mxu0 0
        %1459 = vmatprep.subr.bf16.mxu0 0
        %1460 = vmatpush1.bf16.xpose.msra.mxu0 0
        %1461 = vmatprep.subr.bf16.mxu0 0
        %1462 = vmatpush1.bf16.xpose.msra.mxu0 0
        %1463 = vmatprep.subr.bf16.mxu0 0
        %1464 = vmatpush1.bf16.xpose.msra.mxu0 0
        %1465 = vmatprep.mubr.bf16.mxu0 0
        %1466 = vmatmul.mubr.bf16.gmra.mrb[0].mxu0 %v1428
        %v1467 = vpop.f32.mrb[0].mxu0
        %v1468 = vadd.f32 0.0, %v1467
        %v1469 = vpop.f32.mrb[0].mxu0
        %v1470 = vpop.f32.mrb[0].mxu0
        %v1471 = vpop.f32.mrb[0].mxu0
        %1472 = vdwg.mxu0
        %1473 = vrot.lane.b32.xlu0 %v877, 112
        %v1474 = vpop.permute.xlu0 %1473
        %1475 = vrot.lane.b32.xlu0 %v879, 112
        %v1476 = vpop.permute.xlu0 %1475
        %v1478 = vsel %vm882, %v1474, 0
        %v1481 = vsel %vm882, %v1476, 0
        %1483 = vmatprep.subr.bf16.mxu0 0
        %1484 = vmatpush1.bf16.xpose.msra.mxu0 %v1481
        %1485 = vmatprep.subr.bf16.mxu0 0
        %1486 = vmatpush1.bf16.xpose.msra.mxu0 0
        %1487 = vmatprep.subr.bf16.mxu0 0
        %1488 = vmatpush1.bf16.xpose.msra.mxu0 0
        %1489 = vmatprep.subr.bf16.mxu0 0
        %1490 = vmatpush1.bf16.xpose.msra.mxu0 0
        %1491 = vmatprep.subr.bf16.mxu0 0
        %1492 = vmatpush1.bf16.xpose.msra.mxu0 0
        %1493 = vmatprep.subr.bf16.mxu0 0
        %1494 = vmatpush1.bf16.xpose.msra.mxu0 0
        %1495 = vmatprep.subr.bf16.mxu0 0
        %1496 = vmatpush1.bf16.xpose.msra.mxu0 0
        %1497 = vmatprep.subr.bf16.mxu0 0
        %1498 = vmatpush1.bf16.xpose.msra.mxu0 0
        %1499 = vmatprep.subr.bf16.mxu0 0
        %1500 = vmatpush1.bf16.xpose.msra.mxu0 0
        %1501 = vmatprep.subr.bf16.mxu0 0
        %1502 = vmatpush1.bf16.xpose.msra.mxu0 0
        %1503 = vmatprep.subr.bf16.mxu0 0
        %1504 = vmatpush1.bf16.xpose.msra.mxu0 0
        %1505 = vmatprep.subr.bf16.mxu0 0
        %1506 = vmatpush1.bf16.xpose.msra.mxu0 0
        %1507 = vmatprep.subr.bf16.mxu0 0
        %1508 = vmatpush1.bf16.xpose.msra.mxu0 0
        %1509 = vmatprep.subr.bf16.mxu0 0
        %1510 = vmatpush1.bf16.xpose.msra.mxu0 0
        %1511 = vmatprep.subr.bf16.mxu0 0
        %1512 = vmatpush1.bf16.xpose.msra.mxu0 0
        %1513 = vmatprep.subr.bf16.mxu0 0
        %1514 = vmatpush1.bf16.xpose.msra.mxu0 0
        %1515 = vmatprep.mubr.bf16.mxu0 0
        %1516 = vmatmul.mubr.bf16.gmra.mrb[0].mxu0 %v1478
        %v1517 = vpop.f32.mrb[0].mxu0
        %v1518 = vadd.f32 0.0, %v1517
        %v1519 = vpop.f32.mrb[0].mxu0
        %v1520 = vpop.f32.mrb[0].mxu0
        %v1521 = vpop.f32.mrb[0].mxu0
        %1522 = vdwg.mxu0
        %v1523 = vsel %vm975, -1e+20, %v1468
        %v1524 = vsel %vm976, -1e+20, %v1518
        %v1525 = vsel %vm882, %v1523, -inf
        %1526 = vmax.xlane.f32.xlu0 %v1525
        %v1527 = vpop.xlane.xlu0 %1526
        %v1528 = vsel %vm882, %v1524, -inf
        %1529 = vmax.xlane.f32.xlu0 %v1528
        %v1530 = vpop.xlane.xlu0 %1529
        %v1531 = vsub.f32 %v1523, %v1527
        %v1532 = vsub.f32 %v1524, %v1530
        %v1533 = vmul.f32 %v1531, 1.442695
        %v1534 = vpow.pop %v1533
        %v1535 = vmul.f32 %v1532, 1.442695
        %v1536 = vpow.pop %v1535
        %v1537 = vsel %vm882, %v1534, 0.0
        %1538 = vadd.xlane.f32.xlu0 %v1537
        %v1539 = vpop.xlane.xlu0 %1538
        %v1540 = vsel %vm882, %v1536, 0.0
        %1541 = vadd.xlane.f32.xlu0 %v1540
        %v1542 = vpop.xlane.xlu0 %1541
        %v1543 = vrcp.pop %v1539
        %v1544 = vrcp.pop %v1542
        %v1545 = vmul.f32 %v1534, %v1543
        %v1546 = vmul.f32 %v1536, %v1544
        %v1547 = vpack.c.bf16 %v1545, %v1545
        %v1548 = vpack.c.bf16 %v1546, %v1546
        %1549 = vrot.lane.b32.xlu0 %v880, 112
        %v1550 = vpop.permute.xlu0 %1549
        %v1552 = vsel %vm882, %v1547, 0
        %v1555 = vsel %vm1006, %v1550, 0
        %1557 = vmatprep.subr.bf16.mxu0 0
        %1558 = vmatpush1.bf16.msra.mxu0 %v1555
        %1559 = vmatprep.subr.bf16.mxu0 0
        %1560 = vmatpush1.bf16.msra.mxu0 0
        %1561 = vmatprep.subr.bf16.mxu0 0
        %1562 = vmatpush1.bf16.msra.mxu0 0
        %1563 = vmatprep.subr.bf16.mxu0 0
        %1564 = vmatpush1.bf16.msra.mxu0 0
        %1565 = vmatprep.subr.bf16.mxu0 0
        %1566 = vmatpush1.bf16.msra.mxu0 0
        %1567 = vmatprep.subr.bf16.mxu0 0
        %1568 = vmatpush1.bf16.msra.mxu0 0
        %1569 = vmatprep.subr.bf16.mxu0 0
        %1570 = vmatpush1.bf16.msra.mxu0 0
        %1571 = vmatprep.subr.bf16.mxu0 0
        %1572 = vmatpush1.bf16.msra.mxu0 0
        %1573 = vmatprep.subr.bf16.mxu0 0
        %1574 = vmatpush1.bf16.msra.mxu0 0
        %1575 = vmatprep.subr.bf16.mxu0 0
        %1576 = vmatpush1.bf16.msra.mxu0 0
        %1577 = vmatprep.subr.bf16.mxu0 0
        %1578 = vmatpush1.bf16.msra.mxu0 0
        %1579 = vmatprep.subr.bf16.mxu0 0
        %1580 = vmatpush1.bf16.msra.mxu0 0
        %1581 = vmatprep.subr.bf16.mxu0 0
        %1582 = vmatpush1.bf16.msra.mxu0 0
        %1583 = vmatprep.subr.bf16.mxu0 0
        %1584 = vmatpush1.bf16.msra.mxu0 0
        %1585 = vmatprep.subr.bf16.mxu0 0
        %1586 = vmatpush1.bf16.msra.mxu0 0
        %1587 = vmatprep.subr.bf16.mxu0 0
        %1588 = vmatpush1.bf16.msra.mxu0 0
        %1589 = vmatprep.mubr.bf16.mxu0 0
        %1590 = vmatmul.mubr.bf16.gmra.mrb[0].mxu0 %v1552
        %v1591 = vpop.f32.mrb[0].mxu0
        %v1592 = vadd.f32 0.0, %v1591
        %v1593 = vpop.f32.mrb[0].mxu0
        %v1594 = vpop.f32.mrb[0].mxu0
        %v1595 = vpop.f32.mrb[0].mxu0
        %1596 = vdwg.mxu0
        %1597 = vrot.lane.b32.xlu0 %v881, 112
        %v1598 = vpop.permute.xlu0 %1597
        %v1600 = vsel %vm882, %v1548, 0
        %v1603 = vsel %vm1006, %v1598, 0
        %1605 = vmatprep.subr.bf16.mxu0 0
        %1606 = vmatpush1.bf16.msra.mxu0 %v1603
        %1607 = vmatprep.subr.bf16.mxu0 0
        %1608 = vmatpush1.bf16.msra.mxu0 0
        %1609 = vmatprep.subr.bf16.mxu0 0
        %1610 = vmatpush1.bf16.msra.mxu0 0
        %1611 = vmatprep.subr.bf16.mxu0 0
        %1612 = vmatpush1.bf16.msra.mxu0 0
        %1613 = vmatprep.subr.bf16.mxu0 0
        %1614 = vmatpush1.bf16.msra.mxu0 0
        %1615 = vmatprep.subr.bf16.mxu0 0
        %1616 = vmatpush1.bf16.msra.mxu0 0
        %1617 = vmatprep.subr.bf16.mxu0 0
        %1618 = vmatpush1.bf16.msra.mxu0 0
        %1619 = vmatprep.subr.bf16.mxu0 0
        %1620 = vmatpush1.bf16.msra.mxu0 0
        %1621 = vmatprep.subr.bf16.mxu0 0
        %1622 = vmatpush1.bf16.msra.mxu0 0
        %1623 = vmatprep.subr.bf16.mxu0 0
        %1624 = vmatpush1.bf16.msra.mxu0 0
        %1625 = vmatprep.subr.bf16.mxu0 0
        %1626 = vmatpush1.bf16.msra.mxu0 0
        %1627 = vmatprep.subr.bf16.mxu0 0
        %1628 = vmatpush1.bf16.msra.mxu0 0
        %1629 = vmatprep.subr.bf16.mxu0 0
        %1630 = vmatpush1.bf16.msra.mxu0 0
        %1631 = vmatprep.subr.bf16.mxu0 0
        %1632 = vmatpush1.bf16.msra.mxu0 0
        %1633 = vmatprep.subr.bf16.mxu0 0
        %1634 = vmatpush1.bf16.msra.mxu0 0
        %1635 = vmatprep.subr.bf16.mxu0 0
        %1636 = vmatpush1.bf16.msra.mxu0 0
        %1637 = vmatprep.mubr.bf16.mxu0 0
        %1638 = vmatmul.mubr.bf16.gmra.mrb[0].mxu0 %v1600
        %v1639 = vpop.f32.mrb[0].mxu0
        %v1640 = vadd.f32 0.0, %v1639
        %v1641 = vpop.f32.mrb[0].mxu0
        %v1642 = vpop.f32.mrb[0].mxu0
        %v1643 = vpop.f32.mrb[0].mxu0
        %1644 = vdwg.mxu0
        %v1645 = vpack.c.bf16 %v1640, %v1592
        %s1646 = scalar_lea.vmem [#allocation11], 8
        %v1647 = vld [vmem:[%s1646] sm:$0xf]
        %v1649 = vsel %vm882, %v1645, 0
        %v1652 = vsel %vm1006, %v1647, 0
        %1654 = vmatprep.subr.bf16.mxu0 0
        %1655 = vmatpush1.bf16.msra.mxu0 %v1652
        %1656 = vmatprep.subr.bf16.mxu0 0
        %1657 = vmatpush1.bf16.msra.mxu0 0
        %1658 = vmatprep.subr.bf16.mxu0 0
        %1659 = vmatpush1.bf16.msra.mxu0 0
        %1660 = vmatprep.subr.bf16.mxu0 0
        %1661 = vmatpush1.bf16.msra.mxu0 0
        %1662 = vmatprep.subr.bf16.mxu0 0
        %1663 = vmatpush1.bf16.msra.mxu0 0
        %1664 = vmatprep.subr.bf16.mxu0 0
        %1665 = vmatpush1.bf16.msra.mxu0 0
        %1666 = vmatprep.subr.bf16.mxu0 0
        %1667 = vmatpush1.bf16.msra.mxu0 0
        %1668 = vmatprep.subr.bf16.mxu0 0
        %1669 = vmatpush1.bf16.msra.mxu0 0
        %1670 = vmatprep.subr.bf16.mxu0 0
        %1671 = vmatpush1.bf16.msra.mxu0 0
        %1672 = vmatprep.subr.bf16.mxu0 0
        %1673 = vmatpush1.bf16.msra.mxu0 0
        %1674 = vmatprep.subr.bf16.mxu0 0
        %1675 = vmatpush1.bf16.msra.mxu0 0
        %1676 = vmatprep.subr.bf16.mxu0 0
        %1677 = vmatpush1.bf16.msra.mxu0 0
        %1678 = vmatprep.subr.bf16.mxu0 0
        %1679 = vmatpush1.bf16.msra.mxu0 0
        %1680 = vmatprep.subr.bf16.mxu0 0
        %1681 = vmatpush1.bf16.msra.mxu0 0
        %1682 = vmatprep.subr.bf16.mxu0 0
        %1683 = vmatpush1.bf16.msra.mxu0 0
        %1684 = vmatprep.subr.bf16.mxu0 0
        %1685 = vmatpush1.bf16.msra.mxu0 0
        %1686 = vmatprep.mubr.bf16.mxu0 0
        %1687 = vmatmul.mubr.bf16.gmra.mrb[0].mxu0 %v1649
        %v1688 = vpop.f32.mrb[0].mxu0
        %v1689 = vadd.f32 0.0, %v1688
        %v1690 = vpop.f32.mrb[0].mxu0
        %v1691 = vpop.f32.mrb[0].mxu0
        %v1692 = vadd.f32 0.0, %v1691
        %v1693 = vpop.f32.mrb[0].mxu0
        %1694 = vdwg.mxu0
        %v1695 = vadd.f32 %v1417, %v1689
        %v1696 = vadd.f32 %v1420, %v1692
        %1697 = vrot.lane.b32.xlu0 %v876, 104
        %v1698 = vpop.permute.xlu0 %1697
        %1699 = vrot.lane.b32.xlu0 %v878, 104
        %v1700 = vpop.permute.xlu0 %1699
        %v1702 = vsel %vm882, %v1698, 0
        %v1705 = vsel %vm882, %v1700, 0
        %1707 = vmatprep.subr.bf16.mxu0 0
        %1708 = vmatpush1.bf16.xpose.msra.mxu0 %v1705
        %1709 = vmatprep.subr.bf16.mxu0 0
        %1710 = vmatpush1.bf16.xpose.msra.mxu0 0
        %1711 = vmatprep.subr.bf16.mxu0 0
        %1712 = vmatpush1.bf16.xpose.msra.mxu0 0
        %1713 = vmatprep.subr.bf16.mxu0 0
        %1714 = vmatpush1.bf16.xpose.msra.mxu0 0
        %1715 = vmatprep.subr.bf16.mxu0 0
        %1716 = vmatpush1.bf16.xpose.msra.mxu0 0
        %1717 = vmatprep.subr.bf16.mxu0 0
        %1718 = vmatpush1.bf16.xpose.msra.mxu0 0
        %1719 = vmatprep.subr.bf16.mxu0 0
        %1720 = vmatpush1.bf16.xpose.msra.mxu0 0
        %1721 = vmatprep.subr.bf16.mxu0 0
        %1722 = vmatpush1.bf16.xpose.msra.mxu0 0
        %1723 = vmatprep.subr.bf16.mxu0 0
        %1724 = vmatpush1.bf16.xpose.msra.mxu0 0
        %1725 = vmatprep.subr.bf16.mxu0 0
        %1726 = vmatpush1.bf16.xpose.msra.mxu0 0
        %1727 = vmatprep.subr.bf16.mxu0 0
        %1728 = vmatpush1.bf16.xpose.msra.mxu0 0
        %1729 = vmatprep.subr.bf16.mxu0 0
        %1730 = vmatpush1.bf16.xpose.msra.mxu0 0
        %1731 = vmatprep.subr.bf16.mxu0 0
        %1732 = vmatpush1.bf16.xpose.msra.mxu0 0
        %1733 = vmatprep.subr.bf16.mxu0 0
        %1734 = vmatpush1.bf16.xpose.msra.mxu0 0
        %1735 = vmatprep.subr.bf16.mxu0 0
        %1736 = vmatpush1.bf16.xpose.msra.mxu0 0
        %1737 = vmatprep.subr.bf16.mxu0 0
        %1738 = vmatpush1.bf16.xpose.msra.mxu0 0
        %1739 = vmatprep.mubr.bf16.mxu0 0
        %1740 = vmatmul.mubr.bf16.gmra.mrb[0].mxu0 %v1702
        %v1741 = vpop.f32.mrb[0].mxu0
        %v1742 = vadd.f32 0.0, %v1741
        %v1743 = vpop.f32.mrb[0].mxu0
        %v1744 = vpop.f32.mrb[0].mxu0
        %v1745 = vpop.f32.mrb[0].mxu0
        %1746 = vdwg.mxu0
        %1747 = vrot.lane.b32.xlu0 %v877, 104
        %v1748 = vpop.permute.xlu0 %1747
        %1749 = vrot.lane.b32.xlu0 %v879, 104
        %v1750 = vpop.permute.xlu0 %1749
        %v1752 = vsel %vm882, %v1748, 0
        %v1755 = vsel %vm882, %v1750, 0
        %1757 = vmatprep.subr.bf16.mxu0 0
        %1758 = vmatpush1.bf16.xpose.msra.mxu0 %v1755
        %1759 = vmatprep.subr.bf16.mxu0 0
        %1760 = vmatpush1.bf16.xpose.msra.mxu0 0
        %1761 = vmatprep.subr.bf16.mxu0 0
        %1762 = vmatpush1.bf16.xpose.msra.mxu0 0
        %1763 = vmatprep.subr.bf16.mxu0 0
        %1764 = vmatpush1.bf16.xpose.msra.mxu0 0
        %1765 = vmatprep.subr.bf16.mxu0 0
        %1766 = vmatpush1.bf16.xpose.msra.mxu0 0
        %1767 = vmatprep.subr.bf16.mxu0 0
        %1768 = vmatpush1.bf16.xpose.msra.mxu0 0
        %1769 = vmatprep.subr.bf16.mxu0 0
        %1770 = vmatpush1.bf16.xpose.msra.mxu0 0
        %1771 = vmatprep.subr.bf16.mxu0 0
        %1772 = vmatpush1.bf16.xpose.msra.mxu0 0
        %1773 = vmatprep.subr.bf16.mxu0 0
        %1774 = vmatpush1.bf16.xpose.msra.mxu0 0
        %1775 = vmatprep.subr.bf16.mxu0 0
        %1776 = vmatpush1.bf16.xpose.msra.mxu0 0
        %1777 = vmatprep.subr.bf16.mxu0 0
        %1778 = vmatpush1.bf16.xpose.msra.mxu0 0
        %1779 = vmatprep.subr.bf16.mxu0 0
        %1780 = vmatpush1.bf16.xpose.msra.mxu0 0
        %1781 = vmatprep.subr.bf16.mxu0 0
        %1782 = vmatpush1.bf16.xpose.msra.mxu0 0
        %1783 = vmatprep.subr.bf16.mxu0 0
        %1784 = vmatpush1.bf16.xpose.msra.mxu0 0
        %1785 = vmatprep.subr.bf16.mxu0 0
        %1786 = vmatpush1.bf16.xpose.msra.mxu0 0
        %1787 = vmatprep.subr.bf16.mxu0 0
        %1788 = vmatpush1.bf16.xpose.msra.mxu0 0
        %1789 = vmatprep.mubr.bf16.mxu0 0
        %1790 = vmatmul.mubr.bf16.gmra.mrb[0].mxu0 %v1752
        %v1791 = vpop.f32.mrb[0].mxu0
        %v1792 = vadd.f32 0.0, %v1791
        %v1793 = vpop.f32.mrb[0].mxu0
        %v1794 = vpop.f32.mrb[0].mxu0
        %v1795 = vpop.f32.mrb[0].mxu0
        %1796 = vdwg.mxu0
        %v1797 = vsel %vm975, -1e+20, %v1742
        %v1798 = vsel %vm976, -1e+20, %v1792
        %v1799 = vsel %vm882, %v1797, -inf
        %1800 = vmax.xlane.f32.xlu0 %v1799
        %v1801 = vpop.xlane.xlu0 %1800
        %v1802 = vsel %vm882, %v1798, -inf
        %1803 = vmax.xlane.f32.xlu0 %v1802
        %v1804 = vpop.xlane.xlu0 %1803
        %v1805 = vsub.f32 %v1797, %v1801
        %v1806 = vsub.f32 %v1798, %v1804
        %v1807 = vmul.f32 %v1805, 1.442695
        %v1808 = vpow.pop %v1807
        %v1809 = vmul.f32 %v1806, 1.442695
        %v1810 = vpow.pop %v1809
        %v1811 = vsel %vm882, %v1808, 0.0
        %1812 = vadd.xlane.f32.xlu0 %v1811
        %v1813 = vpop.xlane.xlu0 %1812
        %v1814 = vsel %vm882, %v1810, 0.0
        %1815 = vadd.xlane.f32.xlu0 %v1814
        %v1816 = vpop.xlane.xlu0 %1815
        %v1817 = vrcp.pop %v1813
        %v1818 = vrcp.pop %v1816
        %v1819 = vmul.f32 %v1808, %v1817
        %v1820 = vmul.f32 %v1810, %v1818
        %v1821 = vpack.c.bf16 %v1819, %v1819
        %v1822 = vpack.c.bf16 %v1820, %v1820
        %1823 = vrot.lane.b32.xlu0 %v880, 104
        %v1824 = vpop.permute.xlu0 %1823
        %v1826 = vsel %vm882, %v1821, 0
        %v1829 = vsel %vm1006, %v1824, 0
        %1831 = vmatprep.subr.bf16.mxu0 0
        %1832 = vmatpush1.bf16.msra.mxu0 %v1829
        %1833 = vmatprep.subr.bf16.mxu0 0
        %1834 = vmatpush1.bf16.msra.mxu0 0
        %1835 = vmatprep.subr.bf16.mxu0 0
        %1836 = vmatpush1.bf16.msra.mxu0 0
        %1837 = vmatprep.subr.bf16.mxu0 0
        %1838 = vmatpush1.bf16.msra.mxu0 0
        %1839 = vmatprep.subr.bf16.mxu0 0
        %1840 = vmatpush1.bf16.msra.mxu0 0
        %1841 = vmatprep.subr.bf16.mxu0 0
        %1842 = vmatpush1.bf16.msra.mxu0 0
        %1843 = vmatprep.subr.bf16.mxu0 0
        %1844 = vmatpush1.bf16.msra.mxu0 0
        %1845 = vmatprep.subr.bf16.mxu0 0
        %1846 = vmatpush1.bf16.msra.mxu0 0
        %1847 = vmatprep.subr.bf16.mxu0 0
        %1848 = vmatpush1.bf16.msra.mxu0 0
        %1849 = vmatprep.subr.bf16.mxu0 0
        %1850 = vmatpush1.bf16.msra.mxu0 0
        %1851 = vmatprep.subr.bf16.mxu0 0
        %1852 = vmatpush1.bf16.msra.mxu0 0
        %1853 = vmatprep.subr.bf16.mxu0 0
        %1854 = vmatpush1.bf16.msra.mxu0 0
        %1855 = vmatprep.subr.bf16.mxu0 0
        %1856 = vmatpush1.bf16.msra.mxu0 0
        %1857 = vmatprep.subr.bf16.mxu0 0
        %1858 = vmatpush1.bf16.msra.mxu0 0
        %1859 = vmatprep.subr.bf16.mxu0 0
        %1860 = vmatpush1.bf16.msra.mxu0 0
        %1861 = vmatprep.subr.bf16.mxu0 0
        %1862 = vmatpush1.bf16.msra.mxu0 0
        %1863 = vmatprep.mubr.bf16.mxu0 0
        %1864 = vmatmul.mubr.bf16.gmra.mrb[0].mxu0 %v1826
        %v1865 = vpop.f32.mrb[0].mxu0
        %v1866 = vadd.f32 0.0, %v1865
        %v1867 = vpop.f32.mrb[0].mxu0
        %v1868 = vpop.f32.mrb[0].mxu0
        %v1869 = vpop.f32.mrb[0].mxu0
        %1870 = vdwg.mxu0
        %1871 = vrot.lane.b32.xlu0 %v881, 104
        %v1872 = vpop.permute.xlu0 %1871
        %v1874 = vsel %vm882, %v1822, 0
        %v1877 = vsel %vm1006, %v1872, 0
        %1879 = vmatprep.subr.bf16.mxu0 0
        %1880 = vmatpush1.bf16.msra.mxu0 %v1877
        %1881 = vmatprep.subr.bf16.mxu0 0
        %1882 = vmatpush1.bf16.msra.mxu0 0
        %1883 = vmatprep.subr.bf16.mxu0 0
        %1884 = vmatpush1.bf16.msra.mxu0 0
        %1885 = vmatprep.subr.bf16.mxu0 0
        %1886 = vmatpush1.bf16.msra.mxu0 0
        %1887 = vmatprep.subr.bf16.mxu0 0
        %1888 = vmatpush1.bf16.msra.mxu0 0
        %1889 = vmatprep.subr.bf16.mxu0 0
        %1890 = vmatpush1.bf16.msra.mxu0 0
        %1891 = vmatprep.subr.bf16.mxu0 0
        %1892 = vmatpush1.bf16.msra.mxu0 0
        %1893 = vmatprep.subr.bf16.mxu0 0
        %1894 = vmatpush1.bf16.msra.mxu0 0
        %1895 = vmatprep.subr.bf16.mxu0 0
        %1896 = vmatpush1.bf16.msra.mxu0 0
        %1897 = vmatprep.subr.bf16.mxu0 0
        %1898 = vmatpush1.bf16.msra.mxu0 0
        %1899 = vmatprep.subr.bf16.mxu0 0
        %1900 = vmatpush1.bf16.msra.mxu0 0
        %1901 = vmatprep.subr.bf16.mxu0 0
        %1902 = vmatpush1.bf16.msra.mxu0 0
        %1903 = vmatprep.subr.bf16.mxu0 0
        %1904 = vmatpush1.bf16.msra.mxu0 0
        %1905 = vmatprep.subr.bf16.mxu0 0
        %1906 = vmatpush1.bf16.msra.mxu0 0
        %1907 = vmatprep.subr.bf16.mxu0 0
        %1908 = vmatpush1.bf16.msra.mxu0 0
        %1909 = vmatprep.subr.bf16.mxu0 0
        %1910 = vmatpush1.bf16.msra.mxu0 0
        %1911 = vmatprep.mubr.bf16.mxu0 0
        %1912 = vmatmul.mubr.bf16.gmra.mrb[0].mxu0 %v1874
        %v1913 = vpop.f32.mrb[0].mxu0
        %v1914 = vadd.f32 0.0, %v1913
        %v1915 = vpop.f32.mrb[0].mxu0
        %v1916 = vpop.f32.mrb[0].mxu0
        %v1917 = vpop.f32.mrb[0].mxu0
        %1918 = vdwg.mxu0
        %v1919 = vpack.c.bf16 %v1914, %v1866
        %s1920 = scalar_lea.vmem [#allocation11], 12
        %v1921 = vld [vmem:[%s1920] sm:$0xf]
        %v1923 = vsel %vm882, %v1919, 0
        %v1926 = vsel %vm1006, %v1921, 0
        %1928 = vmatprep.subr.bf16.mxu0 0
        %1929 = vmatpush1.bf16.msra.mxu0 %v1926
        %1930 = vmatprep.subr.bf16.mxu0 0
        %1931 = vmatpush1.bf16.msra.mxu0 0
        %1932 = vmatprep.subr.bf16.mxu0 0
        %1933 = vmatpush1.bf16.msra.mxu0 0
        %1934 = vmatprep.subr.bf16.mxu0 0
        %1935 = vmatpush1.bf16.msra.mxu0 0
        %1936 = vmatprep.subr.bf16.mxu0 0
        %1937 = vmatpush1.bf16.msra.mxu0 0
        %1938 = vmatprep.subr.bf16.mxu0 0
        %1939 = vmatpush1.bf16.msra.mxu0 0
        %1940 = vmatprep.subr.bf16.mxu0 0
        %1941 = vmatpush1.bf16.msra.mxu0 0
        %1942 = vmatprep.subr.bf16.mxu0 0
        %1943 = vmatpush1.bf16.msra.mxu0 0
        %1944 = vmatprep.subr.bf16.mxu0 0
        %1945 = vmatpush1.bf16.msra.mxu0 0
        %1946 = vmatprep.subr.bf16.mxu0 0
        %1947 = vmatpush1.bf16.msra.mxu0 0
        %1948 = vmatprep.subr.bf16.mxu0 0
        %1949 = vmatpush1.bf16.msra.mxu0 0
        %1950 = vmatprep.subr.bf16.mxu0 0
        %1951 = vmatpush1.bf16.msra.mxu0 0
        %1952 = vmatprep.subr.bf16.mxu0 0
        %1953 = vmatpush1.bf16.msra.mxu0 0
        %1954 = vmatprep.subr.bf16.mxu0 0
        %1955 = vmatpush1.bf16.msra.mxu0 0
        %1956 = vmatprep.subr.bf16.mxu0 0
        %1957 = vmatpush1.bf16.msra.mxu0 0
        %1958 = vmatprep.subr.bf16.mxu0 0
        %1959 = vmatpush1.bf16.msra.mxu0 0
        %1960 = vmatprep.mubr.bf16.mxu0 0
        %1961 = vmatmul.mubr.bf16.gmra.mrb[0].mxu0 %v1923
        %v1962 = vpop.f32.mrb[0].mxu0
        %v1963 = vadd.f32 0.0, %v1962
        %v1964 = vpop.f32.mrb[0].mxu0
        %v1965 = vpop.f32.mrb[0].mxu0
        %v1966 = vadd.f32 0.0, %v1965
        %v1967 = vpop.f32.mrb[0].mxu0
        %1968 = vdwg.mxu0
        %v1969 = vadd.f32 %v1695, %v1963
        %v1970 = vadd.f32 %v1696, %v1966
        %v1971 = vlaneseq
        %v1972 = vshrl.u32 %v1971, 7
        %v1973 = vsub.s32 0, %v1972
        %v1974 = vrot.slane %v696, %v1973
        %v1975 = vadd.f32 %v1969, %v1974
        %v1976 = vadd.f32 %v1970, %v1974
        %v1977 = vadd.f32 %v1975, %v678
        %v1978 = vadd.f32 %v1976, %v679
        %v1979 = vsel %vm715, %v1977, 0.0
        %1980 = vadd.xlane.f32.xlu0 %v1979
        %v1981 = vpop.xlane.xlu0 %1980
        %v1982 = vsel %vm715, %v1978, 0.0
        %1983 = vadd.xlane.f32.xlu0 %v1982
        %v1984 = vpop.xlane.xlu0 %1983
        %v1985 = vrcp.pop 32.0
        %v1986 = vmul.f32 %v1981, %v1985
        %v1987 = vmul.f32 %v1984, %v1985
        %v1988 = vsub.f32 %v1977, %v1986
        %v1989 = vsub.f32 %v1978, %v1987
        %v1990 = vmul.f32 %v1988, %v1988
        %v1991 = vmul.f32 %v1989, %v1989
        %v1992 = vsel %vm715, %v1990, 0.0
        %1993 = vadd.xlane.f32.xlu0 %v1992
        %v1994 = vpop.xlane.xlu0 %1993
        %v1995 = vsel %vm715, %v1991, 0.0
        %1996 = vadd.xlane.f32.xlu0 %v1995
        %v1997 = vpop.xlane.xlu0 %1996
        %v1998 = vmul.f32 %v1994, %v1985
        %v1999 = vmul.f32 %v1997, %v1985
        %v2000 = vadd.f32 %v1998, 1e-05
        %v2001 = vadd.f32 %v1999, 1e-05
        %v2002 = vrsqrt.pop %v2000
        %v2003 = vrsqrt.pop %v2001
        %v2004 = vmul.f32 %v1988, %v2002
        %v2005 = vmul.f32 %v1989, %v2003
        %v2006 = vlaneseq
        %v2007 = vshrl.u32 %v2006, 7
        %v2008 = vsub.s32 1, %v2007
        %v2009 = vrot.slane %v696, %v2008
        %v2010 = vmul.f32 %v2004, %v2009
        %v2011 = vmul.f32 %v2005, %v2009
        %v2012 = vlaneseq
        %v2013 = vshrl.u32 %v2012, 7
        %v2014 = vsub.s32 2, %v2013
        %v2015 = vrot.slane %v696, %v2014
        %v2016 = vadd.f32 %v2010, %v2015
        %v2017 = vadd.f32 %v2011, %v2015
        %v2018 = vpack.c.bf16 %v2017, %v2016
        %v2019 = vpack.c.bf16 %v683, %v682
        %v2020 = vpack.c.bf16 %v681, %v680
        %v2021 = vld [vmem:[%s7] sm:$0xf]
        %v2022 = vld [vmem:[%s7 + $0x4] sm:$0xf]
        %v2023 = vld [vmem:[%s7 + $0x8] sm:$0xf]
        %v2024 = vld [vmem:[%s7 + $0xc] sm:$0xf]
        %v2029 = vunpack.c.l.b16 %v2021
        %v2030 = vunpack.c.l.b16 %v2022
        %v2031 = vunpack.c.l.b16 %v2023
        %v2032 = vunpack.c.l.b16 %v2024
        %v2033 = vpack.c.b16 %v2030, %v2029
        %v2034 = vpack.c.b16 %v2032, %v2031
        %v2038 = vsel %vm715, %v2018, 0
        %2040 = vmatprep.subr.bf16.mxu0 0
        %2041 = vmatpush1.bf16.msra.mxu0 %v2033
        %2042 = vmatprep.subr.bf16.mxu0 0
        %2043 = vmatpush1.bf16.msra.mxu0 %v2034
        %2044 = vmatprep.subr.bf16.mxu0 0
        %2045 = vmatpush1.bf16.msra.mxu0 0
        %2046 = vmatprep.subr.bf16.mxu0 0
        %2047 = vmatpush1.bf16.msra.mxu0 0
        %2048 = vmatprep.subr.bf16.mxu0 0
        %2049 = vmatpush1.bf16.msra.mxu0 0
        %2050 = vmatprep.subr.bf16.mxu0 0
        %2051 = vmatpush1.bf16.msra.mxu0 0
        %2052 = vmatprep.subr.bf16.mxu0 0
        %2053 = vmatpush1.bf16.msra.mxu0 0
        %2054 = vmatprep.subr.bf16.mxu0 0
        %2055 = vmatpush1.bf16.msra.mxu0 0
        %2056 = vmatprep.subr.bf16.mxu0 0
        %2057 = vmatpush1.bf16.msra.mxu0 0
        %2058 = vmatprep.subr.bf16.mxu0 0
        %2059 = vmatpush1.bf16.msra.mxu0 0
        %2060 = vmatprep.subr.bf16.mxu0 0
        %2061 = vmatpush1.bf16.msra.mxu0 0
        %2062 = vmatprep.subr.bf16.mxu0 0
        %2063 = vmatpush1.bf16.msra.mxu0 0
        %2064 = vmatprep.subr.bf16.mxu0 0
        %2065 = vmatpush1.bf16.msra.mxu0 0
        %2066 = vmatprep.subr.bf16.mxu0 0
        %2067 = vmatpush1.bf16.msra.mxu0 0
        %2068 = vmatprep.subr.bf16.mxu0 0
        %2069 = vmatpush1.bf16.msra.mxu0 0
        %2070 = vmatprep.subr.bf16.mxu0 0
        %2071 = vmatpush1.bf16.msra.mxu0 0
        %2072 = vmatprep.mubr.bf16.mxu0 0
        %2073 = vmatmul.mubr.bf16.gmra.mrb[0].mxu0 %v2038
        %v2074 = vpop.f32.mrb[0].mxu0
        %v2075 = vadd.f32 0.0, %v2074
        %v2076 = vpop.f32.mrb[0].mxu0
        %v2077 = vpop.f32.mrb[0].mxu0
        %v2078 = vadd.f32 0.0, %v2077
        %v2079 = vpop.f32.mrb[0].mxu0
        %2080 = vdwg.mxu0
        %s2081 = scalar_lea.vmem %s7, 16
        %v2082 = vld [vmem:[%s2081] sm:$0xf]
        %v2083 = vld [vmem:[%s2081 + $0x4] sm:$0xf]
        %v2084 = vld [vmem:[%s2081 + $0x8] sm:$0xf]
        %v2085 = vld [vmem:[%s2081 + $0xc] sm:$0xf]
        %v2090 = vunpack.c.l.b16 %v2082
        %v2091 = vunpack.c.l.b16 %v2083
        %v2092 = vunpack.c.l.b16 %v2084
        %v2093 = vunpack.c.l.b16 %v2085
        %v2094 = vpack.c.b16 %v2091, %v2090
        %v2095 = vpack.c.b16 %v2093, %v2092
        %v2099 = vsel %vm715, %v2019, 0
        %2101 = vmatprep.subr.bf16.mxu0 0
        %2102 = vmatpush1.bf16.msra.mxu0 %v2094
        %2103 = vmatprep.subr.bf16.mxu0 0
        %2104 = vmatpush1.bf16.msra.mxu0 %v2095
        %2105 = vmatprep.subr.bf16.mxu0 0
        %2106 = vmatpush1.bf16.msra.mxu0 0
        %2107 = vmatprep.subr.bf16.mxu0 0
        %2108 = vmatpush1.bf16.msra.mxu0 0
        %2109 = vmatprep.subr.bf16.mxu0 0
        %2110 = vmatpush1.bf16.msra.mxu0 0
        %2111 = vmatprep.subr.bf16.mxu0 0
        %2112 = vmatpush1.bf16.msra.mxu0 0
        %2113 = vmatprep.subr.bf16.mxu0 0
        %2114 = vmatpush1.bf16.msra.mxu0 0
        %2115 = vmatprep.subr.bf16.mxu0 0
        %2116 = vmatpush1.bf16.msra.mxu0 0
        %2117 = vmatprep.subr.bf16.mxu0 0
        %2118 = vmatpush1.bf16.msra.mxu0 0
        %2119 = vmatprep.subr.bf16.mxu0 0
        %2120 = vmatpush1.bf16.msra.mxu0 0
        %2121 = vmatprep.subr.bf16.mxu0 0
        %2122 = vmatpush1.bf16.msra.mxu0 0
        %2123 = vmatprep.subr.bf16.mxu0 0
        %2124 = vmatpush1.bf16.msra.mxu0 0
        %2125 = vmatprep.subr.bf16.mxu0 0
        %2126 = vmatpush1.bf16.msra.mxu0 0
        %2127 = vmatprep.subr.bf16.mxu0 0
        %2128 = vmatpush1.bf16.msra.mxu0 0
        %2129 = vmatprep.subr.bf16.mxu0 0
        %2130 = vmatpush1.bf16.msra.mxu0 0
        %2131 = vmatprep.subr.bf16.mxu0 0
        %2132 = vmatpush1.bf16.msra.mxu0 0
        %2133 = vmatprep.mubr.bf16.mxu0 0
        %2134 = vmatmul.mubr.bf16.gmra.mrb[0].mxu0 %v2099
        %v2135 = vpop.f32.mrb[0].mxu0
        %v2136 = vadd.f32 0.0, %v2135
        %v2137 = vpop.f32.mrb[0].mxu0
        %v2138 = vpop.f32.mrb[0].mxu0
        %v2139 = vadd.f32 0.0, %v2138
        %v2140 = vpop.f32.mrb[0].mxu0
        %2141 = vdwg.mxu0
        %s2142 = scalar_lea.vmem %s7, 32
        %v2143 = vld [vmem:[%s2142] sm:$0xf]
        %v2144 = vld [vmem:[%s2142 + $0x4] sm:$0xf]
        %v2145 = vld [vmem:[%s2142 + $0x8] sm:$0xf]
        %v2146 = vld [vmem:[%s2142 + $0xc] sm:$0xf]
        %v2151 = vunpack.c.l.b16 %v2143
        %v2152 = vunpack.c.l.b16 %v2144
        %v2153 = vunpack.c.l.b16 %v2145
        %v2154 = vunpack.c.l.b16 %v2146
        %v2155 = vpack.c.b16 %v2152, %v2151
        %v2156 = vpack.c.b16 %v2154, %v2153
        %v2160 = vsel %vm715, %v2020, 0
        %2162 = vmatprep.subr.bf16.mxu0 0
        %2163 = vmatpush1.bf16.msra.mxu0 %v2155
        %2164 = vmatprep.subr.bf16.mxu0 0
        %2165 = vmatpush1.bf16.msra.mxu0 %v2156
        %2166 = vmatprep.subr.bf16.mxu0 0
        %2167 = vmatpush1.bf16.msra.mxu0 0
        %2168 = vmatprep.subr.bf16.mxu0 0
        %2169 = vmatpush1.bf16.msra.mxu0 0
        %2170 = vmatprep.subr.bf16.mxu0 0
        %2171 = vmatpush1.bf16.msra.mxu0 0
        %2172 = vmatprep.subr.bf16.mxu0 0
        %2173 = vmatpush1.bf16.msra.mxu0 0
        %2174 = vmatprep.subr.bf16.mxu0 0
        %2175 = vmatpush1.bf16.msra.mxu0 0
        %2176 = vmatprep.subr.bf16.mxu0 0
        %2177 = vmatpush1.bf16.msra.mxu0 0
        %2178 = vmatprep.subr.bf16.mxu0 0
        %2179 = vmatpush1.bf16.msra.mxu0 0
        %2180 = vmatprep.subr.bf16.mxu0 0
        %2181 = vmatpush1.bf16.msra.mxu0 0
        %2182 = vmatprep.subr.bf16.mxu0 0
        %2183 = vmatpush1.bf16.msra.mxu0 0
        %2184 = vmatprep.subr.bf16.mxu0 0
        %2185 = vmatpush1.bf16.msra.mxu0 0
        %2186 = vmatprep.subr.bf16.mxu0 0
        %2187 = vmatpush1.bf16.msra.mxu0 0
        %2188 = vmatprep.subr.bf16.mxu0 0
        %2189 = vmatpush1.bf16.msra.mxu0 0
        %2190 = vmatprep.subr.bf16.mxu0 0
        %2191 = vmatpush1.bf16.msra.mxu0 0
        %2192 = vmatprep.subr.bf16.mxu0 0
        %2193 = vmatpush1.bf16.msra.mxu0 0
        %2194 = vmatprep.mubr.bf16.mxu0 0
        %2195 = vmatmul.mubr.bf16.gmra.mrb[0].mxu0 %v2160
        %v2196 = vpop.f32.mrb[0].mxu0
        %v2197 = vadd.f32 0.0, %v2196
        %v2198 = vpop.f32.mrb[0].mxu0
        %v2199 = vpop.f32.mrb[0].mxu0
        %v2200 = vadd.f32 0.0, %v2199
        %v2201 = vpop.f32.mrb[0].mxu0
        %2202 = vdwg.mxu0
        %v2203 = vpack.c.bf16 %v2075, %v2075
        %v2204 = vpack.c.bf16 %v2078, %v2078
        %v2205 = vpack.c.bf16 %v2136, %v2136
        %v2206 = vpack.c.bf16 %v2139, %v2139
        %v2207 = vpack.c.bf16 %v2197, %v2197
        %v2208 = vpack.c.bf16 %v2200, %v2200
        %v2210 = vsel %vm882, %v2203, 0
        %v2213 = vsel %vm882, %v2205, 0
        %2215 = vmatprep.subr.bf16.mxu0 0
        %2216 = vmatpush1.bf16.xpose.msra.mxu0 %v2213
        %2217 = vmatprep.subr.bf16.mxu0 0
        %2218 = vmatpush1.bf16.xpose.msra.mxu0 0
        %2219 = vmatprep.subr.bf16.mxu0 0
        %2220 = vmatpush1.bf16.xpose.msra.mxu0 0
        %2221 = vmatprep.subr.bf16.mxu0 0
        %2222 = vmatpush1.bf16.xpose.msra.mxu0 0
        %2223 = vmatprep.subr.bf16.mxu0 0
        %2224 = vmatpush1.bf16.xpose.msra.mxu0 0
        %2225 = vmatprep.subr.bf16.mxu0 0
        %2226 = vmatpush1.bf16.xpose.msra.mxu0 0
        %2227 = vmatprep.subr.bf16.mxu0 0
        %2228 = vmatpush1.bf16.xpose.msra.mxu0 0
        %2229 = vmatprep.subr.bf16.mxu0 0
        %2230 = vmatpush1.bf16.xpose.msra.mxu0 0
        %2231 = vmatprep.subr.bf16.mxu0 0
        %2232 = vmatpush1.bf16.xpose.msra.mxu0 0
        %2233 = vmatprep.subr.bf16.mxu0 0
        %2234 = vmatpush1.bf16.xpose.msra.mxu0 0
        %2235 = vmatprep.subr.bf16.mxu0 0
        %2236 = vmatpush1.bf16.xpose.msra.mxu0 0
        %2237 = vmatprep.subr.bf16.mxu0 0
        %2238 = vmatpush1.bf16.xpose.msra.mxu0 0
        %2239 = vmatprep.subr.bf16.mxu0 0
        %2240 = vmatpush1.bf16.xpose.msra.mxu0 0
        %2241 = vmatprep.subr.bf16.mxu0 0
        %2242 = vmatpush1.bf16.xpose.msra.mxu0 0
        %2243 = vmatprep.subr.bf16.mxu0 0
        %2244 = vmatpush1.bf16.xpose.msra.mxu0 0
        %2245 = vmatprep.subr.bf16.mxu0 0
        %2246 = vmatpush1.bf16.xpose.msra.mxu0 0
        %2247 = vmatprep.mubr.bf16.mxu0 0
        %2248 = vmatmul.mubr.bf16.gmra.mrb[0].mxu0 %v2210
        %v2249 = vpop.f32.mrb[0].mxu0
        %v2250 = vadd.f32 0.0, %v2249
        %v2251 = vpop.f32.mrb[0].mxu0
        %v2252 = vpop.f32.mrb[0].mxu0
        %v2253 = vpop.f32.mrb[0].mxu0
        %2254 = vdwg.mxu0
        %v2256 = vsel %vm882, %v2204, 0
        %v2259 = vsel %vm882, %v2206, 0
        %2261 = vmatprep.subr.bf16.mxu0 0
        %2262 = vmatpush1.bf16.xpose.msra.mxu0 %v2259
        %2263 = vmatprep.subr.bf16.mxu0 0
        %2264 = vmatpush1.bf16.xpose.msra.mxu0 0
        %2265 = vmatprep.subr.bf16.mxu0 0
        %2266 = vmatpush1.bf16.xpose.msra.mxu0 0
        %2267 = vmatprep.subr.bf16.mxu0 0
        %2268 = vmatpush1.bf16.xpose.msra.mxu0 0
        %2269 = vmatprep.subr.bf16.mxu0 0
        %2270 = vmatpush1.bf16.xpose.msra.mxu0 0
        %2271 = vmatprep.subr.bf16.mxu0 0
        %2272 = vmatpush1.bf16.xpose.msra.mxu0 0
        %2273 = vmatprep.subr.bf16.mxu0 0
        %2274 = vmatpush1.bf16.xpose.msra.mxu0 0
        %2275 = vmatprep.subr.bf16.mxu0 0
        %2276 = vmatpush1.bf16.xpose.msra.mxu0 0
        %2277 = vmatprep.subr.bf16.mxu0 0
        %2278 = vmatpush1.bf16.xpose.msra.mxu0 0
        %2279 = vmatprep.subr.bf16.mxu0 0
        %2280 = vmatpush1.bf16.xpose.msra.mxu0 0
        %2281 = vmatprep.subr.bf16.mxu0 0
        %2282 = vmatpush1.bf16.xpose.msra.mxu0 0
        %2283 = vmatprep.subr.bf16.mxu0 0
        %2284 = vmatpush1.bf16.xpose.msra.mxu0 0
        %2285 = vmatprep.subr.bf16.mxu0 0
        %2286 = vmatpush1.bf16.xpose.msra.mxu0 0
        %2287 = vmatprep.subr.bf16.mxu0 0
        %2288 = vmatpush1.bf16.xpose.msra.mxu0 0
        %2289 = vmatprep.subr.bf16.mxu0 0
        %2290 = vmatpush1.bf16.xpose.msra.mxu0 0
        %2291 = vmatprep.subr.bf16.mxu0 0
        %2292 = vmatpush1.bf16.xpose.msra.mxu0 0
        %2293 = vmatprep.mubr.bf16.mxu0 0
        %2294 = vmatmul.mubr.bf16.gmra.mrb[0].mxu0 %v2256
        %v2295 = vpop.f32.mrb[0].mxu0
        %v2296 = vadd.f32 0.0, %v2295
        %v2297 = vpop.f32.mrb[0].mxu0
        %v2298 = vpop.f32.mrb[0].mxu0
        %v2299 = vpop.f32.mrb[0].mxu0
        %2300 = vdwg.mxu0
        %vm2301 = vcmp.eq.f32.partialorder %v688, 0.0
        %vm2302 = vcmp.eq.f32.partialorder %v689, 0.0
        %v2303 = vsel %vm2301, -1e+20, %v2250
        %v2304 = vsel %vm2302, -1e+20, %v2296
        %v2305 = vsel %vm882, %v2303, -inf
        %2306 = vmax.xlane.f32.xlu0 %v2305
        %v2307 = vpop.xlane.xlu0 %2306
        %v2308 = vsel %vm882, %v2304, -inf
        %2309 = vmax.xlane.f32.xlu0 %v2308
        %v2310 = vpop.xlane.xlu0 %2309
        %v2311 = vsub.f32 %v2303, %v2307
        %v2312 = vsub.f32 %v2304, %v2310
        %v2313 = vmul.f32 %v2311, 1.442695
        %v2314 = vpow.pop %v2313
        %v2315 = vmul.f32 %v2312, 1.442695
        %v2316 = vpow.pop %v2315
        %v2317 = vsel %vm882, %v2314, 0.0
        %2318 = vadd.xlane.f32.xlu0 %v2317
        %v2319 = vpop.xlane.xlu0 %2318
        %v2320 = vsel %vm882, %v2316, 0.0
        %2321 = vadd.xlane.f32.xlu0 %v2320
        %v2322 = vpop.xlane.xlu0 %2321
        %v2323 = vrcp.pop %v2319
        %v2324 = vrcp.pop %v2322
        %v2325 = vmul.f32 %v2314, %v2323
        %v2326 = vmul.f32 %v2316, %v2324
        %v2327 = vpack.c.bf16 %v2325, %v2325
        %v2328 = vpack.c.bf16 %v2326, %v2326
        %v2330 = vsel %vm882, %v2327, 0
        %v2333 = vsel %vm1006, %v2207, 0
        %2335 = vmatprep.subr.bf16.mxu0 0
        %2336 = vmatpush1.bf16.msra.mxu0 %v2333
        %2337 = vmatprep.subr.bf16.mxu0 0
        %2338 = vmatpush1.bf16.msra.mxu0 0
        %2339 = vmatprep.subr.bf16.mxu0 0
        %2340 = vmatpush1.bf16.msra.mxu0 0
        %2341 = vmatprep.subr.bf16.mxu0 0
        %2342 = vmatpush1.bf16.msra.mxu0 0
        %2343 = vmatprep.subr.bf16.mxu0 0
        %2344 = vmatpush1.bf16.msra.mxu0 0
        %2345 = vmatprep.subr.bf16.mxu0 0
        %2346 = vmatpush1.bf16.msra.mxu0 0
        %2347 = vmatprep.subr.bf16.mxu0 0
        %2348 = vmatpush1.bf16.msra.mxu0 0
        %2349 = vmatprep.subr.bf16.mxu0 0
        %2350 = vmatpush1.bf16.msra.mxu0 0
        %2351 = vmatprep.subr.bf16.mxu0 0
        %2352 = vmatpush1.bf16.msra.mxu0 0
        %2353 = vmatprep.subr.bf16.mxu0 0
        %2354 = vmatpush1.bf16.msra.mxu0 0
        %2355 = vmatprep.subr.bf16.mxu0 0
        %2356 = vmatpush1.bf16.msra.mxu0 0
        %2357 = vmatprep.subr.bf16.mxu0 0
        %2358 = vmatpush1.bf16.msra.mxu0 0
        %2359 = vmatprep.subr.bf16.mxu0 0
        %2360 = vmatpush1.bf16.msra.mxu0 0
        %2361 = vmatprep.subr.bf16.mxu0 0
        %2362 = vmatpush1.bf16.msra.mxu0 0
        %2363 = vmatprep.subr.bf16.mxu0 0
        %2364 = vmatpush1.bf16.msra.mxu0 0
        %2365 = vmatprep.subr.bf16.mxu0 0
        %2366 = vmatpush1.bf16.msra.mxu0 0
        %2367 = vmatprep.mubr.bf16.mxu0 0
        %2368 = vmatmul.mubr.bf16.gmra.mrb[0].mxu0 %v2330
        %v2369 = vpop.f32.mrb[0].mxu0
        %v2370 = vadd.f32 0.0, %v2369
        %v2371 = vpop.f32.mrb[0].mxu0
        %v2372 = vpop.f32.mrb[0].mxu0
        %v2373 = vpop.f32.mrb[0].mxu0
        %2374 = vdwg.mxu0
        %v2376 = vsel %vm882, %v2328, 0
        %v2379 = vsel %vm1006, %v2208, 0
        %2381 = vmatprep.subr.bf16.mxu0 0
        %2382 = vmatpush1.bf16.msra.mxu0 %v2379
        %2383 = vmatprep.subr.bf16.mxu0 0
        %2384 = vmatpush1.bf16.msra.mxu0 0
        %2385 = vmatprep.subr.bf16.mxu0 0
        %2386 = vmatpush1.bf16.msra.mxu0 0
        %2387 = vmatprep.subr.bf16.mxu0 0
        %2388 = vmatpush1.bf16.msra.mxu0 0
        %2389 = vmatprep.subr.bf16.mxu0 0
        %2390 = vmatpush1.bf16.msra.mxu0 0
        %2391 = vmatprep.subr.bf16.mxu0 0
        %2392 = vmatpush1.bf16.msra.mxu0 0
        %2393 = vmatprep.subr.bf16.mxu0 0
        %2394 = vmatpush1.bf16.msra.mxu0 0
        %2395 = vmatprep.subr.bf16.mxu0 0
        %2396 = vmatpush1.bf16.msra.mxu0 0
        %2397 = vmatprep.subr.bf16.mxu0 0
        %2398 = vmatpush1.bf16.msra.mxu0 0
        %2399 = vmatprep.subr.bf16.mxu0 0
        %2400 = vmatpush1.bf16.msra.mxu0 0
        %2401 = vmatprep.subr.bf16.mxu0 0
        %2402 = vmatpush1.bf16.msra.mxu0 0
        %2403 = vmatprep.subr.bf16.mxu0 0
        %2404 = vmatpush1.bf16.msra.mxu0 0
        %2405 = vmatprep.subr.bf16.mxu0 0
        %2406 = vmatpush1.bf16.msra.mxu0 0
        %2407 = vmatprep.subr.bf16.mxu0 0
        %2408 = vmatpush1.bf16.msra.mxu0 0
        %2409 = vmatprep.subr.bf16.mxu0 0
        %2410 = vmatpush1.bf16.msra.mxu0 0
        %2411 = vmatprep.subr.bf16.mxu0 0
        %2412 = vmatpush1.bf16.msra.mxu0 0
        %2413 = vmatprep.mubr.bf16.mxu0 0
        %2414 = vmatmul.mubr.bf16.gmra.mrb[0].mxu0 %v2376
        %v2415 = vpop.f32.mrb[0].mxu0
        %v2416 = vadd.f32 0.0, %v2415
        %v2417 = vpop.f32.mrb[0].mxu0
        %v2418 = vpop.f32.mrb[0].mxu0
        %v2419 = vpop.f32.mrb[0].mxu0
        %2420 = vdwg.mxu0
        %v2421 = vpack.c.bf16 %v2416, %v2370
        %v2422 = vld [vmem:[#allocation13] sm:$0xf]
        %2424 = vrot.lane.b32.xlu0 %v2203, 120
        %v2425 = vpop.permute.xlu0 %2424
        %2427 = vrot.lane.b32.xlu0 %v2205, 120
        %v2428 = vpop.permute.xlu0 %2427
        %v2430 = vsel %vm882, %v2425, 0
        %v2433 = vsel %vm882, %v2428, 0
        %2435 = vmatprep.subr.bf16.mxu0 0
        %2436 = vmatpush1.bf16.xpose.msra.mxu0 %v2433
        %2437 = vmatprep.subr.bf16.mxu0 0
        %2438 = vmatpush1.bf16.xpose.msra.mxu0 0
        %2439 = vmatprep.subr.bf16.mxu0 0
        %2440 = vmatpush1.bf16.xpose.msra.mxu0 0
        %2441 = vmatprep.subr.bf16.mxu0 0
        %2442 = vmatpush1.bf16.xpose.msra.mxu0 0
        %2443 = vmatprep.subr.bf16.mxu0 0
        %2444 = vmatpush1.bf16.xpose.msra.mxu0 0
        %2445 = vmatprep.subr.bf16.mxu0 0
        %2446 = vmatpush1.bf16.xpose.msra.mxu0 0
        %2447 = vmatprep.subr.bf16.mxu0 0
        %2448 = vmatpush1.bf16.xpose.msra.mxu0 0
        %2449 = vmatprep.subr.bf16.mxu0 0
        %2450 = vmatpush1.bf16.xpose.msra.mxu0 0
        %2451 = vmatprep.subr.bf16.mxu0 0
        %2452 = vmatpush1.bf16.xpose.msra.mxu0 0
        %2453 = vmatprep.subr.bf16.mxu0 0
        %2454 = vmatpush1.bf16.xpose.msra.mxu0 0
        %2455 = vmatprep.subr.bf16.mxu0 0
        %2456 = vmatpush1.bf16.xpose.msra.mxu0 0
        %2457 = vmatprep.subr.bf16.mxu0 0
        %2458 = vmatpush1.bf16.xpose.msra.mxu0 0
        %2459 = vmatprep.subr.bf16.mxu0 0
        %2460 = vmatpush1.bf16.xpose.msra.mxu0 0
        %2461 = vmatprep.subr.bf16.mxu0 0
        %2462 = vmatpush1.bf16.xpose.msra.mxu0 0
        %2463 = vmatprep.subr.bf16.mxu0 0
        %2464 = vmatpush1.bf16.xpose.msra.mxu0 0
        %2465 = vmatprep.subr.bf16.mxu0 0
        %2466 = vmatpush1.bf16.xpose.msra.mxu0 0
        %2467 = vmatprep.mubr.bf16.mxu0 0
        %2468 = vmatmul.mubr.bf16.gmra.mrb[0].mxu0 %v2430
        %v2469 = vpop.f32.mrb[0].mxu0
        %v2470 = vadd.f32 0.0, %v2469
        %v2471 = vpop.f32.mrb[0].mxu0
        %v2472 = vpop.f32.mrb[0].mxu0
        %v2473 = vpop.f32.mrb[0].mxu0
        %2474 = vdwg.mxu0
        %2476 = vrot.lane.b32.xlu0 %v2204, 120
        %v2477 = vpop.permute.xlu0 %2476
        %2479 = vrot.lane.b32.xlu0 %v2206, 120
        %v2480 = vpop.permute.xlu0 %2479
        %v2482 = vsel %vm882, %v2477, 0
        %v2485 = vsel %vm882, %v2480, 0
        %2487 = vmatprep.subr.bf16.mxu0 0
        %2488 = vmatpush1.bf16.xpose.msra.mxu0 %v2485
        %2489 = vmatprep.subr.bf16.mxu0 0
        %2490 = vmatpush1.bf16.xpose.msra.mxu0 0
        %2491 = vmatprep.subr.bf16.mxu0 0
        %2492 = vmatpush1.bf16.xpose.msra.mxu0 0
        %2493 = vmatprep.subr.bf16.mxu0 0
        %2494 = vmatpush1.bf16.xpose.msra.mxu0 0
        %2495 = vmatprep.subr.bf16.mxu0 0
        %2496 = vmatpush1.bf16.xpose.msra.mxu0 0
        %2497 = vmatprep.subr.bf16.mxu0 0
        %2498 = vmatpush1.bf16.xpose.msra.mxu0 0
        %2499 = vmatprep.subr.bf16.mxu0 0
        %2500 = vmatpush1.bf16.xpose.msra.mxu0 0
        %2501 = vmatprep.subr.bf16.mxu0 0
        %2502 = vmatpush1.bf16.xpose.msra.mxu0 0
        %2503 = vmatprep.subr.bf16.mxu0 0
        %2504 = vmatpush1.bf16.xpose.msra.mxu0 0
        %2505 = vmatprep.subr.bf16.mxu0 0
        %2506 = vmatpush1.bf16.xpose.msra.mxu0 0
        %2507 = vmatprep.subr.bf16.mxu0 0
        %2508 = vmatpush1.bf16.xpose.msra.mxu0 0
        %2509 = vmatprep.subr.bf16.mxu0 0
        %2510 = vmatpush1.bf16.xpose.msra.mxu0 0
        %2511 = vmatprep.subr.bf16.mxu0 0
        %2512 = vmatpush1.bf16.xpose.msra.mxu0 0
        %2513 = vmatprep.subr.bf16.mxu0 0
        %2514 = vmatpush1.bf16.xpose.msra.mxu0 0
        %2515 = vmatprep.subr.bf16.mxu0 0
        %2516 = vmatpush1.bf16.xpose.msra.mxu0 0
        %2517 = vmatprep.subr.bf16.mxu0 0
        %2518 = vmatpush1.bf16.xpose.msra.mxu0 0
        %2519 = vmatprep.mubr.bf16.mxu0 0
        %2520 = vmatmul.mubr.bf16.gmra.mrb[0].mxu0 %v2482
        %v2521 = vpop.f32.mrb[0].mxu0
        %v2522 = vadd.f32 0.0, %v2521
        %v2523 = vpop.f32.mrb[0].mxu0
        %v2524 = vpop.f32.mrb[0].mxu0
        %v2525 = vpop.f32.mrb[0].mxu0
        %2526 = vdwg.mxu0
        %v2527 = vsel %vm2301, -1e+20, %v2470
        %v2528 = vsel %vm2302, -1e+20, %v2522
        %v2529 = vsel %vm882, %v2527, -inf
        %2530 = vmax.xlane.f32.xlu0 %v2529
        %v2531 = vpop.xlane.xlu0 %2530
        %v2532 = vsel %vm882, %v2528, -inf
        %2533 = vmax.xlane.f32.xlu0 %v2532
        %v2534 = vpop.xlane.xlu0 %2533
        %v2535 = vsub.f32 %v2527, %v2531
        %v2536 = vsub.f32 %v2528, %v2534
        %v2537 = vmul.f32 %v2535, 1.442695
        %v2538 = vpow.pop %v2537
        %v2539 = vmul.f32 %v2536, 1.442695
        %v2540 = vpow.pop %v2539
        %v2541 = vsel %vm882, %v2538, 0.0
        %2542 = vadd.xlane.f32.xlu0 %v2541
        %v2543 = vpop.xlane.xlu0 %2542
        %v2544 = vsel %vm882, %v2540, 0.0
        %2545 = vadd.xlane.f32.xlu0 %v2544
        %v2546 = vpop.xlane.xlu0 %2545
        %v2547 = vrcp.pop %v2543
        %v2548 = vrcp.pop %v2546
        %v2549 = vmul.f32 %v2538, %v2547
        %v2550 = vmul.f32 %v2540, %v2548
        %v2551 = vpack.c.bf16 %v2549, %v2549
        %v2552 = vpack.c.bf16 %v2550, %v2550
        %2554 = vrot.lane.b32.xlu0 %v2207, 120
        %v2555 = vpop.permute.xlu0 %2554
        %v2557 = vsel %vm882, %v2551, 0
        %v2560 = vsel %vm1006, %v2555, 0
        %2562 = vmatprep.subr.bf16.mxu0 0
        %2563 = vmatpush1.bf16.msra.mxu0 %v2560
        %2564 = vmatprep.subr.bf16.mxu0 0
        %2565 = vmatpush1.bf16.msra.mxu0 0
        %2566 = vmatprep.subr.bf16.mxu0 0
        %2567 = vmatpush1.bf16.msra.mxu0 0
        %2568 = vmatprep.subr.bf16.mxu0 0
        %2569 = vmatpush1.bf16.msra.mxu0 0
        %2570 = vmatprep.subr.bf16.mxu0 0
        %2571 = vmatpush1.bf16.msra.mxu0 0
        %2572 = vmatprep.subr.bf16.mxu0 0
        %2573 = vmatpush1.bf16.msra.mxu0 0
        %2574 = vmatprep.subr.bf16.mxu0 0
        %2575 = vmatpush1.bf16.msra.mxu0 0
        %2576 = vmatprep.subr.bf16.mxu0 0
        %2577 = vmatpush1.bf16.msra.mxu0 0
        %2578 = vmatprep.subr.bf16.mxu0 0
        %2579 = vmatpush1.bf16.msra.mxu0 0
        %2580 = vmatprep.subr.bf16.mxu0 0
        %2581 = vmatpush1.bf16.msra.mxu0 0
        %2582 = vmatprep.subr.bf16.mxu0 0
        %2583 = vmatpush1.bf16.msra.mxu0 0
        %2584 = vmatprep.subr.bf16.mxu0 0
        %2585 = vmatpush1.bf16.msra.mxu0 0
        %2586 = vmatprep.subr.bf16.mxu0 0
        %2587 = vmatpush1.bf16.msra.mxu0 0
        %2588 = vmatprep.subr.bf16.mxu0 0
        %2589 = vmatpush1.bf16.msra.mxu0 0
        %2590 = vmatprep.subr.bf16.mxu0 0
        %2591 = vmatpush1.bf16.msra.mxu0 0
        %2592 = vmatprep.subr.bf16.mxu0 0
        %2593 = vmatpush1.bf16.msra.mxu0 0
        %2594 = vmatprep.mubr.bf16.mxu0 0
        %2595 = vmatmul.mubr.bf16.gmra.mrb[0].mxu0 %v2557
        %v2596 = vpop.f32.mrb[0].mxu0
        %v2597 = vadd.f32 0.0, %v2596
        %v2598 = vpop.f32.mrb[0].mxu0
        %v2599 = vpop.f32.mrb[0].mxu0
        %v2600 = vpop.f32.mrb[0].mxu0
        %2601 = vdwg.mxu0
        %2603 = vrot.lane.b32.xlu0 %v2208, 120
        %v2604 = vpop.permute.xlu0 %2603
        %v2606 = vsel %vm882, %v2552, 0
        %v2609 = vsel %vm1006, %v2604, 0
        %2611 = vmatprep.subr.bf16.mxu0 0
        %2612 = vmatpush1.bf16.msra.mxu0 %v2609
        %2613 = vmatprep.subr.bf16.mxu0 0
        %2614 = vmatpush1.bf16.msra.mxu0 0
        %2615 = vmatprep.subr.bf16.mxu0 0
        %2616 = vmatpush1.bf16.msra.mxu0 0
        %2617 = vmatprep.subr.bf16.mxu0 0
        %2618 = vmatpush1.bf16.msra.mxu0 0
        %2619 = vmatprep.subr.bf16.mxu0 0
        %2620 = vmatpush1.bf16.msra.mxu0 0
        %2621 = vmatprep.subr.bf16.mxu0 0
        %2622 = vmatpush1.bf16.msra.mxu0 0
        %2623 = vmatprep.subr.bf16.mxu0 0
        %2624 = vmatpush1.bf16.msra.mxu0 0
        %2625 = vmatprep.subr.bf16.mxu0 0
        %2626 = vmatpush1.bf16.msra.mxu0 0
        %2627 = vmatprep.subr.bf16.mxu0 0
        %2628 = vmatpush1.bf16.msra.mxu0 0
        %2629 = vmatprep.subr.bf16.mxu0 0
        %2630 = vmatpush1.bf16.msra.mxu0 0
        %2631 = vmatprep.subr.bf16.mxu0 0
        %2632 = vmatpush1.bf16.msra.mxu0 0
        %2633 = vmatprep.subr.bf16.mxu0 0
        %2634 = vmatpush1.bf16.msra.mxu0 0
        %2635 = vmatprep.subr.bf16.mxu0 0
        %2636 = vmatpush1.bf16.msra.mxu0 0
        %2637 = vmatprep.subr.bf16.mxu0 0
        %2638 = vmatpush1.bf16.msra.mxu0 0
        %2639 = vmatprep.subr.bf16.mxu0 0
        %2640 = vmatpush1.bf16.msra.mxu0 0
        %2641 = vmatprep.subr.bf16.mxu0 0
        %2642 = vmatpush1.bf16.msra.mxu0 0
        %2643 = vmatprep.mubr.bf16.mxu0 0
        %2644 = vmatmul.mubr.bf16.gmra.mrb[0].mxu0 %v2606
        %v2645 = vpop.f32.mrb[0].mxu0
        %v2646 = vadd.f32 0.0, %v2645
        %v2647 = vpop.f32.mrb[0].mxu0
        %v2648 = vpop.f32.mrb[0].mxu0
        %v2649 = vpop.f32.mrb[0].mxu0
        %2650 = vdwg.mxu0
        %v2651 = vpack.c.bf16 %v2646, %v2597
        %s2652 = scalar_lea.vmem [#allocation13], 4
        %v2653 = vld [vmem:[%s2652] sm:$0xf]
        %v2655 = vsel %vm882, %v2651, 0
        %v2658 = vsel %vm1006, %v2653, 0
        %2660 = vmatprep.subr.bf16.mxu0 0
        %2661 = vmatpush1.bf16.msra.mxu0 %v2658
        %2662 = vmatprep.subr.bf16.mxu0 0
        %2663 = vmatpush1.bf16.msra.mxu0 0
        %2664 = vmatprep.subr.bf16.mxu0 0
        %2665 = vmatpush1.bf16.msra.mxu0 0
        %2666 = vmatprep.subr.bf16.mxu0 0
        %2667 = vmatpush1.bf16.msra.mxu0 0
        %2668 = vmatprep.subr.bf16.mxu0 0
        %2669 = vmatpush1.bf16.msra.mxu0 0
        %2670 = vmatprep.subr.bf16.mxu0 0
        %2671 = vmatpush1.bf16.msra.mxu0 0
        %2672 = vmatprep.subr.bf16.mxu0 0
        %2673 = vmatpush1.bf16.msra.mxu0 0
        %2674 = vmatprep.subr.bf16.mxu0 0
        %2675 = vmatpush1.bf16.msra.mxu0 0
        %2676 = vmatprep.subr.bf16.mxu0 0
        %2677 = vmatpush1.bf16.msra.mxu0 0
        %2678 = vmatprep.subr.bf16.mxu0 0
        %2679 = vmatpush1.bf16.msra.mxu0 0
        %2680 = vmatprep.subr.bf16.mxu0 0
        %2681 = vmatpush1.bf16.msra.mxu0 0
        %2682 = vmatprep.subr.bf16.mxu0 0
        %2683 = vmatpush1.bf16.msra.mxu0 0
        %2684 = vmatprep.subr.bf16.mxu0 0
        %2685 = vmatpush1.bf16.msra.mxu0 0
        %2686 = vmatprep.subr.bf16.mxu0 0
        %2687 = vmatpush1.bf16.msra.mxu0 0
        %2688 = vmatprep.subr.bf16.mxu0 0
        %2689 = vmatpush1.bf16.msra.mxu0 0
        %2690 = vmatprep.subr.bf16.mxu0 0
        %2691 = vmatpush1.bf16.msra.mxu0 0
        %2692 = vmatprep.mubr.bf16.mxu0 0
        %2693 = vmatmul.mubr.bf16.gmra.mrb[0].mxu0 %v2655
        %v2694 = vpop.f32.mrb[0].mxu0
        %v2695 = vadd.f32 0.0, %v2694
        %v2696 = vpop.f32.mrb[0].mxu0
        %v2697 = vpop.f32.mrb[0].mxu0
        %v2698 = vadd.f32 0.0, %v2697
        %v2699 = vpop.f32.mrb[0].mxu0
        %2700 = vdwg.mxu0
        %v2702 = vsel %vm882, %v2421, 0
        %v2705 = vsel %vm1006, %v2422, 0
        %2707 = vmatprep.subr.bf16.mxu0 0
        %2708 = vmatpush1.bf16.msra.mxu0 %v2705
        %2709 = vmatprep.subr.bf16.mxu0 0
        %2710 = vmatpush1.bf16.msra.mxu0 0
        %2711 = vmatprep.subr.bf16.mxu0 0
        %2712 = vmatpush1.bf16.msra.mxu0 0
        %2713 = vmatprep.subr.bf16.mxu0 0
        %2714 = vmatpush1.bf16.msra.mxu0 0
        %2715 = vmatprep.subr.bf16.mxu0 0
        %2716 = vmatpush1.bf16.msra.mxu0 0
        %2717 = vmatprep.subr.bf16.mxu0 0
        %2718 = vmatpush1.bf16.msra.mxu0 0
        %2719 = vmatprep.subr.bf16.mxu0 0
        %2720 = vmatpush1.bf16.msra.mxu0 0
        %2721 = vmatprep.subr.bf16.mxu0 0
        %2722 = vmatpush1.bf16.msra.mxu0 0
        %2723 = vmatprep.subr.bf16.mxu0 0
        %2724 = vmatpush1.bf16.msra.mxu0 0
        %2725 = vmatprep.subr.bf16.mxu0 0
        %2726 = vmatpush1.bf16.msra.mxu0 0
        %2727 = vmatprep.subr.bf16.mxu0 0
        %2728 = vmatpush1.bf16.msra.mxu0 0
        %2729 = vmatprep.subr.bf16.mxu0 0
        %2730 = vmatpush1.bf16.msra.mxu0 0
        %2731 = vmatprep.subr.bf16.mxu0 0
        %2732 = vmatpush1.bf16.msra.mxu0 0
        %2733 = vmatprep.subr.bf16.mxu0 0
        %2734 = vmatpush1.bf16.msra.mxu0 0
        %2735 = vmatprep.subr.bf16.mxu0 0
        %2736 = vmatpush1.bf16.msra.mxu0 0
        %2737 = vmatprep.subr.bf16.mxu0 0
        %2738 = vmatpush1.bf16.msra.mxu0 0
        %2739 = vmatprep.mubr.bf16.mxu0 0
        %2740 = vmatmul.mubr.bf16.gmra.mrb[0].mxu0 %v2702
        %v2741 = vpop.f32.mrb[0].mxu0
        %v2742 = vadd.f32 %v2695, %v2741
        %v2743 = vpop.f32.mrb[0].mxu0
        %v2744 = vpop.f32.mrb[0].mxu0
        %v2745 = vadd.f32 %v2698, %v2744
        %v2746 = vpop.f32.mrb[0].mxu0
        %2747 = vdwg.mxu0
        %2748 = vrot.lane.b32.xlu0 %v2203, 112
        %v2749 = vpop.permute.xlu0 %2748
        %2750 = vrot.lane.b32.xlu0 %v2205, 112
        %v2751 = vpop.permute.xlu0 %2750
        %v2753 = vsel %vm882, %v2749, 0
        %v2756 = vsel %vm882, %v2751, 0
        %2758 = vmatprep.subr.bf16.mxu0 0
        %2759 = vmatpush1.bf16.xpose.msra.mxu0 %v2756
        %2760 = vmatprep.subr.bf16.mxu0 0
        %2761 = vmatpush1.bf16.xpose.msra.mxu0 0
        %2762 = vmatprep.subr.bf16.mxu0 0
        %2763 = vmatpush1.bf16.xpose.msra.mxu0 0
        %2764 = vmatprep.subr.bf16.mxu0 0
        %2765 = vmatpush1.bf16.xpose.msra.mxu0 0
        %2766 = vmatprep.subr.bf16.mxu0 0
        %2767 = vmatpush1.bf16.xpose.msra.mxu0 0
        %2768 = vmatprep.subr.bf16.mxu0 0
        %2769 = vmatpush1.bf16.xpose.msra.mxu0 0
        %2770 = vmatprep.subr.bf16.mxu0 0
        %2771 = vmatpush1.bf16.xpose.msra.mxu0 0
        %2772 = vmatprep.subr.bf16.mxu0 0
        %2773 = vmatpush1.bf16.xpose.msra.mxu0 0
        %2774 = vmatprep.subr.bf16.mxu0 0
        %2775 = vmatpush1.bf16.xpose.msra.mxu0 0
        %2776 = vmatprep.subr.bf16.mxu0 0
        %2777 = vmatpush1.bf16.xpose.msra.mxu0 0
        %2778 = vmatprep.subr.bf16.mxu0 0
        %2779 = vmatpush1.bf16.xpose.msra.mxu0 0
        %2780 = vmatprep.subr.bf16.mxu0 0
        %2781 = vmatpush1.bf16.xpose.msra.mxu0 0
        %2782 = vmatprep.subr.bf16.mxu0 0
        %2783 = vmatpush1.bf16.xpose.msra.mxu0 0
        %2784 = vmatprep.subr.bf16.mxu0 0
        %2785 = vmatpush1.bf16.xpose.msra.mxu0 0
        %2786 = vmatprep.subr.bf16.mxu0 0
        %2787 = vmatpush1.bf16.xpose.msra.mxu0 0
        %2788 = vmatprep.subr.bf16.mxu0 0
        %2789 = vmatpush1.bf16.xpose.msra.mxu0 0
        %2790 = vmatprep.mubr.bf16.mxu0 0
        %2791 = vmatmul.mubr.bf16.gmra.mrb[0].mxu0 %v2753
        %v2792 = vpop.f32.mrb[0].mxu0
        %v2793 = vadd.f32 0.0, %v2792
        %v2794 = vpop.f32.mrb[0].mxu0
        %v2795 = vpop.f32.mrb[0].mxu0
        %v2796 = vpop.f32.mrb[0].mxu0
        %2797 = vdwg.mxu0
        %2798 = vrot.lane.b32.xlu0 %v2204, 112
        %v2799 = vpop.permute.xlu0 %2798
        %2800 = vrot.lane.b32.xlu0 %v2206, 112
        %v2801 = vpop.permute.xlu0 %2800
        %v2803 = vsel %vm882, %v2799, 0
        %v2806 = vsel %vm882, %v2801, 0
        %2808 = vmatprep.subr.bf16.mxu0 0
        %2809 = vmatpush1.bf16.xpose.msra.mxu0 %v2806
        %2810 = vmatprep.subr.bf16.mxu0 0
        %2811 = vmatpush1.bf16.xpose.msra.mxu0 0
        %2812 = vmatprep.subr.bf16.mxu0 0
        %2813 = vmatpush1.bf16.xpose.msra.mxu0 0
        %2814 = vmatprep.subr.bf16.mxu0 0
        %2815 = vmatpush1.bf16.xpose.msra.mxu0 0
        %2816 = vmatprep.subr.bf16.mxu0 0
        %2817 = vmatpush1.bf16.xpose.msra.mxu0 0
        %2818 = vmatprep.subr.bf16.mxu0 0
        %2819 = vmatpush1.bf16.xpose.msra.mxu0 0
        %2820 = vmatprep.subr.bf16.mxu0 0
        %2821 = vmatpush1.bf16.xpose.msra.mxu0 0
        %2822 = vmatprep.subr.bf16.mxu0 0
        %2823 = vmatpush1.bf16.xpose.msra.mxu0 0
        %2824 = vmatprep.subr.bf16.mxu0 0
        %2825 = vmatpush1.bf16.xpose.msra.mxu0 0
        %2826 = vmatprep.subr.bf16.mxu0 0
        %2827 = vmatpush1.bf16.xpose.msra.mxu0 0
        %2828 = vmatprep.subr.bf16.mxu0 0
        %2829 = vmatpush1.bf16.xpose.msra.mxu0 0
        %2830 = vmatprep.subr.bf16.mxu0 0
        %2831 = vmatpush1.bf16.xpose.msra.mxu0 0
        %2832 = vmatprep.subr.bf16.mxu0 0
        %2833 = vmatpush1.bf16.xpose.msra.mxu0 0
        %2834 = vmatprep.subr.bf16.mxu0 0
        %2835 = vmatpush1.bf16.xpose.msra.mxu0 0
        %2836 = vmatprep.subr.bf16.mxu0 0
        %2837 = vmatpush1.bf16.xpose.msra.mxu0 0
        %2838 = vmatprep.subr.bf16.mxu0 0
        %2839 = vmatpush1.bf16.xpose.msra.mxu0 0
        %2840 = vmatprep.mubr.bf16.mxu0 0
        %2841 = vmatmul.mubr.bf16.gmra.mrb[0].mxu0 %v2803
        %v2842 = vpop.f32.mrb[0].mxu0
        %v2843 = vadd.f32 0.0, %v2842
        %v2844 = vpop.f32.mrb[0].mxu0
        %v2845 = vpop.f32.mrb[0].mxu0
        %v2846 = vpop.f32.mrb[0].mxu0
        %2847 = vdwg.mxu0
        %v2848 = vsel %vm2301, -1e+20, %v2793
        %v2849 = vsel %vm2302, -1e+20, %v2843
        %v2850 = vsel %vm882, %v2848, -inf
        %2851 = vmax.xlane.f32.xlu0 %v2850
        %v2852 = vpop.xlane.xlu0 %2851
        %v2853 = vsel %vm882, %v2849, -inf
        %2854 = vmax.xlane.f32.xlu0 %v2853
        %v2855 = vpop.xlane.xlu0 %2854
        %v2856 = vsub.f32 %v2848, %v2852
        %v2857 = vsub.f32 %v2849, %v2855
        %v2858 = vmul.f32 %v2856, 1.442695
        %v2859 = vpow.pop %v2858
        %v2860 = vmul.f32 %v2857, 1.442695
        %v2861 = vpow.pop %v2860
        %v2862 = vsel %vm882, %v2859, 0.0
        %2863 = vadd.xlane.f32.xlu0 %v2862
        %v2864 = vpop.xlane.xlu0 %2863
        %v2865 = vsel %vm882, %v2861, 0.0
        %2866 = vadd.xlane.f32.xlu0 %v2865
        %v2867 = vpop.xlane.xlu0 %2866
        %v2868 = vrcp.pop %v2864
        %v2869 = vrcp.pop %v2867
        %v2870 = vmul.f32 %v2859, %v2868
        %v2871 = vmul.f32 %v2861, %v2869
        %v2872 = vpack.c.bf16 %v2870, %v2870
        %v2873 = vpack.c.bf16 %v2871, %v2871
        %2874 = vrot.lane.b32.xlu0 %v2207, 112
        %v2875 = vpop.permute.xlu0 %2874
        %v2877 = vsel %vm882, %v2872, 0
        %v2880 = vsel %vm1006, %v2875, 0
        %2882 = vmatprep.subr.bf16.mxu0 0
        %2883 = vmatpush1.bf16.msra.mxu0 %v2880
        %2884 = vmatprep.subr.bf16.mxu0 0
        %2885 = vmatpush1.bf16.msra.mxu0 0
        %2886 = vmatprep.subr.bf16.mxu0 0
        %2887 = vmatpush1.bf16.msra.mxu0 0
        %2888 = vmatprep.subr.bf16.mxu0 0
        %2889 = vmatpush1.bf16.msra.mxu0 0
        %2890 = vmatprep.subr.bf16.mxu0 0
        %2891 = vmatpush1.bf16.msra.mxu0 0
        %2892 = vmatprep.subr.bf16.mxu0 0
        %2893 = vmatpush1.bf16.msra.mxu0 0
        %2894 = vmatprep.subr.bf16.mxu0 0
        %2895 = vmatpush1.bf16.msra.mxu0 0
        %2896 = vmatprep.subr.bf16.mxu0 0
        %2897 = vmatpush1.bf16.msra.mxu0 0
        %2898 = vmatprep.subr.bf16.mxu0 0
        %2899 = vmatpush1.bf16.msra.mxu0 0
        %2900 = vmatprep.subr.bf16.mxu0 0
        %2901 = vmatpush1.bf16.msra.mxu0 0
        %2902 = vmatprep.subr.bf16.mxu0 0
        %2903 = vmatpush1.bf16.msra.mxu0 0
        %2904 = vmatprep.subr.bf16.mxu0 0
        %2905 = vmatpush1.bf16.msra.mxu0 0
        %2906 = vmatprep.subr.bf16.mxu0 0
        %2907 = vmatpush1.bf16.msra.mxu0 0
        %2908 = vmatprep.subr.bf16.mxu0 0
        %2909 = vmatpush1.bf16.msra.mxu0 0
        %2910 = vmatprep.subr.bf16.mxu0 0
        %2911 = vmatpush1.bf16.msra.mxu0 0
        %2912 = vmatprep.subr.bf16.mxu0 0
        %2913 = vmatpush1.bf16.msra.mxu0 0
        %2914 = vmatprep.mubr.bf16.mxu0 0
        %2915 = vmatmul.mubr.bf16.gmra.mrb[0].mxu0 %v2877
        %v2916 = vpop.f32.mrb[0].mxu0
        %v2917 = vadd.f32 0.0, %v2916
        %v2918 = vpop.f32.mrb[0].mxu0
        %v2919 = vpop.f32.mrb[0].mxu0
        %v2920 = vpop.f32.mrb[0].mxu0
        %2921 = vdwg.mxu0
        %2922 = vrot.lane.b32.xlu0 %v2208, 112
        %v2923 = vpop.permute.xlu0 %2922
        %v2925 = vsel %vm882, %v2873, 0
        %v2928 = vsel %vm1006, %v2923, 0
        %2930 = vmatprep.subr.bf16.mxu0 0
        %2931 = vmatpush1.bf16.msra.mxu0 %v2928
        %2932 = vmatprep.subr.bf16.mxu0 0
        %2933 = vmatpush1.bf16.msra.mxu0 0
        %2934 = vmatprep.subr.bf16.mxu0 0
        %2935 = vmatpush1.bf16.msra.mxu0 0
        %2936 = vmatprep.subr.bf16.mxu0 0
        %2937 = vmatpush1.bf16.msra.mxu0 0
        %2938 = vmatprep.subr.bf16.mxu0 0
        %2939 = vmatpush1.bf16.msra.mxu0 0
        %2940 = vmatprep.subr.bf16.mxu0 0
        %2941 = vmatpush1.bf16.msra.mxu0 0
        %2942 = vmatprep.subr.bf16.mxu0 0
        %2943 = vmatpush1.bf16.msra.mxu0 0
        %2944 = vmatprep.subr.bf16.mxu0 0
        %2945 = vmatpush1.bf16.msra.mxu0 0
        %2946 = vmatprep.subr.bf16.mxu0 0
        %2947 = vmatpush1.bf16.msra.mxu0 0
        %2948 = vmatprep.subr.bf16.mxu0 0
        %2949 = vmatpush1.bf16.msra.mxu0 0
        %2950 = vmatprep.subr.bf16.mxu0 0
        %2951 = vmatpush1.bf16.msra.mxu0 0
        %2952 = vmatprep.subr.bf16.mxu0 0
        %2953 = vmatpush1.bf16.msra.mxu0 0
        %2954 = vmatprep.subr.bf16.mxu0 0
        %2955 = vmatpush1.bf16.msra.mxu0 0
        %2956 = vmatprep.subr.bf16.mxu0 0
        %2957 = vmatpush1.bf16.msra.mxu0 0
        %2958 = vmatprep.subr.bf16.mxu0 0
        %2959 = vmatpush1.bf16.msra.mxu0 0
        %2960 = vmatprep.subr.bf16.mxu0 0
        %2961 = vmatpush1.bf16.msra.mxu0 0
        %2962 = vmatprep.mubr.bf16.mxu0 0
        %2963 = vmatmul.mubr.bf16.gmra.mrb[0].mxu0 %v2925
        %v2964 = vpop.f32.mrb[0].mxu0
        %v2965 = vadd.f32 0.0, %v2964
        %v2966 = vpop.f32.mrb[0].mxu0
        %v2967 = vpop.f32.mrb[0].mxu0
        %v2968 = vpop.f32.mrb[0].mxu0
        %2969 = vdwg.mxu0
        %v2970 = vpack.c.bf16 %v2965, %v2917
        %s2971 = scalar_lea.vmem [#allocation13], 8
        %v2972 = vld [vmem:[%s2971] sm:$0xf]
        %v2974 = vsel %vm882, %v2970, 0
        %v2977 = vsel %vm1006, %v2972, 0
        %2979 = vmatprep.subr.bf16.mxu0 0
        %2980 = vmatpush1.bf16.msra.mxu0 %v2977
        %2981 = vmatprep.subr.bf16.mxu0 0
        %2982 = vmatpush1.bf16.msra.mxu0 0
        %2983 = vmatprep.subr.bf16.mxu0 0
        %2984 = vmatpush1.bf16.msra.mxu0 0
        %2985 = vmatprep.subr.bf16.mxu0 0
        %2986 = vmatpush1.bf16.msra.mxu0 0
        %2987 = vmatprep.subr.bf16.mxu0 0
        %2988 = vmatpush1.bf16.msra.mxu0 0
        %2989 = vmatprep.subr.bf16.mxu0 0
        %2990 = vmatpush1.bf16.msra.mxu0 0
        %2991 = vmatprep.subr.bf16.mxu0 0
        %2992 = vmatpush1.bf16.msra.mxu0 0
        %2993 = vmatprep.subr.bf16.mxu0 0
        %2994 = vmatpush1.bf16.msra.mxu0 0
        %2995 = vmatprep.subr.bf16.mxu0 0
        %2996 = vmatpush1.bf16.msra.mxu0 0
        %2997 = vmatprep.subr.bf16.mxu0 0
        %2998 = vmatpush1.bf16.msra.mxu0 0
        %2999 = vmatprep.subr.bf16.mxu0 0
        %3000 = vmatpush1.bf16.msra.mxu0 0
        %3001 = vmatprep.subr.bf16.mxu0 0
        %3002 = vmatpush1.bf16.msra.mxu0 0
        %3003 = vmatprep.subr.bf16.mxu0 0
        %3004 = vmatpush1.bf16.msra.mxu0 0
        %3005 = vmatprep.subr.bf16.mxu0 0
        %3006 = vmatpush1.bf16.msra.mxu0 0
        %3007 = vmatprep.subr.bf16.mxu0 0
        %3008 = vmatpush1.bf16.msra.mxu0 0
        %3009 = vmatprep.subr.bf16.mxu0 0
        %3010 = vmatpush1.bf16.msra.mxu0 0
        %3011 = vmatprep.mubr.bf16.mxu0 0
        %3012 = vmatmul.mubr.bf16.gmra.mrb[0].mxu0 %v2974
        %v3013 = vpop.f32.mrb[0].mxu0
        %v3014 = vadd.f32 0.0, %v3013
        %v3015 = vpop.f32.mrb[0].mxu0
        %v3016 = vpop.f32.mrb[0].mxu0
        %v3017 = vadd.f32 0.0, %v3016
        %v3018 = vpop.f32.mrb[0].mxu0
        %3019 = vdwg.mxu0
        %v3020 = vadd.f32 %v2742, %v3014
        %v3021 = vadd.f32 %v2745, %v3017
        %3022 = vrot.lane.b32.xlu0 %v2203, 104
        %v3023 = vpop.permute.xlu0 %3022
        %3024 = vrot.lane.b32.xlu0 %v2205, 104
        %v3025 = vpop.permute.xlu0 %3024
        %v3027 = vsel %vm882, %v3023, 0
        %v3030 = vsel %vm882, %v3025, 0
        %3032 = vmatprep.subr.bf16.mxu0 0
        %3033 = vmatpush1.bf16.xpose.msra.mxu0 %v3030
        %3034 = vmatprep.subr.bf16.mxu0 0
        %3035 = vmatpush1.bf16.xpose.msra.mxu0 0
        %3036 = vmatprep.subr.bf16.mxu0 0
        %3037 = vmatpush1.bf16.xpose.msra.mxu0 0
        %3038 = vmatprep.subr.bf16.mxu0 0
        %3039 = vmatpush1.bf16.xpose.msra.mxu0 0
        %3040 = vmatprep.subr.bf16.mxu0 0
        %3041 = vmatpush1.bf16.xpose.msra.mxu0 0
        %3042 = vmatprep.subr.bf16.mxu0 0
        %3043 = vmatpush1.bf16.xpose.msra.mxu0 0
        %3044 = vmatprep.subr.bf16.mxu0 0
        %3045 = vmatpush1.bf16.xpose.msra.mxu0 0
        %3046 = vmatprep.subr.bf16.mxu0 0
        %3047 = vmatpush1.bf16.xpose.msra.mxu0 0
        %3048 = vmatprep.subr.bf16.mxu0 0
        %3049 = vmatpush1.bf16.xpose.msra.mxu0 0
        %3050 = vmatprep.subr.bf16.mxu0 0
        %3051 = vmatpush1.bf16.xpose.msra.mxu0 0
        %3052 = vmatprep.subr.bf16.mxu0 0
        %3053 = vmatpush1.bf16.xpose.msra.mxu0 0
        %3054 = vmatprep.subr.bf16.mxu0 0
        %3055 = vmatpush1.bf16.xpose.msra.mxu0 0
        %3056 = vmatprep.subr.bf16.mxu0 0
        %3057 = vmatpush1.bf16.xpose.msra.mxu0 0
        %3058 = vmatprep.subr.bf16.mxu0 0
        %3059 = vmatpush1.bf16.xpose.msra.mxu0 0
        %3060 = vmatprep.subr.bf16.mxu0 0
        %3061 = vmatpush1.bf16.xpose.msra.mxu0 0
        %3062 = vmatprep.subr.bf16.mxu0 0
        %3063 = vmatpush1.bf16.xpose.msra.mxu0 0
        %3064 = vmatprep.mubr.bf16.mxu0 0
        %3065 = vmatmul.mubr.bf16.gmra.mrb[0].mxu0 %v3027
        %v3066 = vpop.f32.mrb[0].mxu0
        %v3067 = vadd.f32 0.0, %v3066
        %v3068 = vpop.f32.mrb[0].mxu0
        %v3069 = vpop.f32.mrb[0].mxu0
        %v3070 = vpop.f32.mrb[0].mxu0
        %3071 = vdwg.mxu0
        %3072 = vrot.lane.b32.xlu0 %v2204, 104
        %v3073 = vpop.permute.xlu0 %3072
        %3074 = vrot.lane.b32.xlu0 %v2206, 104
        %v3075 = vpop.permute.xlu0 %3074
        %v3077 = vsel %vm882, %v3073, 0
        %v3080 = vsel %vm882, %v3075, 0
        %3082 = vmatprep.subr.bf16.mxu0 0
        %3083 = vmatpush1.bf16.xpose.msra.mxu0 %v3080
        %3084 = vmatprep.subr.bf16.mxu0 0
        %3085 = vmatpush1.bf16.xpose.msra.mxu0 0
        %3086 = vmatprep.subr.bf16.mxu0 0
        %3087 = vmatpush1.bf16.xpose.msra.mxu0 0
        %3088 = vmatprep.subr.bf16.mxu0 0
        %3089 = vmatpush1.bf16.xpose.msra.mxu0 0
        %3090 = vmatprep.subr.bf16.mxu0 0
        %3091 = vmatpush1.bf16.xpose.msra.mxu0 0
        %3092 = vmatprep.subr.bf16.mxu0 0
        %3093 = vmatpush1.bf16.xpose.msra.mxu0 0
        %3094 = vmatprep.subr.bf16.mxu0 0
        %3095 = vmatpush1.bf16.xpose.msra.mxu0 0
        %3096 = vmatprep.subr.bf16.mxu0 0
        %3097 = vmatpush1.bf16.xpose.msra.mxu0 0
        %3098 = vmatprep.subr.bf16.mxu0 0
        %3099 = vmatpush1.bf16.xpose.msra.mxu0 0
        %3100 = vmatprep.subr.bf16.mxu0 0
        %3101 = vmatpush1.bf16.xpose.msra.mxu0 0
        %3102 = vmatprep.subr.bf16.mxu0 0
        %3103 = vmatpush1.bf16.xpose.msra.mxu0 0
        %3104 = vmatprep.subr.bf16.mxu0 0
        %3105 = vmatpush1.bf16.xpose.msra.mxu0 0
        %3106 = vmatprep.subr.bf16.mxu0 0
        %3107 = vmatpush1.bf16.xpose.msra.mxu0 0
        %3108 = vmatprep.subr.bf16.mxu0 0
        %3109 = vmatpush1.bf16.xpose.msra.mxu0 0
        %3110 = vmatprep.subr.bf16.mxu0 0
        %3111 = vmatpush1.bf16.xpose.msra.mxu0 0
        %3112 = vmatprep.subr.bf16.mxu0 0
        %3113 = vmatpush1.bf16.xpose.msra.mxu0 0
        %3114 = vmatprep.mubr.bf16.mxu0 0
        %3115 = vmatmul.mubr.bf16.gmra.mrb[0].mxu0 %v3077
        %v3116 = vpop.f32.mrb[0].mxu0
        %v3117 = vadd.f32 0.0, %v3116
        %v3118 = vpop.f32.mrb[0].mxu0
        %v3119 = vpop.f32.mrb[0].mxu0
        %v3120 = vpop.f32.mrb[0].mxu0
        %3121 = vdwg.mxu0
        %v3122 = vsel %vm2301, -1e+20, %v3067
        %v3123 = vsel %vm2302, -1e+20, %v3117
        %v3124 = vsel %vm882, %v3122, -inf
        %3125 = vmax.xlane.f32.xlu0 %v3124
        %v3126 = vpop.xlane.xlu0 %3125
        %v3127 = vsel %vm882, %v3123, -inf
        %3128 = vmax.xlane.f32.xlu0 %v3127
        %v3129 = vpop.xlane.xlu0 %3128
        %v3130 = vsub.f32 %v3122, %v3126
        %v3131 = vsub.f32 %v3123, %v3129
        %v3132 = vmul.f32 %v3130, 1.442695
        %v3133 = vpow.pop %v3132
        %v3134 = vmul.f32 %v3131, 1.442695
        %v3135 = vpow.pop %v3134
        %v3136 = vsel %vm882, %v3133, 0.0
        %3137 = vadd.xlane.f32.xlu0 %v3136
        %v3138 = vpop.xlane.xlu0 %3137
        %v3139 = vsel %vm882, %v3135, 0.0
        %3140 = vadd.xlane.f32.xlu0 %v3139
        %v3141 = vpop.xlane.xlu0 %3140
        %v3142 = vrcp.pop %v3138
        %v3143 = vrcp.pop %v3141
        %v3144 = vmul.f32 %v3133, %v3142
        %v3145 = vmul.f32 %v3135, %v3143
        %v3146 = vpack.c.bf16 %v3144, %v3144
        %v3147 = vpack.c.bf16 %v3145, %v3145
        %3148 = vrot.lane.b32.xlu0 %v2207, 104
        %v3149 = vpop.permute.xlu0 %3148
        %v3151 = vsel %vm882, %v3146, 0
        %v3154 = vsel %vm1006, %v3149, 0
        %3156 = vmatprep.subr.bf16.mxu0 0
        %3157 = vmatpush1.bf16.msra.mxu0 %v3154
        %3158 = vmatprep.subr.bf16.mxu0 0
        %3159 = vmatpush1.bf16.msra.mxu0 0
        %3160 = vmatprep.subr.bf16.mxu0 0
        %3161 = vmatpush1.bf16.msra.mxu0 0
        %3162 = vmatprep.subr.bf16.mxu0 0
        %3163 = vmatpush1.bf16.msra.mxu0 0
        %3164 = vmatprep.subr.bf16.mxu0 0
        %3165 = vmatpush1.bf16.msra.mxu0 0
        %3166 = vmatprep.subr.bf16.mxu0 0
        %3167 = vmatpush1.bf16.msra.mxu0 0
        %3168 = vmatprep.subr.bf16.mxu0 0
        %3169 = vmatpush1.bf16.msra.mxu0 0
        %3170 = vmatprep.subr.bf16.mxu0 0
        %3171 = vmatpush1.bf16.msra.mxu0 0
        %3172 = vmatprep.subr.bf16.mxu0 0
        %3173 = vmatpush1.bf16.msra.mxu0 0
        %3174 = vmatprep.subr.bf16.mxu0 0
        %3175 = vmatpush1.bf16.msra.mxu0 0
        %3176 = vmatprep.subr.bf16.mxu0 0
        %3177 = vmatpush1.bf16.msra.mxu0 0
        %3178 = vmatprep.subr.bf16.mxu0 0
        %3179 = vmatpush1.bf16.msra.mxu0 0
        %3180 = vmatprep.subr.bf16.mxu0 0
        %3181 = vmatpush1.bf16.msra.mxu0 0
        %3182 = vmatprep.subr.bf16.mxu0 0
        %3183 = vmatpush1.bf16.msra.mxu0 0
        %3184 = vmatprep.subr.bf16.mxu0 0
        %3185 = vmatpush1.bf16.msra.mxu0 0
        %3186 = vmatprep.subr.bf16.mxu0 0
        %3187 = vmatpush1.bf16.msra.mxu0 0
        %3188 = vmatprep.mubr.bf16.mxu0 0
        %3189 = vmatmul.mubr.bf16.gmra.mrb[0].mxu0 %v3151
        %v3190 = vpop.f32.mrb[0].mxu0
        %v3191 = vadd.f32 0.0, %v3190
        %v3192 = vpop.f32.mrb[0].mxu0
        %v3193 = vpop.f32.mrb[0].mxu0
        %v3194 = vpop.f32.mrb[0].mxu0
        %3195 = vdwg.mxu0
        %3196 = vrot.lane.b32.xlu0 %v2208, 104
        %v3197 = vpop.permute.xlu0 %3196
        %v3199 = vsel %vm882, %v3147, 0
        %v3202 = vsel %vm1006, %v3197, 0
        %3204 = vmatprep.subr.bf16.mxu0 0
        %3205 = vmatpush1.bf16.msra.mxu0 %v3202
        %3206 = vmatprep.subr.bf16.mxu0 0
        %3207 = vmatpush1.bf16.msra.mxu0 0
        %3208 = vmatprep.subr.bf16.mxu0 0
        %3209 = vmatpush1.bf16.msra.mxu0 0
        %3210 = vmatprep.subr.bf16.mxu0 0
        %3211 = vmatpush1.bf16.msra.mxu0 0
        %3212 = vmatprep.subr.bf16.mxu0 0
        %3213 = vmatpush1.bf16.msra.mxu0 0
        %3214 = vmatprep.subr.bf16.mxu0 0
        %3215 = vmatpush1.bf16.msra.mxu0 0
        %3216 = vmatprep.subr.bf16.mxu0 0
        %3217 = vmatpush1.bf16.msra.mxu0 0
        %3218 = vmatprep.subr.bf16.mxu0 0
        %3219 = vmatpush1.bf16.msra.mxu0 0
        %3220 = vmatprep.subr.bf16.mxu0 0
        %3221 = vmatpush1.bf16.msra.mxu0 0
        %3222 = vmatprep.subr.bf16.mxu0 0
        %3223 = vmatpush1.bf16.msra.mxu0 0
        %3224 = vmatprep.subr.bf16.mxu0 0
        %3225 = vmatpush1.bf16.msra.mxu0 0
        %3226 = vmatprep.subr.bf16.mxu0 0
        %3227 = vmatpush1.bf16.msra.mxu0 0
        %3228 = vmatprep.subr.bf16.mxu0 0
        %3229 = vmatpush1.bf16.msra.mxu0 0
        %3230 = vmatprep.subr.bf16.mxu0 0
        %3231 = vmatpush1.bf16.msra.mxu0 0
        %3232 = vmatprep.subr.bf16.mxu0 0
        %3233 = vmatpush1.bf16.msra.mxu0 0
        %3234 = vmatprep.subr.bf16.mxu0 0
        %3235 = vmatpush1.bf16.msra.mxu0 0
        %3236 = vmatprep.mubr.bf16.mxu0 0
        %3237 = vmatmul.mubr.bf16.gmra.mrb[0].mxu0 %v3199
        %v3238 = vpop.f32.mrb[0].mxu0
        %v3239 = vadd.f32 0.0, %v3238
        %v3240 = vpop.f32.mrb[0].mxu0
        %v3241 = vpop.f32.mrb[0].mxu0
        %v3242 = vpop.f32.mrb[0].mxu0
        %3243 = vdwg.mxu0
        %v3244 = vpack.c.bf16 %v3239, %v3191
        %s3245 = scalar_lea.vmem [#allocation13], 12
        %v3246 = vld [vmem:[%s3245] sm:$0xf]
        %v3248 = vsel %vm882, %v3244, 0
        %v3251 = vsel %vm1006, %v3246, 0
        %3253 = vmatprep.subr.bf16.mxu0 0
        %3254 = vmatpush1.bf16.msra.mxu0 %v3251
        %3255 = vmatprep.subr.bf16.mxu0 0
        %3256 = vmatpush1.bf16.msra.mxu0 0
        %3257 = vmatprep.subr.bf16.mxu0 0
        %3258 = vmatpush1.bf16.msra.mxu0 0
        %3259 = vmatprep.subr.bf16.mxu0 0
        %3260 = vmatpush1.bf16.msra.mxu0 0
        %3261 = vmatprep.subr.bf16.mxu0 0
        %3262 = vmatpush1.bf16.msra.mxu0 0
        %3263 = vmatprep.subr.bf16.mxu0 0
        %3264 = vmatpush1.bf16.msra.mxu0 0
        %3265 = vmatprep.subr.bf16.mxu0 0
        %3266 = vmatpush1.bf16.msra.mxu0 0
        %3267 = vmatprep.subr.bf16.mxu0 0
        %3268 = vmatpush1.bf16.msra.mxu0 0
        %3269 = vmatprep.subr.bf16.mxu0 0
        %3270 = vmatpush1.bf16.msra.mxu0 0
        %3271 = vmatprep.subr.bf16.mxu0 0
        %3272 = vmatpush1.bf16.msra.mxu0 0
        %3273 = vmatprep.subr.bf16.mxu0 0
        %3274 = vmatpush1.bf16.msra.mxu0 0
        %3275 = vmatprep.subr.bf16.mxu0 0
        %3276 = vmatpush1.bf16.msra.mxu0 0
        %3277 = vmatprep.subr.bf16.mxu0 0
        %3278 = vmatpush1.bf16.msra.mxu0 0
        %3279 = vmatprep.subr.bf16.mxu0 0
        %3280 = vmatpush1.bf16.msra.mxu0 0
        %3281 = vmatprep.subr.bf16.mxu0 0
        %3282 = vmatpush1.bf16.msra.mxu0 0
        %3283 = vmatprep.subr.bf16.mxu0 0
        %3284 = vmatpush1.bf16.msra.mxu0 0
        %3285 = vmatprep.mubr.bf16.mxu0 0
        %3286 = vmatmul.mubr.bf16.gmra.mrb[0].mxu0 %v3248
        %v3287 = vpop.f32.mrb[0].mxu0
        %v3288 = vadd.f32 0.0, %v3287
        %v3289 = vpop.f32.mrb[0].mxu0
        %v3290 = vpop.f32.mrb[0].mxu0
        %v3291 = vadd.f32 0.0, %v3290
        %v3292 = vpop.f32.mrb[0].mxu0
        %3293 = vdwg.mxu0
        %v3294 = vadd.f32 %v3020, %v3288
        %v3295 = vadd.f32 %v3021, %v3291
        %v3296 = vlaneseq
        %v3297 = vshrl.u32 %v3296, 7
        %v3298 = vsub.s32 3, %v3297
        %v3299 = vrot.slane %v696, %v3298
        %v3300 = vadd.f32 %v3294, %v3299
        %v3301 = vadd.f32 %v3295, %v3299
        %v3302 = vadd.f32 %v3300, %v2016
        %v3303 = vadd.f32 %v3301, %v2017
        %v3304 = vsel %vm715, %v3302, 0.0
        %3305 = vadd.xlane.f32.xlu0 %v3304
        %v3306 = vpop.xlane.xlu0 %3305
        %v3307 = vsel %vm715, %v3303, 0.0
        %3308 = vadd.xlane.f32.xlu0 %v3307
        %v3309 = vpop.xlane.xlu0 %3308
        %v3310 = vmul.f32 %v3306, %v1985
        %v3311 = vmul.f32 %v3309, %v1985
        %v3312 = vsub.f32 %v3302, %v3310
        %v3313 = vsub.f32 %v3303, %v3311
        %v3314 = vmul.f32 %v3312, %v3312
        %v3315 = vmul.f32 %v3313, %v3313
        %v3316 = vsel %vm715, %v3314, 0.0
        %3317 = vadd.xlane.f32.xlu0 %v3316
        %v3318 = vpop.xlane.xlu0 %3317
        %v3319 = vsel %vm715, %v3315, 0.0
        %3320 = vadd.xlane.f32.xlu0 %v3319
        %v3321 = vpop.xlane.xlu0 %3320
        %v3322 = vmul.f32 %v3318, %v1985
        %v3323 = vmul.f32 %v3321, %v1985
        %v3324 = vadd.f32 %v3322, 1e-05
        %v3325 = vadd.f32 %v3323, 1e-05
        %v3326 = vrsqrt.pop %v3324
        %v3327 = vrsqrt.pop %v3325
        %v3328 = vmul.f32 %v3312, %v3326
        %v3329 = vmul.f32 %v3313, %v3327
        %v3330 = vlaneseq
        %v3331 = vshrl.u32 %v3330, 7
        %v3332 = vsub.s32 4, %v3331
        %v3333 = vrot.slane %v696, %v3332
        %v3334 = vmul.f32 %v3328, %v3333
        %v3335 = vmul.f32 %v3329, %v3333
        %v3336 = vlaneseq
        %v3337 = vshrl.u32 %v3336, 7
        %v3338 = vsub.s32 5, %v3337
        %v3339 = vrot.slane %v696, %v3338
        %v3340 = vadd.f32 %v3334, %v3339
        %v3341 = vadd.f32 %v3335, %v3339
        %v3342 = vpack.c.bf16 %v3341, %v3340
        %v3343 = vld [vmem:[#allocation14] sm:$0xf]
        %v3344 = vld [vmem:[#allocation14 + $0x4] sm:$0xf]
        %v3345 = vld [vmem:[#allocation14 + $0x8] sm:$0xf]
        %v3346 = vld [vmem:[#allocation14 + $0xc] sm:$0xf]
        %v3347 = vld [vmem:[%s10] sm:$0x1]
        %v3349 = vlaneseq
        %v3350 = vshrl.u32 %v3349, 7
        %v3351 = vsub.s32 0, %v3350
        %v3352 = vrot.slane %v3347, %v3351
        %v3358 = vunpack.c.l.b16 %v3343
        %v3359 = vunpack.c.l.b16 %v3344
        %v3360 = vunpack.c.l.b16 %v3345
        %v3361 = vunpack.c.l.b16 %v3346
        %v3362 = vpack.c.b16 %v3359, %v3358
        %v3363 = vpack.c.b16 %v3361, %v3360
        %v3367 = vsel %vm715, %v3342, 0
        %3369 = vmatprep.subr.bf16.mxu0 0
        %3370 = vmatpush1.bf16.msra.mxu0 %v3362
        %3371 = vmatprep.subr.bf16.mxu0 0
        %3372 = vmatpush1.bf16.msra.mxu0 %v3363
        %3373 = vmatprep.subr.bf16.mxu0 0
        %3374 = vmatpush1.bf16.msra.mxu0 0
        %3375 = vmatprep.subr.bf16.mxu0 0
        %3376 = vmatpush1.bf16.msra.mxu0 0
        %3377 = vmatprep.subr.bf16.mxu0 0
        %3378 = vmatpush1.bf16.msra.mxu0 0
        %3379 = vmatprep.subr.bf16.mxu0 0
        %3380 = vmatpush1.bf16.msra.mxu0 0
        %3381 = vmatprep.subr.bf16.mxu0 0
        %3382 = vmatpush1.bf16.msra.mxu0 0
        %3383 = vmatprep.subr.bf16.mxu0 0
        %3384 = vmatpush1.bf16.msra.mxu0 0
        %3385 = vmatprep.subr.bf16.mxu0 0
        %3386 = vmatpush1.bf16.msra.mxu0 0
        %3387 = vmatprep.subr.bf16.mxu0 0
        %3388 = vmatpush1.bf16.msra.mxu0 0
        %3389 = vmatprep.subr.bf16.mxu0 0
        %3390 = vmatpush1.bf16.msra.mxu0 0
        %3391 = vmatprep.subr.bf16.mxu0 0
        %3392 = vmatpush1.bf16.msra.mxu0 0
        %3393 = vmatprep.subr.bf16.mxu0 0
        %3394 = vmatpush1.bf16.msra.mxu0 0
        %3395 = vmatprep.subr.bf16.mxu0 0
        %3396 = vmatpush1.bf16.msra.mxu0 0
        %3397 = vmatprep.subr.bf16.mxu0 0
        %3398 = vmatpush1.bf16.msra.mxu0 0
        %3399 = vmatprep.subr.bf16.mxu0 0
        %3400 = vmatpush1.bf16.msra.mxu0 0
        %3401 = vmatprep.mubr.bf16.mxu0 0
        %3402 = vmatmul.mubr.bf16.gmra.mrb[0].mxu0 %v3367
        %v3403 = vpop.f32.mrb[0].mxu0
        %v3404 = vadd.f32 %v3352, %v3403
        %v3405 = vpop.f32.mrb[0].mxu0
        %v3406 = vpop.f32.mrb[0].mxu0
        %v3407 = vadd.f32 %v3352, %v3406
        %v3408 = vpop.f32.mrb[0].mxu0
        %3409 = vdwg.mxu0
        %v3410 = vmax.f32 %v3404, 0.0
        %v3411 = vmax.f32 %v3407, 0.0
        %v3412 = vpack.c.bf16 %v3411, %v3410
        %v3413 = vld [vmem:[%s11] sm:$0xf]
        %v3414 = vld [vmem:[%s11 + $0x4] sm:$0xf]
        %v3415 = vld [vmem:[%s11 + $0x8] sm:$0xf]
        %v3416 = vld [vmem:[%s11 + $0xc] sm:$0xf]
        %v3417 = vld [vmem:[%s11 + $0x10] sm:$0xf]
        %v3418 = vld [vmem:[%s11 + $0x14] sm:$0xf]
        %v3419 = vld [vmem:[%s11 + $0x18] sm:$0xf]
        %v3420 = vld [vmem:[%s11 + $0x1c] sm:$0xf]
        %v3421 = vld [vmem:[%s11 + $0x20] sm:$0xf]
        %v3422 = vld [vmem:[%s11 + $0x24] sm:$0xf]
        %v3423 = vld [vmem:[%s11 + $0x28] sm:$0xf]
        %v3424 = vld [vmem:[%s11 + $0x2c] sm:$0xf]
        %v3425 = vld [vmem:[%s11 + $0x30] sm:$0xf]
        %v3426 = vld [vmem:[%s11 + $0x34] sm:$0xf]
        %v3427 = vld [vmem:[%s11 + $0x38] sm:$0xf]
        %v3428 = vld [vmem:[%s11 + $0x3c] sm:$0xf]
        %v3429 = vlaneseq
        %v3430 = vshrl.u32 %v3429, 7
        %v3431 = vsub.s32 6, %v3430
        %v3432 = vrot.slane %v696, %v3431
        %v3449 = vunpack.c.l.b16 %v3413
        %v3450 = vunpack.c.l.b16 %v3414
        %v3451 = vunpack.c.l.b16 %v3415
        %v3452 = vunpack.c.l.b16 %v3416
        %v3453 = vunpack.c.l.b16 %v3417
        %v3454 = vunpack.c.l.b16 %v3418
        %v3455 = vunpack.c.l.b16 %v3419
        %v3456 = vunpack.c.l.b16 %v3420
        %v3457 = vunpack.c.l.b16 %v3421
        %v3458 = vunpack.c.l.b16 %v3422
        %v3459 = vunpack.c.l.b16 %v3423
        %v3460 = vunpack.c.l.b16 %v3424
        %v3461 = vunpack.c.l.b16 %v3425
        %v3462 = vunpack.c.l.b16 %v3426
        %v3463 = vunpack.c.l.b16 %v3427
        %v3464 = vunpack.c.l.b16 %v3428
        %v3465 = vpack.c.b16 %v3450, %v3449
        %v3466 = vpack.c.b16 %v3452, %v3451
        %v3467 = vpack.c.b16 %v3454, %v3453
        %v3468 = vpack.c.b16 %v3456, %v3455
        %v3469 = vpack.c.b16 %v3458, %v3457
        %v3470 = vpack.c.b16 %v3460, %v3459
        %v3471 = vpack.c.b16 %v3462, %v3461
        %v3472 = vpack.c.b16 %v3464, %v3463
        %3481 = vmatprep.subr.bf16.mxu0 0
        %3482 = vmatpush1.bf16.msra.mxu0 %v3465
        %3483 = vmatprep.subr.bf16.mxu0 0
        %3484 = vmatpush1.bf16.msra.mxu0 %v3466
        %3485 = vmatprep.subr.bf16.mxu0 0
        %3486 = vmatpush1.bf16.msra.mxu0 %v3467
        %3487 = vmatprep.subr.bf16.mxu0 0
        %3488 = vmatpush1.bf16.msra.mxu0 %v3468
        %3489 = vmatprep.subr.bf16.mxu0 0
        %3490 = vmatpush1.bf16.msra.mxu0 %v3469
        %3491 = vmatprep.subr.bf16.mxu0 0
        %3492 = vmatpush1.bf16.msra.mxu0 %v3470
        %3493 = vmatprep.subr.bf16.mxu0 0
        %3494 = vmatpush1.bf16.msra.mxu0 %v3471
        %3495 = vmatprep.subr.bf16.mxu0 0
        %3496 = vmatpush1.bf16.msra.mxu0 %v3472
        %3497 = vmatprep.subr.bf16.mxu0 0
        %3498 = vmatpush1.bf16.msra.mxu0 0
        %3499 = vmatprep.subr.bf16.mxu0 0
        %3500 = vmatpush1.bf16.msra.mxu0 0
        %3501 = vmatprep.subr.bf16.mxu0 0
        %3502 = vmatpush1.bf16.msra.mxu0 0
        %3503 = vmatprep.subr.bf16.mxu0 0
        %3504 = vmatpush1.bf16.msra.mxu0 0
        %3505 = vmatprep.subr.bf16.mxu0 0
        %3506 = vmatpush1.bf16.msra.mxu0 0
        %3507 = vmatprep.subr.bf16.mxu0 0
        %3508 = vmatpush1.bf16.msra.mxu0 0
        %3509 = vmatprep.subr.bf16.mxu0 0
        %3510 = vmatpush1.bf16.msra.mxu0 0
        %3511 = vmatprep.subr.bf16.mxu0 0
        %3512 = vmatpush1.bf16.msra.mxu0 0
        %3513 = vmatprep.mubr.bf16.mxu0 0
        %3514 = vmatmul.mubr.bf16.gmra.mrb[0].mxu0 %v3412
        %v3515 = vpop.f32.mrb[0].mxu0
        %v3516 = vadd.f32 %v3432, %v3515
        %v3517 = vpop.f32.mrb[0].mxu0
        %v3518 = vpop.f32.mrb[0].mxu0
        %v3519 = vadd.f32 %v3432, %v3518
        %v3520 = vpop.f32.mrb[0].mxu0
        %3521 = vdwg.mxu0
        %v3522 = vadd.f32 %v3516, %v3340
        %v3523 = vadd.f32 %v3519, %v3341
        %v3524 = vsel %vm715, %v3522, 0.0
        %3525 = vadd.xlane.f32.xlu0 %v3524
        %v3526 = vpop.xlane.xlu0 %3525
        %v3527 = vsel %vm715, %v3523, 0.0
        %3528 = vadd.xlane.f32.xlu0 %v3527
        %v3529 = vpop.xlane.xlu0 %3528
        %v3530 = vmul.f32 %v3526, %v1985
        %v3531 = vmul.f32 %v3529, %v1985
        %v3532 = vsub.f32 %v3522, %v3530
        %v3533 = vsub.f32 %v3523, %v3531
        %v3534 = vmul.f32 %v3532, %v3532
        %v3535 = vmul.f32 %v3533, %v3533
        %v3536 = vsel %vm715, %v3534, 0.0
        %3537 = vadd.xlane.f32.xlu0 %v3536
        %v3538 = vpop.xlane.xlu0 %3537
        %v3539 = vsel %vm715, %v3535, 0.0
        %3540 = vadd.xlane.f32.xlu0 %v3539
        %v3541 = vpop.xlane.xlu0 %3540
        %v3542 = vmul.f32 %v3538, %v1985
        %v3543 = vmul.f32 %v3541, %v1985
        %v3544 = vadd.f32 %v3542, 1e-05
        %v3545 = vadd.f32 %v3543, 1e-05
        %v3546 = vrsqrt.pop %v3544
        %v3547 = vrsqrt.pop %v3545
        %v3548 = vmul.f32 %v3532, %v3546
        %v3549 = vmul.f32 %v3533, %v3547
        %v3550 = vlaneseq
        %v3551 = vshrl.u32 %v3550, 7
        %v3552 = vsub.s32 7, %v3551
        %v3553 = vrot.slane %v696, %v3552
        %v3554 = vmul.f32 %v3548, %v3553
        %v3555 = vmul.f32 %v3549, %v3553
        %v3556 = vlaneseq
        %v3557 = vshrl.u32 %v3556, 7
        %v3558 = vsub.s32 0, %v3557
        %v3559 = vrot.slane %v697, %v3558
        %v3560 = vadd.f32 %v3554, %v3559
        %v3561 = vadd.f32 %v3555, %v3559
        %3562 = vst.msk [vmem:[%s670] sm:$0xff] %vm715, %v3560
        %3563 = vst.msk [vmem:[%s670 + $0x8] sm:$0xff] %vm715, %v3561
        %s3564 = sand.u32 %s344, 1
        %s3565 = scalar_lea.sflag [#allocation4], %s3564
        %s3566 = sand.u32 %s344, 1
        %s3567 = smul.addr %s3566, 16
        %s3568 = scalar_lea.vmem [#allocation17], %s3567
        // Predicated region
        $region109: #{decoder_block_pallas.1} parent=71 // pred_check
          %p3569 = pneg %p354
        $region110: #{decoder_block_pallas.1} parent=71 // pred_check_branch
          %3571 = sbr.rel (%p3569) target = $region112
        $region111: #{decoder_block_pallas.1} parent=71 // pred_region
          %s3572 = smul.u32 2, %s38
          %s3574 = ssub.s32 256, 256
          %3575 = vsyncadd %s3565, %s3574
          %s3576 = smul.addr %s3572, 128
          %s3577 = scalar_lea.hbm %s13, %s3576
          %s3578 = sshll.u32 %s3568, 4
          %s3579 = int_to_ptr.vmem [resolvable:$true] %s3578
          %3584 = dma.vmem_to_hbm [thread:$0]  %s3579, 256, %s3577, %s3565, 128, 128, 8
        $region112: #{decoder_block_pallas.1} parent=71 // pred_fallthru
          _
      $region72: #{decoder_block_pallas.1} parent=5 // pred_fallthru
        _
      %p3585 = scmp.le.s32.totalorder 2, %s33
      // Predicated region
      $region113: #{decoder_block_pallas.1} parent=5 // pred_check
        %p3586 = pneg %p3585
      $region114: #{decoder_block_pallas.1} parent=5 // pred_check_branch
        %3588 = sbr.rel (%p3586) target = $region116
      $region115: #{decoder_block_pallas.1} parent=5 // pred_region
        %s3589 = ssub.s32 %s33, 2
        // Predicated region
        $region117: #{decoder_block_pallas.1} parent=115 // pred_check
          %p3590 = pneg %p360
        $region118: #{decoder_block_pallas.1} parent=115 // pred_check_branch
          %3592 = sbr.rel (%p3590) target = $region120
        $region119: #{decoder_block_pallas.1} parent=115 // pred_region
          %s3593 = sand.u32 %s345, 1
          %s3594 = scalar_lea.sflag [#allocation4], %s3593
          %s3595 = sand.u32 %s345, 1
          %s3596 = smul.addr %s3595, 16
          %s3597 = scalar_lea.vmem [#allocation17], %s3596
          %3598 = dma.done %s3594, 256
        $region120: #{decoder_block_pallas.1} parent=115 // pred_fallthru
          _
      $region116: #{decoder_block_pallas.1} parent=5 // pred_fallthru
        _
    $region6: #{decoder_block_pallas.1} parent=1 // loop_footer
      %s37 = sadd.s32 1, %s33
    $region7: #{decoder_block_pallas.1} parent=1 // loop_footer_branch
      %32 = sbr.rel target = $region3
    $region8: #{decoder_block_pallas.1} parent=1 // loop_exit
      _
    %3599 = vsyncpa [#allocation3], 1
    %s3600 = scalar_lea.sflag [#allocation3], 1
    %3601 = vsyncpa %s3600, 1
    %3602 = vsyncpa [#allocation6], 1
    %s3603 = scalar_lea.sflag [#allocation6], 1
    %3604 = vsyncpa %s3603, 1
    %3605 = vsyncpa [#allocation9], 1
    %s3606 = scalar_lea.sflag [#allocation9], 1
    %3607 = vsyncpa %s3606, 1
    %3608 = vsyncpa [#allocation12], 1
    %3609 = vsyncpa [#allocation15], 1
    %3610 = vsyncpa [#allocation4], 1
    %s3611 = scalar_lea.sflag [#allocation4], 1
    %3612 = vsyncpa %s3611, 1

</llo_original>
